<compile_context>
chip_gen: v6e
topology: v6e:2x2x1
jax: 0.10.0
libtpu: 0.0.40
codegen_flags: <defaults>
</compile_context>

<pallas_src>
import functools
import math

import jax
import jax.numpy as jnp
from jax import lax
from jax.experimental import pallas as pl
from jax.experimental.pallas import tpu as pltpu

LN_EPS = 1e-5     # nn.LayerNorm default
NEG_INF = -1e9    # additive key-padding bias for masked keys


def _softmax(s):
    # Plain softmax (used by the pure-JAX reference).
    m = jnp.max(s, axis=-1, keepdims=True)
    p = jnp.exp(s - m)
    return p / jnp.sum(p, axis=-1, keepdims=True)


def _layernorm(h, gamma, beta):
    mean = jnp.mean(h, axis=-1, keepdims=True)
    var = jnp.mean((h - mean) ** 2, axis=-1, keepdims=True)   # biased var (PyTorch LN)
    return (h - mean) * lax.rsqrt(var + LN_EPS) * gamma + beta


def mha_layer_kernel(x_ref, bias_ref,
                     wqkv_ref, bqkv_ref, wo_ref, bo_ref,
                     g_ref, beta_ref,
                     o_ref, attn_ref, *, num_heads, compute_dtype):
    x = x_ref[0]                                    # [S, E] f32
    S, E = x.shape
    Dh = E // num_heads

    # Fused Q/K/V projection: one MXU pass over x, f32 accumulation.
    # (q-scale 1/sqrt(Dh) is pre-folded into the Q columns of Wqkv / bqkv.)
    qkv = jnp.dot(x.astype(compute_dtype), wqkv_ref[...],
                  preferred_element_type=jnp.float32) + bqkv_ref[...]
    # Cast once to the MXU compute dtype; per-head slices come from these.
    q = qkv[:, 0 * E:1 * E].astype(compute_dtype)
    k = qkv[:, 1 * E:2 * E].astype(compute_dtype)
    v = qkv[:, 2 * E:3 * E].astype(compute_dtype)

    # Hoisted additive key-padding bias broadcast [1, S] -> [S, S] (f32).
    bias_b = jnp.broadcast_to(bias_ref[0], (S, S))

    # q @ k^T without an explicit transpose: contract the last dim of both.
    qk_dims = (((1,), (1,)), ((), ()))

    # Per-head attention (static unroll; num_heads is small). Each head's output is
    # written into the bf16 VMEM scratch at its column offset so the out-projection
    # can be a single full-depth matmul afterwards.
    for h in range(num_heads):
        lo = h * Dh
        qh = q[:, lo:lo + Dh]
        kh = k[:, lo:lo + Dh]
        vh = v[:, lo:lo + Dh]
        s = lax.dot_general(qh, kh, qk_dims,
                            preferred_element_type=jnp.float32) + bias_b   # [S, S]
        m = jnp.max(s, axis=-1, keepdims=True)
        p = jnp.exp(s - m)
        inv = pl.reciprocal(jnp.sum(p, axis=-1, keepdims=True), approx=True)  # EUP
        p = p * inv
        oh = jnp.dot(p.astype(compute_dtype), vh,
                     preferred_element_type=jnp.float32)                   # [S, Dh]
        attn_ref[:, lo:lo + Dh] = oh.astype(compute_dtype)

    # Single out-projection: [S, E] @ [E, E], contraction K = E (full MXU depth).
    out = jnp.dot(attn_ref[...], wo_ref[...],
                  preferred_element_type=jnp.float32) + bo_ref[...]

    out = out + x                                    # residual connection (f32)
    # TODO(synk): dropout (attention-prob dropout and post-residual nn.Dropout) is
    # identity here (inference semantics); training would use pltpu.prng_seed /
    # pltpu.prng_random_bits.
    y = _layernorm(out, g_ref[...], beta_ref[...])
    o_ref[0] = y.astype(o_ref.dtype)


def mha_layer_forward(x, params, attention_mask=None, *, num_heads,
                      compute_dtype=jnp.bfloat16):
    """x: [B, S, E] f32; attention_mask: optional [B, S] bool, True = padded key."""
    B, S, E = x.shape
    assert E % num_heads == 0

    if attention_mask is None:
        bias = jnp.zeros((B, 1, S), jnp.float32)
    else:
        bias = jnp.where(attention_mask, NEG_INF, 0.0).astype(jnp.float32)
        bias = bias.reshape(B, 1, S)

    def rep(shape):
        # Grid-invariant (weight/param) blocks: same full block every step,
        # so Pallas keeps them resident in VMEM (no per-step re-DMA).
        return pl.BlockSpec(shape, lambda b: (0,) * len(shape))

    flops = B * (2 * S * E * 3 * E          # fused QKV projection
                 + 4 * S * S * E            # QK^T and PV across heads
                 + 2 * S * E * E)           # single out projection
    transcendentals = B * (num_heads * S * (S + 1) + S)   # exp + recip + LN rsqrt
    bytes_accessed = int(
        x.size * 4 + bias.size * 4 + B * S * E * 4
        + sum(int(v.size) * v.dtype.itemsize for v in params.values()))

    grid_spec = pltpu.PrefetchScalarGridSpec(
        num_scalar_prefetch=0,
        grid=(B,),
        in_specs=[
            pl.BlockSpec((1, S, E), lambda b: (b, 0, 0)),   # x
            pl.BlockSpec((1, 1, S), lambda b: (b, 0, 0)),   # key-padding bias
            rep((E, 3 * E)), rep((1, 3 * E)),               # Wqkv, bqkv
            rep((E, E)), rep((1, E)),                       # Wo, bo
            rep((1, E)), rep((1, E)),                       # LN gamma, beta
        ],
        out_specs=pl.BlockSpec((1, S, E), lambda b: (b, 0, 0)),
        scratch_shapes=[pltpu.VMEM((S, E), compute_dtype)],  # per-head outputs
    )

    kernel = functools.partial(mha_layer_kernel, num_heads=num_heads,
                               compute_dtype=compute_dtype)

    return pl.pallas_call(
        kernel,
        out_shape=jax.ShapeDtypeStruct((B, S, E), jnp.float32),
        grid_spec=grid_spec,
        compiler_params=pltpu.CompilerParams(
            dimension_semantics=("parallel",),
            vmem_limit_bytes=64 * 1024 * 1024),
        cost_estimate=pl.CostEstimate(flops=flops,
                                      transcendentals=transcendentals,
                                      bytes_accessed=bytes_accessed),
    )(x, bias,
      params["wqkv"], params["bqkv"], params["wo"], params["bo"],
      params["gamma"], params["beta"])


def init_params(key, hidden_size, num_heads, compute_dtype=jnp.bfloat16):
    """Deterministic init (uniform +-1/sqrt(E)); weights stored [in, out] for x @ W,
    with Q/K/V packed into one [E, 3E] matrix and the 1/sqrt(Dh) q-scaling folded
    into the Q columns (math-identical reparameterization). Matmul weights in bf16."""
    k1, k2, k3, k4 = jax.random.split(key, 4)
    bound = 1.0 / math.sqrt(hidden_size)
    wqkv = jax.random.uniform(k1, (hidden_size, 3 * hidden_size), jnp.float32,
                              -bound, bound)
    bqkv = jax.random.uniform(k2, (1, 3 * hidden_size), jnp.float32, -bound, bound)
    wo = jax.random.uniform(k3, (hidden_size, hidden_size), jnp.float32, -bound, bound)
    bo = jax.random.uniform(k4, (1, hidden_size), jnp.float32, -bound, bound)
    scale = 1.0 / math.sqrt(hidden_size // num_heads)
    wqkv = wqkv.at[:, :hidden_size].multiply(scale)   # fold q-scale into Wq
    bqkv = bqkv.at[:, :hidden_size].multiply(scale)   # ... and into bq
    return dict(wqkv=wqkv.astype(compute_dtype), bqkv=bqkv,
                wo=wo.astype(compute_dtype), bo=bo,
                gamma=jnp.ones((1, hidden_size), jnp.float32),
                beta=jnp.zeros((1, hidden_size), jnp.float32))


def mha_layer_reference(x, params, attention_mask=None, *, num_heads,
                        compute_dtype=jnp.bfloat16):
    """Pure-JAX reference matching the PyTorch forward (eval mode), same precision.
    Expects params from init_params (q-scale already folded into Wq/bq)."""
    B, S, E = x.shape
    Dh = E // num_heads
    if attention_mask is None:
        bias = jnp.zeros((B, 1, 1, S), jnp.float32)
    else:
        bias = jnp.where(attention_mask, NEG_INF, 0.0).astype(jnp.float32)[:, None, None, :]

    qkv = jnp.einsum("bse,ef->bsf", x.astype(compute_dtype), params["wqkv"],
                     preferred_element_type=jnp.float32) + params["bqkv"]
    q, k, v = jnp.split(qkv, 3, axis=-1)
    q = q.reshape(B, S, num_heads, Dh).astype(compute_dtype)
    k = k.reshape(B, S, num_heads, Dh).astype(compute_dtype)
    v = v.reshape(B, S, num_heads, Dh).astype(compute_dtype)
    s = jnp.einsum("bqhd,bkhd->bhqk", q, k, preferred_element_type=jnp.float32) + bias
    p = _softmax(s)
    attn = jnp.einsum("bhqk,bkhd->bqhd", p.astype(compute_dtype), v,
                      preferred_element_type=jnp.float32).reshape(B, S, E)
    out = jnp.einsum("bse,ef->bsf", attn.astype(compute_dtype), params["wo"],
                     preferred_element_type=jnp.float32) + params["bo"]
    out = out + x
    return _layernorm(out, params["gamma"], params["beta"])


if __name__ == "__main__":
    # Small demo shapes; seq and hidden are multiples of 128 so the score tiles,
    # activations and the output are lane-dense / MXU-friendly.
    B, S, HIDDEN, NUM_HEADS = 2, 128, 128, 4

    key = jax.random.PRNGKey(0)
    kx, kp = jax.random.split(key)
    x = jax.random.normal(kx, (B, S, HIDDEN), jnp.float32)
    params = init_params(kp, HIDDEN, NUM_HEADS)

    # key_padding_mask semantics: True = padded position (ignored as a key).
    attention_mask = jnp.zeros((B, S), jnp.bool_).at[:, -16:].set(True)

    out = mha_layer_forward(x, params, attention_mask, num_heads=NUM_HEADS)
    out = jax.block_until_ready(out)

    ref = mha_layer_reference(x, params, attention_mask, num_heads=NUM_HEADS)
    assert out.shape == (B, S, HIDDEN)
    max_err = float(jnp.max(jnp.abs(out - ref)))
    assert jnp.allclose(out, ref, atol=2e-2, rtol=2e-2), max_err

    print("KERNEL_OK")
</pallas_src>

<mosaic_0001>
module attributes {stable_mosaic.version = 11 : i64} {
  func.func @mha_layer_kernel(%arg0: i32, %arg1: memref<1x128x128xf32, #tpu.memory_space<vmem>>, %arg2: memref<1x1x128xf32, #tpu.memory_space<vmem>>, %arg3: memref<128x384xbf16, #tpu.memory_space<vmem>>, %arg4: memref<1x384xf32, #tpu.memory_space<vmem>>, %arg5: memref<128x128xbf16, #tpu.memory_space<vmem>>, %arg6: memref<1x128xf32, #tpu.memory_space<vmem>>, %arg7: memref<1x128xf32, #tpu.memory_space<vmem>>, %arg8: memref<1x128xf32, #tpu.memory_space<vmem>>, %arg9: memref<1x128x128xf32, #tpu.memory_space<vmem>>, %arg10: memref<128x128xbf16, #tpu.memory_space<vmem>>) attributes {dimension_semantics = [#tpu.dimension_semantics<parallel>], iteration_bounds = array<i64: 2>, scalar_prefetch = 0 : i64, scratch_operands = 1 : i64, tpu.core_type = #tpu.core_type<tc>, window_params = [{transform_indices = @transform_0, window_bounds = array<i64: 1, 128, 128>}, {transform_indices = @transform_1, window_bounds = array<i64: 1, 1, 128>}, {pipeline_mode = #tpu.pipeline_mode<synchronous>, transform_indices = @transform_2, window_bounds = array<i64: 128, 384>}, {pipeline_mode = #tpu.pipeline_mode<synchronous>, transform_indices = @transform_3, window_bounds = array<i64: 1, 384>}, {pipeline_mode = #tpu.pipeline_mode<synchronous>, transform_indices = @transform_4, window_bounds = array<i64: 128, 128>}, {pipeline_mode = #tpu.pipeline_mode<synchronous>, transform_indices = @transform_5, window_bounds = array<i64: 1, 128>}, {pipeline_mode = #tpu.pipeline_mode<synchronous>, transform_indices = @transform_6, window_bounds = array<i64: 1, 128>}, {pipeline_mode = #tpu.pipeline_mode<synchronous>, transform_indices = @transform_7, window_bounds = array<i64: 1, 128>}, {transform_indices = @transform_8, window_bounds = array<i64: 1, 128, 128>}]} {
    %c0 = arith.constant 0 : index
    %c0_0 = arith.constant 0 : index
    %c0_1 = arith.constant 0 : index
    %0 = vector.load %arg1[%c0, %c0_0, %c0_1] : memref<1x128x128xf32, #tpu.memory_space<vmem>>, vector<1x128x128xf32>
    %1 = vector.shape_cast %0 : vector<1x128x128xf32> to vector<128x128xf32>
    %2 = arith.truncf %1 : vector<128x128xf32> to vector<128x128xbf16>
    %c0_2 = arith.constant 0 : index
    %c0_3 = arith.constant 0 : index
    %3 = vector.load %arg3[%c0_2, %c0_3] : memref<128x384xbf16, #tpu.memory_space<vmem>>, vector<128x384xbf16>
    %cst = arith.constant dense<0.000000e+00> : vector<128x384xf32>
    %4 = tpu.matmul %2, %3, %cst {dimension_numbers = #tpu.dot_dimension_numbers<[1], [0], [0], [1], [0, 0, 1, 1], [], []>} : vector<128x128xbf16>, vector<128x384xbf16>, vector<128x384xf32> -> vector<128x384xf32>
    %c0_4 = arith.constant 0 : index
    %c0_5 = arith.constant 0 : index
    %5 = vector.load %arg4[%c0_4, %c0_5] : memref<1x384xf32, #tpu.memory_space<vmem>>, vector<1x384xf32>
    %6 = vector.broadcast %5 : vector<1x384xf32> to vector<128x384xf32>
    %7 = arith.addf %4, %6 : vector<128x384xf32>
    %8 = vector.extract_strided_slice %7 {offsets = [0, 0], sizes = [128, 128], strides = [1, 1]} : vector<128x384xf32> to vector<128x128xf32>
    %9 = arith.truncf %8 : vector<128x128xf32> to vector<128x128xbf16>
    %10 = vector.extract_strided_slice %7 {offsets = [0, 128], sizes = [128, 128], strides = [1, 1]} : vector<128x384xf32> to vector<128x128xf32>
    %11 = arith.truncf %10 : vector<128x128xf32> to vector<128x128xbf16>
    %12 = vector.extract_strided_slice %7 {offsets = [0, 256], sizes = [128, 128], strides = [1, 1]} : vector<128x384xf32> to vector<128x128xf32>
    %13 = arith.truncf %12 : vector<128x128xf32> to vector<128x128xbf16>
    %c0_6 = arith.constant 0 : index
    %c0_7 = arith.constant 0 : index
    %c0_8 = arith.constant 0 : index
    %14 = vector.load %arg2[%c0_6, %c0_7, %c0_8] : memref<1x1x128xf32, #tpu.memory_space<vmem>>, vector<1x1x128xf32>
    %15 = vector.shape_cast %14 : vector<1x1x128xf32> to vector<1x128xf32>
    %16 = vector.shape_cast %15 : vector<1x128xf32> to vector<1x128xf32>
    %17 = vector.broadcast %16 : vector<1x128xf32> to vector<128x128xf32>
    %18 = vector.extract_strided_slice %9 {offsets = [0, 0], sizes = [128, 32], strides = [1, 1]} : vector<128x128xbf16> to vector<128x32xbf16>
    %19 = vector.extract_strided_slice %11 {offsets = [0, 0], sizes = [128, 32], strides = [1, 1]} : vector<128x128xbf16> to vector<128x32xbf16>
    %20 = vector.extract_strided_slice %13 {offsets = [0, 0], sizes = [128, 32], strides = [1, 1]} : vector<128x128xbf16> to vector<128x32xbf16>
    %cst_9 = arith.constant dense<0.000000e+00> : vector<128x128xf32>
    %21 = tpu.matmul %18, %19, %cst_9 {dimension_numbers = #tpu.dot_dimension_numbers<[1], [1], [0], [0], [0, 0, 1, 0], [], []>} : vector<128x32xbf16>, vector<128x32xbf16>, vector<128x128xf32> -> vector<128x128xf32>
    %22 = arith.addf %21, %17 : vector<128x128xf32>
    %cst_10 = arith.constant dense<0xFF800000> : vector<128xf32>
    %23 = vector.multi_reduction <maximumf>, %22, %cst_10 [1] : vector<128x128xf32> to vector<128xf32>
    %24 = vector.shape_cast %23 : vector<128xf32> to vector<128x1xf32>
    %25 = vector.broadcast %24 : vector<128x1xf32> to vector<128x128xf32>
    %26 = arith.subf %22, %25 : vector<128x128xf32>
    %27 = math.exp %26 : vector<128x128xf32>
    %cst_11 = arith.constant dense<0.000000e+00> : vector<128xf32>
    %28 = vector.multi_reduction <add>, %27, %cst_11 [1] : vector<128x128xf32> to vector<128xf32>
    %29 = vector.shape_cast %28 : vector<128xf32> to vector<128x1xf32>
    %30 = tpu.reciprocal %29 {approx = true} : vector<128x1xf32> -> vector<128x1xf32>
    %31 = vector.broadcast %30 : vector<128x1xf32> to vector<128x128xf32>
    %32 = arith.mulf %27, %31 : vector<128x128xf32>
    %33 = arith.truncf %32 : vector<128x128xf32> to vector<128x128xbf16>
    %cst_12 = arith.constant dense<0.000000e+00> : vector<128x32xf32>
    %34 = tpu.matmul %33, %20, %cst_12 {dimension_numbers = #tpu.dot_dimension_numbers<[1], [0], [0], [1], [0, 0, 1, 1], [], []>} : vector<128x128xbf16>, vector<128x32xbf16>, vector<128x32xf32> -> vector<128x32xf32>
    %35 = arith.truncf %34 : vector<128x32xf32> to vector<128x32xbf16>
    %c0_13 = arith.constant 0 : index
    %c0_14 = arith.constant 0 : index
    %36 = vector.load %arg10[%c0_13, %c0_14] : memref<128x128xbf16, #tpu.memory_space<vmem>>, vector<128x32xbf16>
    tpu.vector_store %arg10[%c0_13, %c0_14], %35 {strides = array<i32>} : memref<128x128xbf16, #tpu.memory_space<vmem>>, vector<128x32xbf16>,
    %37 = vector.extract_strided_slice %9 {offsets = [0, 32], sizes = [128, 32], strides = [1, 1]} : vector<128x128xbf16> to vector<128x32xbf16>
    %38 = vector.extract_strided_slice %11 {offsets = [0, 32], sizes = [128, 32], strides = [1, 1]} : vector<128x128xbf16> to vector<128x32xbf16>
    %39 = vector.extract_strided_slice %13 {offsets = [0, 32], sizes = [128, 32], strides = [1, 1]} : vector<128x128xbf16> to vector<128x32xbf16>
    %cst_15 = arith.constant dense<0.000000e+00> : vector<128x128xf32>
    %40 = tpu.matmul %37, %38, %cst_15 {dimension_numbers = #tpu.dot_dimension_numbers<[1], [1], [0], [0], [0, 0, 1, 0], [], []>} : vector<128x32xbf16>, vector<128x32xbf16>, vector<128x128xf32> -> vector<128x128xf32>
    %41 = arith.addf %40, %17 : vector<128x128xf32>
    %cst_16 = arith.constant dense<0xFF800000> : vector<128xf32>
    %42 = vector.multi_reduction <maximumf>, %41, %cst_16 [1] : vector<128x128xf32> to vector<128xf32>
    %43 = vector.shape_cast %42 : vector<128xf32> to vector<128x1xf32>
    %44 = vector.broadcast %43 : vector<128x1xf32> to vector<128x128xf32>
    %45 = arith.subf %41, %44 : vector<128x128xf32>
    %46 = math.exp %45 : vector<128x128xf32>
    %cst_17 = arith.constant dense<0.000000e+00> : vector<128xf32>
    %47 = vector.multi_reduction <add>, %46, %cst_17 [1] : vector<128x128xf32> to vector<128xf32>
    %48 = vector.shape_cast %47 : vector<128xf32> to vector<128x1xf32>
    %49 = tpu.reciprocal %48 {approx = true} : vector<128x1xf32> -> vector<128x1xf32>
    %50 = vector.broadcast %49 : vector<128x1xf32> to vector<128x128xf32>
    %51 = arith.mulf %46, %50 : vector<128x128xf32>
    %52 = arith.truncf %51 : vector<128x128xf32> to vector<128x128xbf16>
    %cst_18 = arith.constant dense<0.000000e+00> : vector<128x32xf32>
    %53 = tpu.matmul %52, %39, %cst_18 {dimension_numbers = #tpu.dot_dimension_numbers<[1], [0], [0], [1], [0, 0, 1, 1], [], []>} : vector<128x128xbf16>, vector<128x32xbf16>, vector<128x32xf32> -> vector<128x32xf32>
    %54 = arith.truncf %53 : vector<128x32xf32> to vector<128x32xbf16>
    %c0_19 = arith.constant 0 : index
    %c32 = arith.constant 32 : index
    %55 = vector.load %arg10[%c0_19, %c32] : memref<128x128xbf16, #tpu.memory_space<vmem>>, vector<128x32xbf16>
    tpu.vector_store %arg10[%c0_19, %c32], %54 {strides = array<i32>} : memref<128x128xbf16, #tpu.memory_space<vmem>>, vector<128x32xbf16>,
    %56 = vector.extract_strided_slice %9 {offsets = [0, 64], sizes = [128, 32], strides = [1, 1]} : vector<128x128xbf16> to vector<128x32xbf16>
    %57 = vector.extract_strided_slice %11 {offsets = [0, 64], sizes = [128, 32], strides = [1, 1]} : vector<128x128xbf16> to vector<128x32xbf16>
    %58 = vector.extract_strided_slice %13 {offsets = [0, 64], sizes = [128, 32], strides = [1, 1]} : vector<128x128xbf16> to vector<128x32xbf16>
    %cst_20 = arith.constant dense<0.000000e+00> : vector<128x128xf32>
    %59 = tpu.matmul %56, %57, %cst_20 {dimension_numbers = #tpu.dot_dimension_numbers<[1], [1], [0], [0], [0, 0, 1, 0], [], []>} : vector<128x32xbf16>, vector<128x32xbf16>, vector<128x128xf32> -> vector<128x128xf32>
    %60 = arith.addf %59, %17 : vector<128x128xf32>
    %cst_21 = arith.constant dense<0xFF800000> : vector<128xf32>
    %61 = vector.multi_reduction <maximumf>, %60, %cst_21 [1] : vector<128x128xf32> to vector<128xf32>
    %62 = vector.shape_cast %61 : vector<128xf32> to vector<128x1xf32>
    %63 = vector.broadcast %62 : vector<128x1xf32> to vector<128x128xf32>
    %64 = arith.subf %60, %63 : vector<128x128xf32>
    %65 = math.exp %64 : vector<128x128xf32>
    %cst_22 = arith.constant dense<0.000000e+00> : vector<128xf32>
    %66 = vector.multi_reduction <add>, %65, %cst_22 [1] : vector<128x128xf32> to vector<128xf32>
    %67 = vector.shape_cast %66 : vector<128xf32> to vector<128x1xf32>
    %68 = tpu.reciprocal %67 {approx = true} : vector<128x1xf32> -> vector<128x1xf32>
    %69 = vector.broadcast %68 : vector<128x1xf32> to vector<128x128xf32>
    %70 = arith.mulf %65, %69 : vector<128x128xf32>
    %71 = arith.truncf %70 : vector<128x128xf32> to vector<128x128xbf16>
    %cst_23 = arith.constant dense<0.000000e+00> : vector<128x32xf32>
    %72 = tpu.matmul %71, %58, %cst_23 {dimension_numbers = #tpu.dot_dimension_numbers<[1], [0], [0], [1], [0, 0, 1, 1], [], []>} : vector<128x128xbf16>, vector<128x32xbf16>, vector<128x32xf32> -> vector<128x32xf32>
    %73 = arith.truncf %72 : vector<128x32xf32> to vector<128x32xbf16>
    %c0_24 = arith.constant 0 : index
    %c64 = arith.constant 64 : index
    %74 = vector.load %arg10[%c0_24, %c64] : memref<128x128xbf16, #tpu.memory_space<vmem>>, vector<128x32xbf16>
    tpu.vector_store %arg10[%c0_24, %c64], %73 {strides = array<i32>} : memref<128x128xbf16, #tpu.memory_space<vmem>>, vector<128x32xbf16>,
    %75 = vector.extract_strided_slice %9 {offsets = [0, 96], sizes = [128, 32], strides = [1, 1]} : vector<128x128xbf16> to vector<128x32xbf16>
    %76 = vector.extract_strided_slice %11 {offsets = [0, 96], sizes = [128, 32], strides = [1, 1]} : vector<128x128xbf16> to vector<128x32xbf16>
    %77 = vector.extract_strided_slice %13 {offsets = [0, 96], sizes = [128, 32], strides = [1, 1]} : vector<128x128xbf16> to vector<128x32xbf16>
    %cst_25 = arith.constant dense<0.000000e+00> : vector<128x128xf32>
    %78 = tpu.matmul %75, %76, %cst_25 {dimension_numbers = #tpu.dot_dimension_numbers<[1], [1], [0], [0], [0, 0, 1, 0], [], []>} : vector<128x32xbf16>, vector<128x32xbf16>, vector<128x128xf32> -> vector<128x128xf32>
    %79 = arith.addf %78, %17 : vector<128x128xf32>
    %cst_26 = arith.constant dense<0xFF800000> : vector<128xf32>
    %80 = vector.multi_reduction <maximumf>, %79, %cst_26 [1] : vector<128x128xf32> to vector<128xf32>
    %81 = vector.shape_cast %80 : vector<128xf32> to vector<128x1xf32>
    %82 = vector.broadcast %81 : vector<128x1xf32> to vector<128x128xf32>
    %83 = arith.subf %79, %82 : vector<128x128xf32>
    %84 = math.exp %83 : vector<128x128xf32>
    %cst_27 = arith.constant dense<0.000000e+00> : vector<128xf32>
    %85 = vector.multi_reduction <add>, %84, %cst_27 [1] : vector<128x128xf32> to vector<128xf32>
    %86 = vector.shape_cast %85 : vector<128xf32> to vector<128x1xf32>
    %87 = tpu.reciprocal %86 {approx = true} : vector<128x1xf32> -> vector<128x1xf32>
    %88 = vector.broadcast %87 : vector<128x1xf32> to vector<128x128xf32>
    %89 = arith.mulf %84, %88 : vector<128x128xf32>
    %90 = arith.truncf %89 : vector<128x128xf32> to vector<128x128xbf16>
    %cst_28 = arith.constant dense<0.000000e+00> : vector<128x32xf32>
    %91 = tpu.matmul %90, %77, %cst_28 {dimension_numbers = #tpu.dot_dimension_numbers<[1], [0], [0], [1], [0, 0, 1, 1], [], []>} : vector<128x128xbf16>, vector<128x32xbf16>, vector<128x32xf32> -> vector<128x32xf32>
    %92 = arith.truncf %91 : vector<128x32xf32> to vector<128x32xbf16>
    %c0_29 = arith.constant 0 : index
    %c96 = arith.constant 96 : index
    %93 = vector.load %arg10[%c0_29, %c96] : memref<128x128xbf16, #tpu.memory_space<vmem>>, vector<128x32xbf16>
    tpu.vector_store %arg10[%c0_29, %c96], %92 {strides = array<i32>} : memref<128x128xbf16, #tpu.memory_space<vmem>>, vector<128x32xbf16>,
    %c0_30 = arith.constant 0 : index
    %c0_31 = arith.constant 0 : index
    %94 = vector.load %arg10[%c0_30, %c0_31] : memref<128x128xbf16, #tpu.memory_space<vmem>>, vector<128x128xbf16>
    %c0_32 = arith.constant 0 : index
    %c0_33 = arith.constant 0 : index
    %95 = vector.load %arg5[%c0_32, %c0_33] : memref<128x128xbf16, #tpu.memory_space<vmem>>, vector<128x128xbf16>
    %cst_34 = arith.constant dense<0.000000e+00> : vector<128x128xf32>
    %96 = tpu.matmul %94, %95, %cst_34 {dimension_numbers = #tpu.dot_dimension_numbers<[1], [0], [0], [1], [0, 0, 1, 1], [], []>} : vector<128x128xbf16>, vector<128x128xbf16>, vector<128x128xf32> -> vector<128x128xf32>
    %c0_35 = arith.constant 0 : index
    %c0_36 = arith.constant 0 : index
    %97 = vector.load %arg6[%c0_35, %c0_36] : memref<1x128xf32, #tpu.memory_space<vmem>>, vector<1x128xf32>
    %98 = vector.broadcast %97 : vector<1x128xf32> to vector<128x128xf32>
    %99 = arith.addf %96, %98 : vector<128x128xf32>
    %100 = arith.addf %99, %1 : vector<128x128xf32>
    %c0_37 = arith.constant 0 : index
    %c0_38 = arith.constant 0 : index
    %101 = vector.load %arg7[%c0_37, %c0_38] : memref<1x128xf32, #tpu.memory_space<vmem>>, vector<1x128xf32>
    %c0_39 = arith.constant 0 : index
    %c0_40 = arith.constant 0 : index
    %102 = vector.load %arg8[%c0_39, %c0_40] : memref<1x128xf32, #tpu.memory_space<vmem>>, vector<1x128xf32>
    %cst_41 = arith.constant dense<0.000000e+00> : vector<128xf32>
    %103 = vector.multi_reduction <add>, %100, %cst_41 [1] : vector<128x128xf32> to vector<128xf32>
    %104 = vector.shape_cast %103 : vector<128xf32> to vector<128x1xf32>
    %cst_42 = arith.constant 1.280000e+02 : f32
    %105 = vector.broadcast %cst_42 : f32 to vector<128x1xf32>
    %106 = arith.divf %104, %105 : vector<128x1xf32>
    %107 = vector.broadcast %106 : vector<128x1xf32> to vector<128x128xf32>
    %108 = arith.subf %100, %107 : vector<128x128xf32>
    %109 = arith.mulf %108, %108 : vector<128x128xf32>
    %cst_43 = arith.constant dense<0.000000e+00> : vector<128xf32>
    %110 = vector.multi_reduction <add>, %109, %cst_43 [1] : vector<128x128xf32> to vector<128xf32>
    %111 = vector.shape_cast %110 : vector<128xf32> to vector<128x1xf32>
    %cst_44 = arith.constant 1.280000e+02 : f32
    %112 = vector.broadcast %cst_44 : f32 to vector<128x1xf32>
    %113 = arith.divf %111, %112 : vector<128x1xf32>
    %114 = vector.broadcast %106 : vector<128x1xf32> to vector<128x128xf32>
    %115 = arith.subf %100, %114 : vector<128x128xf32>
    %cst_45 = arith.constant 9.99999974E-6 : f32
    %116 = vector.broadcast %cst_45 : f32 to vector<128x1xf32>
    %117 = arith.addf %113, %116 : vector<128x1xf32>
    %118 = math.rsqrt %117 : vector<128x1xf32>
    %119 = vector.broadcast %118 : vector<128x1xf32> to vector<128x128xf32>
    %120 = arith.mulf %115, %119 : vector<128x128xf32>
    %121 = vector.broadcast %101 : vector<1x128xf32> to vector<128x128xf32>
    %122 = arith.mulf %120, %121 : vector<128x128xf32>
    %123 = vector.broadcast %102 : vector<1x128xf32> to vector<128x128xf32>
    %124 = arith.addf %122, %123 : vector<128x128xf32>
    %c0_46 = arith.constant 0 : index
    %c0_47 = arith.constant 0 : index
    %c0_48 = arith.constant 0 : index
    %125 = vector.load %arg9[%c0_46, %c0_47, %c0_48] : memref<1x128x128xf32, #tpu.memory_space<vmem>>, vector<1x128x128xf32>
    %126 = vector.shape_cast %125 : vector<1x128x128xf32> to vector<128x128xf32>
    %127 = vector.shape_cast %124 : vector<128x128xf32> to vector<1x128x128xf32>
    tpu.vector_store %arg9[%c0_46, %c0_47, %c0_48], %127 {strides = array<i32>} : memref<1x128x128xf32, #tpu.memory_space<vmem>>, vector<1x128x128xf32>,
    return
  }
  func.func @transform_0(%arg0: i32) -> (i32, i32, i32) {
    %c0_i32 = arith.constant 0 : i32
    %c0_i32_0 = arith.constant 0 : i32
    %c0_i32_1 = arith.constant 0 : i32
    return %arg0, %c0_i32, %c0_i32_0 : i32, i32, i32
  }
  func.func @transform_1(%arg0: i32) -> (i32, i32, i32) {
    %c0_i32 = arith.constant 0 : i32
    %c0_i32_0 = arith.constant 0 : i32
    %c0_i32_1 = arith.constant 0 : i32
    return %arg0, %c0_i32, %c0_i32_0 : i32, i32, i32
  }
  func.func @transform_2(%arg0: i32) -> (i32, i32) {
    %c0_i32 = arith.constant 0 : i32
    %c0_i32_0 = arith.constant 0 : i32
    %c0_i32_1 = arith.constant 0 : i32
    return %c0_i32, %c0_i32_0 : i32, i32
  }
  func.func @transform_3(%arg0: i32) -> (i32, i32) {
    %c0_i32 = arith.constant 0 : i32
    %c0_i32_0 = arith.constant 0 : i32
    %c0_i32_1 = arith.constant 0 : i32
    return %c0_i32, %c0_i32_0 : i32, i32
  }
  func.func @transform_4(%arg0: i32) -> (i32, i32) {
    %c0_i32 = arith.constant 0 : i32
    %c0_i32_0 = arith.constant 0 : i32
    %c0_i32_1 = arith.constant 0 : i32
    return %c0_i32, %c0_i32_0 : i32, i32
  }
  func.func @transform_5(%arg0: i32) -> (i32, i32) {
    %c0_i32 = arith.constant 0 : i32
    %c0_i32_0 = arith.constant 0 : i32
    %c0_i32_1 = arith.constant 0 : i32
    return %c0_i32, %c0_i32_0 : i32, i32
  }
  func.func @transform_6(%arg0: i32) -> (i32, i32) {
    %c0_i32 = arith.constant 0 : i32
    %c0_i32_0 = arith.constant 0 : i32
    %c0_i32_1 = arith.constant 0 : i32
    return %c0_i32, %c0_i32_0 : i32, i32
  }
  func.func @transform_7(%arg0: i32) -> (i32, i32) {
    %c0_i32 = arith.constant 0 : i32
    %c0_i32_0 = arith.constant 0 : i32
    %c0_i32_1 = arith.constant 0 : i32
    return %c0_i32, %c0_i32_0 : i32, i32
  }
  func.func @transform_8(%arg0: i32) -> (i32, i32, i32) {
    %c0_i32 = arith.constant 0 : i32
    %c0_i32_0 = arith.constant 0 : i32
    %c0_i32_1 = arith.constant 0 : i32
    return %arg0, %c0_i32, %c0_i32_0 : i32, i32, i32
  }
}

</mosaic_0001>

<llo_original>
// kernel: tpu_custom_call.1
$region0: #{tpu_custom_call.1}
  #allocation0 [shape = 'u32[]', space=smem, size = 0x4, offset = 0x4, fixed_abs, tag = 'smem constant byte address 0x4 - core index']
  #allocation1 [shape = 'u32[144,128]{1,0:T(1,128)}', space=vmem, size = 0x12000, scoped, tag = 'internal scratch']
  #allocation2 [shape = 'bf16[128,128]{1,0:T(8,128)(2,1)}', space=vmem, size = 0x8000, scoped, tag = 'scratch operand']
  %s0 = inlined_call_operand.hbm [shape: f32[2,128,128], index: 0, kind: input, shape index: {}]
  %s1 = inlined_call_operand.hbm [shape: f32[2,1,128], index: 1, kind: input, shape index: {}]
  %s2 = inlined_call_operand.hbm [shape: bf16[128,384], index: 2, kind: input, shape index: {}]
  %s3 = inlined_call_operand.vmem [shape: f32[1,384], index: 3, kind: input, shape index: {}]
  %s4 = inlined_call_operand.hbm [shape: bf16[128,128], index: 4, kind: input, shape index: {}]
  %s5 = inlined_call_operand.vmem [shape: f32[1,128], index: 5, kind: input, shape index: {}]
  %s6 = inlined_call_operand.vmem [shape: f32[1,128], index: 6, kind: input, shape index: {}]
  %s7 = inlined_call_operand.vmem [shape: f32[1,128], index: 7, kind: input, shape index: {}]
  %s8 = inlined_call_operand.hbm [shape: f32[2,128,128], index: 8, kind: output, shape index: {}]
  %s9 = sld [smem:[#allocation0]]
  $region81: #{tpu_custom_call.1} parent=0
    _
  %s11 = ssub.s32 1, %s9
  %s12 = scalar_select 0, %s11, %s9
  $region1: #{tpu_custom_call.1} parent=0
    #allocation3 [shape = 'u8[131072]{0}', space=vmem, size = 0x20000, scoped, tag = 'input window, operand 0']
    #allocation4 [shape = 's32[2]{0}', space=sflag, size = 0x8, scoped, tag = 'scoped memory for tpu_custom_call.1']
    #allocation5 [shape = 's32[2]{0}', space=sflag, size = 0x8, scoped, tag = 'scoped memory for tpu_custom_call.1']
    #allocation6 [shape = 'u8[1024]{0}', space=vmem, size = 0x400, scoped, tag = 'input window, operand 1']
    #allocation7 [shape = 's32[2]{0}', space=sflag, size = 0x8, scoped, tag = 'scoped memory for tpu_custom_call.1']
    #allocation8 [shape = 'u8[98304]{0}', space=vmem, size = 0x18000, scoped, tag = 'input window, operand 2, single buffered']
    #allocation9 [shape = 'u8[32768]{0}', space=vmem, size = 0x8000, scoped, tag = 'input window, operand 4, single buffered']
    #allocation10 [shape = 's32[1]{0}', space=sflag, size = 0x4, scoped, tag = 'scoped memory for tpu_custom_call.1']
    #allocation11 [shape = 'u8[131072]{0}', space=vmem, size = 0x20000, scoped, tag = 'output window, operand 0']
    %13 = vsyncpa [#allocation4], 0
    %s14 = scalar_lea.sflag [#allocation4], 1
    %15 = vsyncpa %s14, 0
    %16 = vsyncpa [#allocation7], 0
    %s17 = scalar_lea.sflag [#allocation7], 1
    %18 = vsyncpa %s17, 0
    %19 = vsyncpa [#allocation10], 0
    %20 = vsyncpa [#allocation5], 0
    %s21 = scalar_lea.sflag [#allocation5], 1
    %22 = vsyncpa %s21, 0
    loop: start=0, step=1, limit=4
    $region2: #{tpu_custom_call.1} parent=1 // loop_pre_header
      _
    $region3: #{tpu_custom_call.1} parent=1 // loop_header
      %s24 = sphi 0, %s28
      %p25 = scmp.ge.s32.totalorder %s24, 4
      %s34 = sphi 0, %s36
      %s37 = sphi 0, %s34
      %s38 = sphi 0, %s37
      %s54 = sphi 0, %s38
      %s60 = sphi 0, %s62
      %s63 = sphi 0, %s60
      %s64 = sphi 0, %s63
      %s80 = sphi 0, %s64
      %s84 = sphi 0, %s84
      %s86 = sphi 0, %s84
      %s87 = sphi 0, %s86
      %s101 = sphi 0, %s87
      %s105 = sphi 0, %s105
      %s107 = sphi 0, %s105
      %s108 = sphi 0, %s107
      %s122 = sphi 0, %s108
      %s126 = sphi 0, %s126
      %s128 = sphi 0, %s126
      %s129 = sphi 0, %s128
      %s143 = sphi 0, %s129
      %s147 = sphi 0, %s147
      %s149 = sphi 0, %s147
      %s150 = sphi 0, %s149
      %s164 = sphi 0, %s150
      %s168 = sphi 0, %s168
      %s170 = sphi 0, %s168
      %s171 = sphi 0, %s170
      %s185 = sphi 0, %s171
      %s189 = sphi 0, %s189
      %s191 = sphi 0, %s189
      %s192 = sphi 0, %s191
      %s206 = sphi 0, %s192
      %s212 = sphi 0, %s214
      %s215 = sphi 0, %s212
      %s216 = sphi 0, %s215
      %s232 = sphi 0, %s216
    $region4: #{tpu_custom_call.1} parent=1 // loop_header_branch
      %27 = sbr.rel (%p25) target = $region8
    $region5: #{tpu_custom_call.1} parent=1 // loop_body
      %s29 = ssub.s32 %s24, 1
      %s30 = ssub.s32 %s24, 2
      %s31 = sadd.s32 %s24, 1
      %s32 = ssub.s32 %s24, %s31
      %p33 = scmp.eq.s32.totalorder %s32, 0
      %s35 = sadd.s32 %s34, 1
      %s36 = scalar_select %p33, %s34, %s35
      %p39 = pneg %p33
      %p40 = scmp.eq.s32.totalorder %s24, 1
      %p41 = por %p39, %p40
      %p42 = scmp.ne.s32.totalorder %s34, %s37
      %p43 = scmp.eq.s32.totalorder %s24, 0
      %p44 = por %p42, %p43
      %p45 = scmp.ne.s32.totalorder %s34, %s37
      %p46 = scmp.eq.s32.totalorder %s29, 1
      %p47 = por %p45, %p46
      %p48 = scmp.ne.s32.totalorder %s37, %s38
      %p49 = scmp.eq.s32.totalorder %s29, 0
      %p50 = por %p48, %p49
      %p51 = scmp.ne.s32.totalorder %s37, %s38
      %p52 = scmp.eq.s32.totalorder %s30, 1
      %p53 = por %p51, %p52
      %p55 = scmp.ne.s32.totalorder %s38, %s54
      %p56 = scmp.eq.s32.totalorder %s30, 0
      %p57 = por %p55, %p56
      %s58 = ssub.s32 %s24, %s31
      %p59 = scmp.eq.s32.totalorder %s58, 0
      %s61 = sadd.s32 %s60, 1
      %s62 = scalar_select %p59, %s60, %s61
      %p65 = pneg %p59
      %p66 = scmp.eq.s32.totalorder %s24, 1
      %p67 = por %p65, %p66
      %p68 = scmp.ne.s32.totalorder %s60, %s63
      %p69 = scmp.eq.s32.totalorder %s24, 0
      %p70 = por %p68, %p69
      %p71 = scmp.ne.s32.totalorder %s60, %s63
      %p72 = scmp.eq.s32.totalorder %s29, 1
      %p73 = por %p71, %p72
      %p74 = scmp.ne.s32.totalorder %s63, %s64
      %p75 = scmp.eq.s32.totalorder %s29, 0
      %p76 = por %p74, %p75
      %p77 = scmp.ne.s32.totalorder %s63, %s64
      %p78 = scmp.eq.s32.totalorder %s30, 1
      %p79 = por %p77, %p78
      %p81 = scmp.ne.s32.totalorder %s64, %s80
      %p82 = scmp.eq.s32.totalorder %s30, 0
      %p83 = por %p81, %p82
      %s85 = sadd.s32 %s84, 1
      %p88 = scmp.eq.s32.totalorder %s24, 1
      %p89 = scmp.ne.s32.totalorder %s84, %s86
      %p90 = scmp.eq.s32.totalorder %s24, 0
      %p91 = por %p89, %p90
      %p92 = scmp.ne.s32.totalorder %s84, %s86
      %p93 = scmp.eq.s32.totalorder %s29, 1
      %p94 = por %p92, %p93
      %p95 = scmp.ne.s32.totalorder %s86, %s87
      %p96 = scmp.eq.s32.totalorder %s29, 0
      %p97 = por %p95, %p96
      %p98 = scmp.ne.s32.totalorder %s86, %s87
      %p99 = scmp.eq.s32.totalorder %s30, 1
      %p100 = por %p98, %p99
      %p102 = scmp.ne.s32.totalorder %s87, %s101
      %p103 = scmp.eq.s32.totalorder %s30, 0
      %p104 = por %p102, %p103
      %s106 = sadd.s32 %s105, 1
      %p109 = scmp.eq.s32.totalorder %s24, 1
      %p110 = scmp.ne.s32.totalorder %s105, %s107
      %p111 = scmp.eq.s32.totalorder %s24, 0
      %p112 = por %p110, %p111
      %p113 = scmp.ne.s32.totalorder %s105, %s107
      %p114 = scmp.eq.s32.totalorder %s29, 1
      %p115 = por %p113, %p114
      %p116 = scmp.ne.s32.totalorder %s107, %s108
      %p117 = scmp.eq.s32.totalorder %s29, 0
      %p118 = por %p116, %p117
      %p119 = scmp.ne.s32.totalorder %s107, %s108
      %p120 = scmp.eq.s32.totalorder %s30, 1
      %p121 = por %p119, %p120
      %p123 = scmp.ne.s32.totalorder %s108, %s122
      %p124 = scmp.eq.s32.totalorder %s30, 0
      %p125 = por %p123, %p124
      %s127 = sadd.s32 %s126, 1
      %p130 = scmp.eq.s32.totalorder %s24, 1
      %p131 = scmp.ne.s32.totalorder %s126, %s128
      %p132 = scmp.eq.s32.totalorder %s24, 0
      %p133 = por %p131, %p132
      %p134 = scmp.ne.s32.totalorder %s126, %s128
      %p135 = scmp.eq.s32.totalorder %s29, 1
      %p136 = por %p134, %p135
      %p137 = scmp.ne.s32.totalorder %s128, %s129
      %p138 = scmp.eq.s32.totalorder %s29, 0
      %p139 = por %p137, %p138
      %p140 = scmp.ne.s32.totalorder %s128, %s129
      %p141 = scmp.eq.s32.totalorder %s30, 1
      %p142 = por %p140, %p141
      %p144 = scmp.ne.s32.totalorder %s129, %s143
      %p145 = scmp.eq.s32.totalorder %s30, 0
      %p146 = por %p144, %p145
      %s148 = sadd.s32 %s147, 1
      %p151 = scmp.eq.s32.totalorder %s24, 1
      %p152 = scmp.ne.s32.totalorder %s147, %s149
      %p153 = scmp.eq.s32.totalorder %s24, 0
      %p154 = por %p152, %p153
      %p155 = scmp.ne.s32.totalorder %s147, %s149
      %p156 = scmp.eq.s32.totalorder %s29, 1
      %p157 = por %p155, %p156
      %p158 = scmp.ne.s32.totalorder %s149, %s150
      %p159 = scmp.eq.s32.totalorder %s29, 0
      %p160 = por %p158, %p159
      %p161 = scmp.ne.s32.totalorder %s149, %s150
      %p162 = scmp.eq.s32.totalorder %s30, 1
      %p163 = por %p161, %p162
      %p165 = scmp.ne.s32.totalorder %s150, %s164
      %p166 = scmp.eq.s32.totalorder %s30, 0
      %p167 = por %p165, %p166
      %s169 = sadd.s32 %s168, 1
      %p172 = scmp.eq.s32.totalorder %s24, 1
      %p173 = scmp.ne.s32.totalorder %s168, %s170
      %p174 = scmp.eq.s32.totalorder %s24, 0
      %p175 = por %p173, %p174
      %p176 = scmp.ne.s32.totalorder %s168, %s170
      %p177 = scmp.eq.s32.totalorder %s29, 1
      %p178 = por %p176, %p177
      %p179 = scmp.ne.s32.totalorder %s170, %s171
      %p180 = scmp.eq.s32.totalorder %s29, 0
      %p181 = por %p179, %p180
      %p182 = scmp.ne.s32.totalorder %s170, %s171
      %p183 = scmp.eq.s32.totalorder %s30, 1
      %p184 = por %p182, %p183
      %p186 = scmp.ne.s32.totalorder %s171, %s185
      %p187 = scmp.eq.s32.totalorder %s30, 0
      %p188 = por %p186, %p187
      %s190 = sadd.s32 %s189, 1
      %p193 = scmp.eq.s32.totalorder %s24, 1
      %p194 = scmp.ne.s32.totalorder %s189, %s191
      %p195 = scmp.eq.s32.totalorder %s24, 0
      %p196 = por %p194, %p195
      %p197 = scmp.ne.s32.totalorder %s189, %s191
      %p198 = scmp.eq.s32.totalorder %s29, 1
      %p199 = por %p197, %p198
      %p200 = scmp.ne.s32.totalorder %s191, %s192
      %p201 = scmp.eq.s32.totalorder %s29, 0
      %p202 = por %p200, %p201
      %p203 = scmp.ne.s32.totalorder %s191, %s192
      %p204 = scmp.eq.s32.totalorder %s30, 1
      %p205 = por %p203, %p204
      %p207 = scmp.ne.s32.totalorder %s192, %s206
      %p208 = scmp.eq.s32.totalorder %s30, 0
      %p209 = por %p207, %p208
      %s210 = ssub.s32 %s24, %s31
      %p211 = scmp.eq.s32.totalorder %s210, 0
      %s213 = sadd.s32 %s212, 1
      %s214 = scalar_select %p211, %s212, %s213
      %p217 = pneg %p211
      %p218 = scmp.eq.s32.totalorder %s24, 1
      %p219 = por %p217, %p218
      %p220 = scmp.ne.s32.totalorder %s212, %s215
      %p221 = scmp.eq.s32.totalorder %s24, 0
      %p222 = por %p220, %p221
      %p223 = scmp.ne.s32.totalorder %s212, %s215
      %p224 = scmp.eq.s32.totalorder %s29, 1
      %p225 = por %p223, %p224
      %p226 = scmp.ne.s32.totalorder %s215, %s216
      %p227 = scmp.eq.s32.totalorder %s29, 0
      %p228 = por %p226, %p227
      %p229 = scmp.ne.s32.totalorder %s215, %s216
      %p230 = scmp.eq.s32.totalorder %s30, 1
      %p231 = por %p229, %p230
      %p233 = scmp.ne.s32.totalorder %s216, %s232
      %p234 = scmp.eq.s32.totalorder %s30, 0
      %p235 = por %p233, %p234
      %p236 = scmp.le.s32.totalorder 1, %s24
      %p237 = scmp.lt.s32.totalorder %s24, 3
      %p238 = pnand %p236, %p237
      %p239 = pneg %p238
      // Predicated region
      $region9: #{tpu_custom_call.1} parent=5 // pred_check
        _
      $region10: #{tpu_custom_call.1} parent=5 // pred_check_branch
        %241 = sbr.rel (%p238) target = $region12
      $region11: #{tpu_custom_call.1} parent=5 // pred_region
        %s242 = ssub.s32 %s24, 1
        // Predicated region
        $region13: #{tpu_custom_call.1} parent=11 // pred_check
          %p243 = pneg %p97
        $region14: #{tpu_custom_call.1} parent=11 // pred_check_branch
          %245 = sbr.rel (%p243) target = $region16
        $region15: #{tpu_custom_call.1} parent=11 // pred_region
          %s247 = ssub.s32 3072, 3072
          %248 = vsyncadd [#allocation7], %s247
          %s249 = sshll.u32 [#allocation8], 4
          %s250 = int_to_ptr.vmem [resolvable:$true] %s249
          %255 = dma.hbm_to_vmem [thread:$0]  %s2, 3072, %s250, [#allocation7], 192, 192, 12
        $region16: #{tpu_custom_call.1} parent=11 // pred_fallthru
          _
        // Predicated region
        $region17: #{tpu_custom_call.1} parent=11 // pred_check
          %p256 = pneg %p118
        $region18: #{tpu_custom_call.1} parent=11 // pred_check_branch
          %258 = sbr.rel (%p256) target = $region20
        $region19: #{tpu_custom_call.1} parent=11 // pred_region
          _
        $region20: #{tpu_custom_call.1} parent=11 // pred_fallthru
          _
        // Predicated region
        $region21: #{tpu_custom_call.1} parent=11 // pred_check
          %p259 = pneg %p139
        $region22: #{tpu_custom_call.1} parent=11 // pred_check_branch
          %261 = sbr.rel (%p259) target = $region24
        $region23: #{tpu_custom_call.1} parent=11 // pred_region
          %s263 = ssub.s32 1024, 1024
          %264 = vsyncadd [#allocation10], %s263
          %s265 = sshll.u32 [#allocation9], 4
          %s266 = int_to_ptr.vmem [resolvable:$true] %s265
          %271 = dma.hbm_to_vmem [thread:$0]  %s4, 1024, %s266, [#allocation10], 64, 64, 4
        $region24: #{tpu_custom_call.1} parent=11 // pred_fallthru
          _
        // Predicated region
        $region25: #{tpu_custom_call.1} parent=11 // pred_check
          %p272 = pneg %p160
        $region26: #{tpu_custom_call.1} parent=11 // pred_check_branch
          %274 = sbr.rel (%p272) target = $region28
        $region27: #{tpu_custom_call.1} parent=11 // pred_region
          _
        $region28: #{tpu_custom_call.1} parent=11 // pred_fallthru
          _
        // Predicated region
        $region29: #{tpu_custom_call.1} parent=11 // pred_check
          %p275 = pneg %p181
        $region30: #{tpu_custom_call.1} parent=11 // pred_check_branch
          %277 = sbr.rel (%p275) target = $region32
        $region31: #{tpu_custom_call.1} parent=11 // pred_region
          _
        $region32: #{tpu_custom_call.1} parent=11 // pred_fallthru
          _
        // Predicated region
        $region33: #{tpu_custom_call.1} parent=11 // pred_check
          %p278 = pneg %p202
        $region34: #{tpu_custom_call.1} parent=11 // pred_check_branch
          %280 = sbr.rel (%p278) target = $region36
        $region35: #{tpu_custom_call.1} parent=11 // pred_region
          _
        $region36: #{tpu_custom_call.1} parent=11 // pred_fallthru
          _
      $region12: #{tpu_custom_call.1} parent=5 // pred_fallthru
        _
      %p281 = scmp.lt.s32.totalorder %s24, 2
      // Predicated region
      $region37: #{tpu_custom_call.1} parent=5 // pred_check
        %p282 = pneg %p281
      $region38: #{tpu_custom_call.1} parent=5 // pred_check_branch
        %284 = sbr.rel (%p282) target = $region40
      $region39: #{tpu_custom_call.1} parent=5 // pred_region
        // Predicated region
        $region41: #{tpu_custom_call.1} parent=39 // pred_check
          %p285 = pneg %p44
        $region42: #{tpu_custom_call.1} parent=39 // pred_check_branch
          %287 = sbr.rel (%p285) target = $region44
        $region43: #{tpu_custom_call.1} parent=39 // pred_region
          %s288 = sand.u32 %s34, 1
          %s289 = scalar_lea.sflag [#allocation4], %s288
          %s290 = sand.u32 %s34, 1
          %s291 = smul.addr %s290, 128
          %s292 = scalar_lea.vmem [#allocation3], %s291
          %s294 = ssub.s32 2048, 2048
          %295 = vsyncadd %s289, %s294
          %s296 = smul.addr %s24, 16
          %s297 = smul.addr %s296, 128
          %s298 = scalar_lea.hbm %s0, %s297
          %s299 = sshll.u32 %s292, 4
          %s300 = int_to_ptr.vmem [resolvable:$true] %s299
          %305 = dma.hbm_to_vmem [thread:$0]  %s298, 2048, %s300, %s289, 128, 128, 8
        $region44: #{tpu_custom_call.1} parent=39 // pred_fallthru
          _
        // Predicated region
        $region45: #{tpu_custom_call.1} parent=39 // pred_check
          %p306 = pneg %p70
        $region46: #{tpu_custom_call.1} parent=39 // pred_check_branch
          %308 = sbr.rel (%p306) target = $region48
        $region47: #{tpu_custom_call.1} parent=39 // pred_region
          %s309 = sand.u32 %s24, 1
          %s310 = scalar_lea.sflag [#allocation7], %s309
          %s311 = sand.u32 %s60, 1
          %s312 = scalar_lea.vmem [#allocation6], %s311
          %s314 = ssub.s32 16, 16
          %315 = vsyncadd %s310, %s314
          %s316 = smul.addr %s24, 16
          %s317 = scalar_lea.hbm %s1, %s316
          %s319 = sshll.u32 %s312, 4
          %s320 = int_to_ptr.vmem [resolvable:$true] %s319
          %322 = dma.hbm_to_vmem [thread:$0]  %s317, 16, %s320, %s310
        $region48: #{tpu_custom_call.1} parent=39 // pred_fallthru
          _
      $region40: #{tpu_custom_call.1} parent=5 // pred_fallthru
        _
      %p323 = scmp.le.s32.totalorder 1, %s24
      %p324 = scmp.lt.s32.totalorder %s24, 3
      %p325 = pnand %p323, %p324
      %p326 = pneg %p325
      // Predicated region
      $region49: #{tpu_custom_call.1} parent=5 // pred_check
        _
      $region50: #{tpu_custom_call.1} parent=5 // pred_check_branch
        %328 = sbr.rel (%p325) target = $region52
      $region51: #{tpu_custom_call.1} parent=5 // pred_region
        %s329 = ssub.s32 %s24, 1
        %s330 = sand.u32 %s37, 1
        %s331 = scalar_lea.sflag [#allocation4], %s330
        %s332 = sand.u32 %s37, 1
        %s333 = smul.addr %s332, 128
        %s334 = scalar_lea.vmem [#allocation3], %s333
        // Predicated region
        $region53: #{tpu_custom_call.1} parent=51 // pred_check
          %p335 = pneg %p50
        $region54: #{tpu_custom_call.1} parent=51 // pred_check_branch
          %337 = sbr.rel (%p335) target = $region56
        $region55: #{tpu_custom_call.1} parent=51 // pred_region
          %338 = dma.done %s331, 2048
        $region56: #{tpu_custom_call.1} parent=51 // pred_fallthru
          _
        %s339 = sand.u32 %s29, 1
        %s340 = scalar_lea.sflag [#allocation7], %s339
        %s341 = sand.u32 %s63, 1
        %s342 = scalar_lea.vmem [#allocation6], %s341
        // Predicated region
        $region57: #{tpu_custom_call.1} parent=51 // pred_check
          %p343 = pneg %p76
        $region58: #{tpu_custom_call.1} parent=51 // pred_check_branch
          %345 = sbr.rel (%p343) target = $region60
        $region59: #{tpu_custom_call.1} parent=51 // pred_region
          %346 = dma.done %s340, 16
        $region60: #{tpu_custom_call.1} parent=51 // pred_fallthru
          _
        // Predicated region
        $region61: #{tpu_custom_call.1} parent=51 // pred_check
          %p347 = pneg %p97
        $region62: #{tpu_custom_call.1} parent=51 // pred_check_branch
          %349 = sbr.rel (%p347) target = $region64
        $region63: #{tpu_custom_call.1} parent=51 // pred_region
          %350 = dma.done [#allocation7], 3072
        $region64: #{tpu_custom_call.1} parent=51 // pred_fallthru
          _
        // Predicated region
        $region65: #{tpu_custom_call.1} parent=51 // pred_check
          %p351 = pneg %p139
        $region66: #{tpu_custom_call.1} parent=51 // pred_check_branch
          %353 = sbr.rel (%p351) target = $region68
        $region67: #{tpu_custom_call.1} parent=51 // pred_region
          %354 = dma.done [#allocation10], 1024
        $region68: #{tpu_custom_call.1} parent=51 // pred_fallthru
          _
        %s355 = sand.u32 %s37, 1
        %s356 = scalar_lea.sflag [#allocation4], %s355
        %s357 = sand.u32 %s37, 1
        %s358 = smul.addr %s357, 128
        %s359 = scalar_lea.vmem [#allocation3], %s358
        %p360 = pneg %p50
        %p361 = pneg %p47
        %s362 = sand.u32 %s29, 1
        %s363 = scalar_lea.sflag [#allocation7], %s362
        %s364 = sand.u32 %s63, 1
        %s365 = scalar_lea.vmem [#allocation6], %s364
        %p366 = pneg %p76
        %p367 = pneg %p73
        %p368 = pneg %p97
        %p369 = pneg %p94
        %p370 = pneg %p118
        %p371 = pneg %p115
        %p372 = pneg %p139
        %p373 = pneg %p136
        %p374 = pneg %p160
        %p375 = pneg %p157
        %p376 = pneg %p181
        %p377 = pneg %p178
        %p378 = pneg %p202
        %p379 = pneg %p199
        %p380 = pneg %p228
        %p381 = pneg %p225
        %s382 = sand.u32 %s215, 1
        %s383 = scalar_lea.sflag [#allocation5], %s382
        %s384 = sand.u32 %s215, 1
        %s385 = smul.addr %s384, 128
        %s386 = scalar_lea.vmem [#allocation11], %s385
        %v388 = vld [vmem:[%s334] sm:$0xff]
        %v389 = vld [vmem:[%s334 + $0x8] sm:$0xff]
        %v390 = vld [vmem:[%s334 + $0x10] sm:$0xff]
        %v391 = vld [vmem:[%s334 + $0x18] sm:$0xff]
        %v392 = vld [vmem:[%s334 + $0x20] sm:$0xff]
        %v393 = vld [vmem:[%s334 + $0x28] sm:$0xff]
        %v394 = vld [vmem:[%s334 + $0x30] sm:$0xff]
        %v395 = vld [vmem:[%s334 + $0x38] sm:$0xff]
        %v396 = vld [vmem:[%s334 + $0x40] sm:$0xff]
        %v397 = vld [vmem:[%s334 + $0x48] sm:$0xff]
        %v398 = vld [vmem:[%s334 + $0x50] sm:$0xff]
        %v399 = vld [vmem:[%s334 + $0x58] sm:$0xff]
        %v400 = vld [vmem:[%s334 + $0x60] sm:$0xff]
        %v401 = vld [vmem:[%s334 + $0x68] sm:$0xff]
        %v402 = vld [vmem:[%s334 + $0x70] sm:$0xff]
        %v403 = vld [vmem:[%s334 + $0x78] sm:$0xff]
        %v404 = vpack.c.bf16 %v389, %v388
        %v405 = vpack.c.bf16 %v391, %v390
        %v406 = vpack.c.bf16 %v393, %v392
        %v407 = vpack.c.bf16 %v395, %v394
        %v408 = vpack.c.bf16 %v397, %v396
        %v409 = vpack.c.bf16 %v399, %v398
        %v410 = vpack.c.bf16 %v401, %v400
        %v411 = vpack.c.bf16 %v403, %v402
        %v412 = vld [vmem:[#allocation8] sm:$0xff]
        %v413 = vld [vmem:[#allocation8 + $0x8] sm:$0xf]
        %v414 = vld [vmem:[#allocation8 + $0xc] sm:$0xff]
        %v415 = vld [vmem:[#allocation8 + $0x14] sm:$0xf]
        %v416 = vld [vmem:[#allocation8 + $0x18] sm:$0xff]
        %v417 = vld [vmem:[#allocation8 + $0x20] sm:$0xf]
        %v418 = vld [vmem:[#allocation8 + $0x24] sm:$0xff]
        %v419 = vld [vmem:[#allocation8 + $0x2c] sm:$0xf]
        %v420 = vld [vmem:[#allocation8 + $0x30] sm:$0xff]
        %v421 = vld [vmem:[#allocation8 + $0x38] sm:$0xf]
        %v422 = vld [vmem:[#allocation8 + $0x3c] sm:$0xff]
        %v423 = vld [vmem:[#allocation8 + $0x44] sm:$0xf]
        %v424 = vld [vmem:[#allocation8 + $0x48] sm:$0xff]
        %v425 = vld [vmem:[#allocation8 + $0x50] sm:$0xf]
        %v426 = vld [vmem:[#allocation8 + $0x54] sm:$0xff]
        %v427 = vld [vmem:[#allocation8 + $0x5c] sm:$0xf]
        %v428 = vld [vmem:[#allocation8 + $0x60] sm:$0xff]
        %v429 = vld [vmem:[#allocation8 + $0x68] sm:$0xf]
        %v430 = vld [vmem:[#allocation8 + $0x6c] sm:$0xff]
        %v431 = vld [vmem:[#allocation8 + $0x74] sm:$0xf]
        %v432 = vld [vmem:[#allocation8 + $0x78] sm:$0xff]
        %v433 = vld [vmem:[#allocation8 + $0x80] sm:$0xf]
        %v434 = vld [vmem:[#allocation8 + $0x84] sm:$0xff]
        %v435 = vld [vmem:[#allocation8 + $0x8c] sm:$0xf]
        %v436 = vld [vmem:[#allocation8 + $0x90] sm:$0xff]
        %v437 = vld [vmem:[#allocation8 + $0x98] sm:$0xf]
        %v438 = vld [vmem:[#allocation8 + $0x9c] sm:$0xff]
        %v439 = vld [vmem:[#allocation8 + $0xa4] sm:$0xf]
        %v440 = vld [vmem:[#allocation8 + $0xa8] sm:$0xff]
        %v441 = vld [vmem:[#allocation8 + $0xb0] sm:$0xf]
        %v442 = vld [vmem:[#allocation8 + $0xb4] sm:$0xff]
        %v443 = vld [vmem:[#allocation8 + $0xbc] sm:$0xf]
        %v444 = vld [vmem:[%s3] sm:$0x7]
        %v446 = vlaneseq
        %v447 = vshrl.u32 %v446, 7
        %v448 = vsub.s32 0, %v447
        %v449 = vrot.slane %v444, %v448
        %v450 = vlaneseq
        %v451 = vshrl.u32 %v450, 7
        %v452 = vsub.s32 1, %v451
        %v453 = vrot.slane %v444, %v452
        %v454 = vlaneseq
        %v455 = vshrl.u32 %v454, 7
        %v456 = vsub.s32 2, %v455
        %v457 = vrot.slane %v444, %v456
        %v493 = vunpack.c.l.b16 %v412
        %v494 = vunpack.c.h.b16 %v412
        %v495 = vunpack.c.l.b16 %v413
        %v496 = vunpack.c.l.b16 %v414
        %v497 = vunpack.c.h.b16 %v414
        %v498 = vunpack.c.l.b16 %v415
        %v499 = vunpack.c.l.b16 %v416
        %v500 = vunpack.c.h.b16 %v416
        %v501 = vunpack.c.l.b16 %v417
        %v502 = vunpack.c.l.b16 %v418
        %v503 = vunpack.c.h.b16 %v418
        %v504 = vunpack.c.l.b16 %v419
        %v505 = vunpack.c.l.b16 %v420
        %v506 = vunpack.c.h.b16 %v420
        %v507 = vunpack.c.l.b16 %v421
        %v508 = vunpack.c.l.b16 %v422
        %v509 = vunpack.c.h.b16 %v422
        %v510 = vunpack.c.l.b16 %v423
        %v511 = vunpack.c.l.b16 %v424
        %v512 = vunpack.c.h.b16 %v424
        %v513 = vunpack.c.l.b16 %v425
        %v514 = vunpack.c.l.b16 %v426
        %v515 = vunpack.c.h.b16 %v426
        %v516 = vunpack.c.l.b16 %v427
        %v517 = vunpack.c.l.b16 %v428
        %v518 = vunpack.c.h.b16 %v428
        %v519 = vunpack.c.l.b16 %v429
        %v520 = vunpack.c.l.b16 %v430
        %v521 = vunpack.c.h.b16 %v430
        %v522 = vunpack.c.l.b16 %v431
        %v523 = vunpack.c.l.b16 %v432
        %v524 = vunpack.c.h.b16 %v432
        %v525 = vunpack.c.l.b16 %v433
        %v526 = vunpack.c.l.b16 %v434
        %v527 = vunpack.c.h.b16 %v434
        %v528 = vunpack.c.l.b16 %v435
        %v529 = vunpack.c.l.b16 %v436
        %v530 = vunpack.c.h.b16 %v436
        %v531 = vunpack.c.l.b16 %v437
        %v532 = vunpack.c.l.b16 %v438
        %v533 = vunpack.c.h.b16 %v438
        %v534 = vunpack.c.l.b16 %v439
        %v535 = vunpack.c.l.b16 %v440
        %v536 = vunpack.c.h.b16 %v440
        %v537 = vunpack.c.l.b16 %v441
        %v538 = vunpack.c.l.b16 %v442
        %v539 = vunpack.c.h.b16 %v442
        %v540 = vunpack.c.l.b16 %v443
        %v541 = vpack.c.b16 %v496, %v493
        %v542 = vpack.c.b16 %v497, %v494
        %v543 = vpack.c.b16 %v498, %v495
        %v544 = vpack.c.b16 %v502, %v499
        %v545 = vpack.c.b16 %v503, %v500
        %v546 = vpack.c.b16 %v504, %v501
        %v547 = vpack.c.b16 %v508, %v505
        %v548 = vpack.c.b16 %v509, %v506
        %v549 = vpack.c.b16 %v510, %v507
        %v550 = vpack.c.b16 %v514, %v511
        %v551 = vpack.c.b16 %v515, %v512
        %v552 = vpack.c.b16 %v516, %v513
        %v553 = vpack.c.b16 %v520, %v517
        %v554 = vpack.c.b16 %v521, %v518
        %v555 = vpack.c.b16 %v522, %v519
        %v556 = vpack.c.b16 %v526, %v523
        %v557 = vpack.c.b16 %v527, %v524
        %v558 = vpack.c.b16 %v528, %v525
        %v559 = vpack.c.b16 %v532, %v529
        %v560 = vpack.c.b16 %v533, %v530
        %v561 = vpack.c.b16 %v534, %v531
        %v562 = vpack.c.b16 %v538, %v535
        %v563 = vpack.c.b16 %v539, %v536
        %v564 = vpack.c.b16 %v540, %v537
        %589 = vmatprep.subr.bf16.mxu0 %v563
        %590 = vmatpush1.bf16.msra.mxu0 %v562
        %591 = vmatprep.subr.bf16.mxu0 %v560
        %592 = vmatpush1.bf16.msra.mxu0 %v559
        %593 = vmatprep.subr.bf16.mxu0 %v557
        %594 = vmatpush1.bf16.msra.mxu0 %v556
        %595 = vmatprep.subr.bf16.mxu0 %v554
        %596 = vmatpush1.bf16.msra.mxu0 %v553
        %597 = vmatprep.subr.bf16.mxu0 %v551
        %598 = vmatpush1.bf16.msra.mxu0 %v550
        %599 = vmatprep.subr.bf16.mxu0 %v548
        %600 = vmatpush1.bf16.msra.mxu0 %v547
        %601 = vmatprep.subr.bf16.mxu0 %v545
        %602 = vmatpush1.bf16.msra.mxu0 %v544
        %603 = vmatprep.subr.bf16.mxu0 %v542
        %604 = vmatpush1.bf16.msra.mxu0 %v541
        %605 = vmatprep.subr.bf16.mxu0 0
        %606 = vmatpush2.bf16.msra.mxu0 0
        %607 = vmatprep.subr.bf16.mxu0 0
        %608 = vmatpush2.bf16.msra.mxu0 0
        %609 = vmatprep.subr.bf16.mxu0 0
        %610 = vmatpush2.bf16.msra.mxu0 0
        %611 = vmatprep.subr.bf16.mxu0 0
        %612 = vmatpush2.bf16.msra.mxu0 0
        %613 = vmatprep.subr.bf16.mxu0 0
        %614 = vmatpush2.bf16.msra.mxu0 0
        %615 = vmatprep.subr.bf16.mxu0 0
        %616 = vmatpush2.bf16.msra.mxu0 0
        %617 = vmatprep.subr.bf16.mxu0 0
        %618 = vmatpush2.bf16.msra.mxu0 0
        %619 = vmatprep.subr.bf16.mxu0 0
        %620 = vmatpush2.bf16.msra.mxu0 0
        %621 = vmatprep.mubr.bf16.mxu0 0
        %622 = vmatmul.mubr.bf16.gmra.mxu0 %v404
        %v623 = vpop.f32.mrf.mxu0
        %v624 = vadd.f32 %v449, %v623
        %v625 = vpop.f32.mrf.mxu0
        %v626 = vadd.f32 %v453, %v625
        %v627 = vpop.f32.mrf.mxu0
        %v628 = vadd.f32 %v449, %v627
        %v629 = vpop.f32.mrf.mxu0
        %v630 = vadd.f32 %v453, %v629
        %631 = vmatprep.mubr.bf16.mxu0 0
        %632 = vmatmul.mubr.bf16.gmra.mxu0 %v405
        %v633 = vpop.f32.mrf.mxu0
        %v634 = vadd.f32 %v449, %v633
        %v635 = vpop.f32.mrf.mxu0
        %v636 = vadd.f32 %v453, %v635
        %v637 = vpop.f32.mrf.mxu0
        %v638 = vadd.f32 %v449, %v637
        %v639 = vpop.f32.mrf.mxu0
        %v640 = vadd.f32 %v453, %v639
        %641 = vmatprep.mubr.bf16.mxu0 0
        %642 = vmatmul.mubr.bf16.gmra.mxu0 %v406
        %v643 = vpop.f32.mrf.mxu0
        %v644 = vadd.f32 %v449, %v643
        %v645 = vpop.f32.mrf.mxu0
        %v646 = vadd.f32 %v453, %v645
        %v647 = vpop.f32.mrf.mxu0
        %v648 = vadd.f32 %v449, %v647
        %v649 = vpop.f32.mrf.mxu0
        %v650 = vadd.f32 %v453, %v649
        %651 = vmatprep.mubr.bf16.mxu0 0
        %652 = vmatmul.mubr.bf16.gmra.mxu0 %v407
        %v653 = vpop.f32.mrf.mxu0
        %v654 = vadd.f32 %v449, %v653
        %v655 = vpop.f32.mrf.mxu0
        %v656 = vadd.f32 %v453, %v655
        %v657 = vpop.f32.mrf.mxu0
        %v658 = vadd.f32 %v449, %v657
        %v659 = vpop.f32.mrf.mxu0
        %v660 = vadd.f32 %v453, %v659
        %661 = vmatprep.mubr.bf16.mxu0 0
        %662 = vmatmul.mubr.bf16.gmra.mxu0 %v408
        %v663 = vpop.f32.mrf.mxu0
        %v664 = vadd.f32 %v449, %v663
        %v665 = vpop.f32.mrf.mxu0
        %v666 = vadd.f32 %v453, %v665
        %v667 = vpop.f32.mrf.mxu0
        %v668 = vadd.f32 %v449, %v667
        %v669 = vpop.f32.mrf.mxu0
        %v670 = vadd.f32 %v453, %v669
        %671 = vmatprep.mubr.bf16.mxu0 0
        %672 = vmatmul.mubr.bf16.gmra.mxu0 %v409
        %v673 = vpop.f32.mrf.mxu0
        %v674 = vadd.f32 %v449, %v673
        %v675 = vpop.f32.mrf.mxu0
        %v676 = vadd.f32 %v453, %v675
        %v677 = vpop.f32.mrf.mxu0
        %v678 = vadd.f32 %v449, %v677
        %v679 = vpop.f32.mrf.mxu0
        %v680 = vadd.f32 %v453, %v679
        %681 = vmatprep.mubr.bf16.mxu0 0
        %682 = vmatmul.mubr.bf16.gmra.mxu0 %v410
        %v683 = vpop.f32.mrf.mxu0
        %v684 = vadd.f32 %v449, %v683
        %v685 = vpop.f32.mrf.mxu0
        %v686 = vadd.f32 %v453, %v685
        %v687 = vpop.f32.mrf.mxu0
        %v688 = vadd.f32 %v449, %v687
        %v689 = vpop.f32.mrf.mxu0
        %v690 = vadd.f32 %v453, %v689
        %691 = vmatprep.mubr.bf16.mxu0 0
        %692 = vmatmul.mubr.bf16.gmra.mxu0 %v411
        %v693 = vpop.f32.mrf.mxu0
        %v694 = vadd.f32 %v449, %v693
        %v695 = vpop.f32.mrf.mxu0
        %v696 = vadd.f32 %v453, %v695
        %v697 = vpop.f32.mrf.mxu0
        %v698 = vadd.f32 %v449, %v697
        %v699 = vpop.f32.mrf.mxu0
        %v700 = vadd.f32 %v453, %v699
        %701 = vdwg.mxu0
        %702 = vmatprep.subr.bf16.mxu0 0
        %703 = vmatpush1.bf16.msra.mxu0 %v564
        %704 = vmatprep.subr.bf16.mxu0 0
        %705 = vmatpush1.bf16.msra.mxu0 %v561
        %706 = vmatprep.subr.bf16.mxu0 0
        %707 = vmatpush1.bf16.msra.mxu0 %v558
        %708 = vmatprep.subr.bf16.mxu0 0
        %709 = vmatpush1.bf16.msra.mxu0 %v555
        %710 = vmatprep.subr.bf16.mxu0 0
        %711 = vmatpush1.bf16.msra.mxu0 %v552
        %712 = vmatprep.subr.bf16.mxu0 0
        %713 = vmatpush1.bf16.msra.mxu0 %v549
        %714 = vmatprep.subr.bf16.mxu0 0
        %715 = vmatpush1.bf16.msra.mxu0 %v546
        %716 = vmatprep.subr.bf16.mxu0 0
        %717 = vmatpush1.bf16.msra.mxu0 %v543
        %718 = vmatprep.subr.bf16.mxu0 0
        %719 = vmatpush2.bf16.msra.mxu0 0
        %720 = vmatprep.subr.bf16.mxu0 0
        %721 = vmatpush2.bf16.msra.mxu0 0
        %722 = vmatprep.subr.bf16.mxu0 0
        %723 = vmatpush2.bf16.msra.mxu0 0
        %724 = vmatprep.subr.bf16.mxu0 0
        %725 = vmatpush2.bf16.msra.mxu0 0
        %726 = vmatprep.subr.bf16.mxu0 0
        %727 = vmatpush2.bf16.msra.mxu0 0
        %728 = vmatprep.subr.bf16.mxu0 0
        %729 = vmatpush2.bf16.msra.mxu0 0
        %730 = vmatprep.subr.bf16.mxu0 0
        %731 = vmatpush2.bf16.msra.mxu0 0
        %732 = vmatprep.subr.bf16.mxu0 0
        %733 = vmatpush2.bf16.msra.mxu0 0
        %734 = vmatprep.mubr.bf16.mxu0 0
        %735 = vmatmul.mubr.bf16.gmra.mxu0 %v404
        %v736 = vpop.f32.mrf.mxu0
        %v737 = vadd.f32 %v457, %v736
        %v738 = vpop.f32.mrf.mxu0
        %v739 = vpop.f32.mrf.mxu0
        %v740 = vadd.f32 %v457, %v739
        %v741 = vpop.f32.mrf.mxu0
        %742 = vmatprep.mubr.bf16.mxu0 0
        %743 = vmatmul.mubr.bf16.gmra.mxu0 %v405
        %v744 = vpop.f32.mrf.mxu0
        %v745 = vadd.f32 %v457, %v744
        %v746 = vpop.f32.mrf.mxu0
        %v747 = vpop.f32.mrf.mxu0
        %v748 = vadd.f32 %v457, %v747
        %v749 = vpop.f32.mrf.mxu0
        %750 = vmatprep.mubr.bf16.mxu0 0
        %751 = vmatmul.mubr.bf16.gmra.mxu0 %v406
        %v752 = vpop.f32.mrf.mxu0
        %v753 = vadd.f32 %v457, %v752
        %v754 = vpop.f32.mrf.mxu0
        %v755 = vpop.f32.mrf.mxu0
        %v756 = vadd.f32 %v457, %v755
        %v757 = vpop.f32.mrf.mxu0
        %758 = vmatprep.mubr.bf16.mxu0 0
        %759 = vmatmul.mubr.bf16.gmra.mxu0 %v407
        %v760 = vpop.f32.mrf.mxu0
        %v761 = vadd.f32 %v457, %v760
        %v762 = vpop.f32.mrf.mxu0
        %v763 = vpop.f32.mrf.mxu0
        %v764 = vadd.f32 %v457, %v763
        %v765 = vpop.f32.mrf.mxu0
        %766 = vmatprep.mubr.bf16.mxu0 0
        %767 = vmatmul.mubr.bf16.gmra.mxu0 %v408
        %v768 = vpop.f32.mrf.mxu0
        %v769 = vadd.f32 %v457, %v768
        %v770 = vpop.f32.mrf.mxu0
        %v771 = vpop.f32.mrf.mxu0
        %v772 = vadd.f32 %v457, %v771
        %v773 = vpop.f32.mrf.mxu0
        %774 = vmatprep.mubr.bf16.mxu0 0
        %775 = vmatmul.mubr.bf16.gmra.mxu0 %v409
        %v776 = vpop.f32.mrf.mxu0
        %v777 = vadd.f32 %v457, %v776
        %v778 = vpop.f32.mrf.mxu0
        %v779 = vpop.f32.mrf.mxu0
        %v780 = vadd.f32 %v457, %v779
        %v781 = vpop.f32.mrf.mxu0
        %782 = vmatprep.mubr.bf16.mxu0 0
        %783 = vmatmul.mubr.bf16.gmra.mxu0 %v410
        %v784 = vpop.f32.mrf.mxu0
        %v785 = vadd.f32 %v457, %v784
        %v786 = vpop.f32.mrf.mxu0
        %v787 = vpop.f32.mrf.mxu0
        %v788 = vadd.f32 %v457, %v787
        %v789 = vpop.f32.mrf.mxu0
        %790 = vmatprep.mubr.bf16.mxu0 0
        %791 = vmatmul.mubr.bf16.gmra.mxu0 %v411
        %v792 = vpop.f32.mrf.mxu0
        %v793 = vadd.f32 %v457, %v792
        %v794 = vpop.f32.mrf.mxu0
        %v795 = vpop.f32.mrf.mxu0
        %v796 = vadd.f32 %v457, %v795
        %v797 = vpop.f32.mrf.mxu0
        %798 = vdwg.mxu0
        %v799 = vpack.c.bf16 %v628, %v624
        %v800 = vpack.c.bf16 %v638, %v634
        %v801 = vpack.c.bf16 %v648, %v644
        %v802 = vpack.c.bf16 %v658, %v654
        %v803 = vpack.c.bf16 %v668, %v664
        %v804 = vpack.c.bf16 %v678, %v674
        %v805 = vpack.c.bf16 %v688, %v684
        %v806 = vpack.c.bf16 %v698, %v694
        %v807 = vpack.c.bf16 %v630, %v626
        %v808 = vpack.c.bf16 %v640, %v636
        %v809 = vpack.c.bf16 %v650, %v646
        %v810 = vpack.c.bf16 %v660, %v656
        %v811 = vpack.c.bf16 %v670, %v666
        %v812 = vpack.c.bf16 %v680, %v676
        %v813 = vpack.c.bf16 %v690, %v686
        %v814 = vpack.c.bf16 %v700, %v696
        %v815 = vpack.c.bf16 %v740, %v737
        %v816 = vpack.c.bf16 %v748, %v745
        %v817 = vpack.c.bf16 %v756, %v753
        %v818 = vpack.c.bf16 %v764, %v761
        %v819 = vpack.c.bf16 %v772, %v769
        %v820 = vpack.c.bf16 %v780, %v777
        %v821 = vpack.c.bf16 %v788, %v785
        %v822 = vpack.c.bf16 %v796, %v793
        %v823 = vld [vmem:[%s342] sm:$0x1]
        %v825 = vlaneseq
        %v826 = vshrl.u32 %v825, 7
        %v827 = vsub.s32 0, %v826
        %v828 = vrot.slane %v823, %v827
        %vm830 = vcmask 261120
        %v832 = vsel %vm830, %v799, 0
        %v835 = vsel %vm830, %v800, 0
        %v838 = vsel %vm830, %v801, 0
        %v841 = vsel %vm830, %v802, 0
        %v844 = vsel %vm830, %v803, 0
        %v847 = vsel %vm830, %v804, 0
        %v850 = vsel %vm830, %v805, 0
        %v853 = vsel %vm830, %v806, 0
        %v856 = vsel %vm830, %v807, 0
        %v859 = vsel %vm830, %v808, 0
        %v862 = vsel %vm830, %v809, 0
        %v865 = vsel %vm830, %v810, 0
        %v868 = vsel %vm830, %v811, 0
        %v871 = vsel %vm830, %v812, 0
        %v874 = vsel %vm830, %v813, 0
        %v877 = vsel %vm830, %v814, 0
        %879 = vmatprep.subr.bf16.mxu0 0
        %880 = vmatpush1.bf16.xpose.msra.mxu0 %v877
        %881 = vmatprep.subr.bf16.mxu0 0
        %882 = vmatpush1.bf16.xpose.msra.mxu0 %v874
        %883 = vmatprep.subr.bf16.mxu0 0
        %884 = vmatpush1.bf16.xpose.msra.mxu0 %v871
        %885 = vmatprep.subr.bf16.mxu0 0
        %886 = vmatpush1.bf16.xpose.msra.mxu0 %v868
        %887 = vmatprep.subr.bf16.mxu0 0
        %888 = vmatpush1.bf16.xpose.msra.mxu0 %v865
        %889 = vmatprep.subr.bf16.mxu0 0
        %890 = vmatpush1.bf16.xpose.msra.mxu0 %v862
        %891 = vmatprep.subr.bf16.mxu0 0
        %892 = vmatpush1.bf16.xpose.msra.mxu0 %v859
        %893 = vmatprep.subr.bf16.mxu0 0
        %894 = vmatpush1.bf16.xpose.msra.mxu0 %v856
        %895 = vmatprep.subr.bf16.mxu0 0
        %896 = vmatpush2.bf16.xpose.msra.mxu0 0
        %897 = vmatprep.subr.bf16.mxu0 0
        %898 = vmatpush2.bf16.xpose.msra.mxu0 0
        %899 = vmatprep.subr.bf16.mxu0 0
        %900 = vmatpush2.bf16.xpose.msra.mxu0 0
        %901 = vmatprep.subr.bf16.mxu0 0
        %902 = vmatpush2.bf16.xpose.msra.mxu0 0
        %903 = vmatprep.subr.bf16.mxu0 0
        %904 = vmatpush2.bf16.xpose.msra.mxu0 0
        %905 = vmatprep.subr.bf16.mxu0 0
        %906 = vmatpush2.bf16.xpose.msra.mxu0 0
        %907 = vmatprep.subr.bf16.mxu0 0
        %908 = vmatpush2.bf16.xpose.msra.mxu0 0
        %909 = vmatprep.subr.bf16.mxu0 0
        %910 = vmatpush2.bf16.xpose.msra.mxu0 0
        %911 = vmatprep.mubr.bf16.mxu0 0
        %912 = vmatmul.mubr.bf16.gmra.mxu0 %v832
        %v913 = vpop.f32.mrf.mxu0
        %v914 = vadd.f32 %v828, %v913
        %v915 = vpop.f32.mrf.mxu0
        %v916 = vpop.f32.mrf.mxu0
        %v917 = vadd.f32 %v828, %v916
        %v918 = vpop.f32.mrf.mxu0
        %919 = vmatprep.mubr.bf16.mxu0 0
        %920 = vmatmul.mubr.bf16.gmra.mxu0 %v835
        %v921 = vpop.f32.mrf.mxu0
        %v922 = vadd.f32 %v828, %v921
        %v923 = vpop.f32.mrf.mxu0
        %v924 = vpop.f32.mrf.mxu0
        %v925 = vadd.f32 %v828, %v924
        %v926 = vpop.f32.mrf.mxu0
        %927 = vmatprep.mubr.bf16.mxu0 0
        %928 = vmatmul.mubr.bf16.gmra.mxu0 %v838
        %v929 = vpop.f32.mrf.mxu0
        %v930 = vadd.f32 %v828, %v929
        %v931 = vpop.f32.mrf.mxu0
        %v932 = vpop.f32.mrf.mxu0
        %v933 = vadd.f32 %v828, %v932
        %v934 = vpop.f32.mrf.mxu0
        %935 = vmatprep.mubr.bf16.mxu0 0
        %936 = vmatmul.mubr.bf16.gmra.mxu0 %v841
        %v937 = vpop.f32.mrf.mxu0
        %v938 = vadd.f32 %v828, %v937
        %v939 = vpop.f32.mrf.mxu0
        %v940 = vpop.f32.mrf.mxu0
        %v941 = vadd.f32 %v828, %v940
        %v942 = vpop.f32.mrf.mxu0
        %943 = vmatprep.mubr.bf16.mxu0 0
        %944 = vmatmul.mubr.bf16.gmra.mxu0 %v844
        %v945 = vpop.f32.mrf.mxu0
        %v946 = vadd.f32 %v828, %v945
        %v947 = vpop.f32.mrf.mxu0
        %v948 = vpop.f32.mrf.mxu0
        %v949 = vadd.f32 %v828, %v948
        %v950 = vpop.f32.mrf.mxu0
        %951 = vmatprep.mubr.bf16.mxu0 0
        %952 = vmatmul.mubr.bf16.gmra.mxu0 %v847
        %v953 = vpop.f32.mrf.mxu0
        %v954 = vadd.f32 %v828, %v953
        %v955 = vpop.f32.mrf.mxu0
        %v956 = vpop.f32.mrf.mxu0
        %v957 = vadd.f32 %v828, %v956
        %v958 = vpop.f32.mrf.mxu0
        %959 = vmatprep.mubr.bf16.mxu0 0
        %960 = vmatmul.mubr.bf16.gmra.mxu0 %v850
        %v961 = vpop.f32.mrf.mxu0
        %v962 = vadd.f32 %v828, %v961
        %v963 = vpop.f32.mrf.mxu0
        %v964 = vpop.f32.mrf.mxu0
        %v965 = vadd.f32 %v828, %v964
        %v966 = vpop.f32.mrf.mxu0
        %967 = vmatprep.mubr.bf16.mxu0 0
        %968 = vmatmul.mubr.bf16.gmra.mxu0 %v853
        %v969 = vpop.f32.mrf.mxu0
        %v970 = vadd.f32 %v828, %v969
        %v971 = vpop.f32.mrf.mxu0
        %v972 = vpop.f32.mrf.mxu0
        %v973 = vadd.f32 %v828, %v972
        %v974 = vpop.f32.mrf.mxu0
        %975 = vdwg.mxu0
        %976 = vmax.xlane.f32.xlu0 %v914
        %v977 = vpop.xlane.xlu0 %976
        %978 = vmax.xlane.f32.xlu0 %v917
        %v979 = vpop.xlane.xlu0 %978
        %980 = vmax.xlane.f32.xlu0 %v922
        %v981 = vpop.xlane.xlu0 %980
        %982 = vmax.xlane.f32.xlu0 %v925
        %v983 = vpop.xlane.xlu0 %982
        %984 = vmax.xlane.f32.xlu0 %v930
        %v985 = vpop.xlane.xlu0 %984
        %986 = vmax.xlane.f32.xlu0 %v933
        %v987 = vpop.xlane.xlu0 %986
        %988 = vmax.xlane.f32.xlu0 %v938
        %v989 = vpop.xlane.xlu0 %988
        %990 = vmax.xlane.f32.xlu0 %v941
        %v991 = vpop.xlane.xlu0 %990
        %992 = vmax.xlane.f32.xlu0 %v946
        %v993 = vpop.xlane.xlu0 %992
        %994 = vmax.xlane.f32.xlu0 %v949
        %v995 = vpop.xlane.xlu0 %994
        %996 = vmax.xlane.f32.xlu0 %v954
        %v997 = vpop.xlane.xlu0 %996
        %998 = vmax.xlane.f32.xlu0 %v957
        %v999 = vpop.xlane.xlu0 %998
        %1000 = vmax.xlane.f32.xlu0 %v962
        %v1001 = vpop.xlane.xlu0 %1000
        %1002 = vmax.xlane.f32.xlu0 %v965
        %v1003 = vpop.xlane.xlu0 %1002
        %1004 = vmax.xlane.f32.xlu0 %v970
        %v1005 = vpop.xlane.xlu0 %1004
        %1006 = vmax.xlane.f32.xlu0 %v973
        %v1007 = vpop.xlane.xlu0 %1006
        %v1008 = vsub.f32 %v914, %v977
        %v1009 = vsub.f32 %v917, %v979
        %v1010 = vsub.f32 %v922, %v981
        %v1011 = vsub.f32 %v925, %v983
        %v1012 = vsub.f32 %v930, %v985
        %v1013 = vsub.f32 %v933, %v987
        %v1014 = vsub.f32 %v938, %v989
        %v1015 = vsub.f32 %v941, %v991
        %v1016 = vsub.f32 %v946, %v993
        %v1017 = vsub.f32 %v949, %v995
        %v1018 = vsub.f32 %v954, %v997
        %v1019 = vsub.f32 %v957, %v999
        %v1020 = vsub.f32 %v962, %v1001
        %v1021 = vsub.f32 %v965, %v1003
        %v1022 = vsub.f32 %v970, %v1005
        %v1023 = vsub.f32 %v973, %v1007
        %v1024 = vmul.f32 %v1008, 1.442695
        %v1025 = vpow.pop %v1024
        %v1026 = vmul.f32 %v1009, 1.442695
        %v1027 = vpow.pop %v1026
        %v1028 = vmul.f32 %v1010, 1.442695
        %v1029 = vpow.pop %v1028
        %v1030 = vmul.f32 %v1011, 1.442695
        %v1031 = vpow.pop %v1030
        %v1032 = vmul.f32 %v1012, 1.442695
        %v1033 = vpow.pop %v1032
        %v1034 = vmul.f32 %v1013, 1.442695
        %v1035 = vpow.pop %v1034
        %v1036 = vmul.f32 %v1014, 1.442695
        %v1037 = vpow.pop %v1036
        %v1038 = vmul.f32 %v1015, 1.442695
        %v1039 = vpow.pop %v1038
        %v1040 = vmul.f32 %v1016, 1.442695
        %v1041 = vpow.pop %v1040
        %v1042 = vmul.f32 %v1017, 1.442695
        %v1043 = vpow.pop %v1042
        %v1044 = vmul.f32 %v1018, 1.442695
        %v1045 = vpow.pop %v1044
        %v1046 = vmul.f32 %v1019, 1.442695
        %v1047 = vpow.pop %v1046
        %v1048 = vmul.f32 %v1020, 1.442695
        %v1049 = vpow.pop %v1048
        %v1050 = vmul.f32 %v1021, 1.442695
        %v1051 = vpow.pop %v1050
        %v1052 = vmul.f32 %v1022, 1.442695
        %v1053 = vpow.pop %v1052
        %v1054 = vmul.f32 %v1023, 1.442695
        %v1055 = vpow.pop %v1054
        %1056 = vadd.xlane.f32.xlu0 %v1025
        %v1057 = vpop.xlane.xlu0 %1056
        %1058 = vadd.xlane.f32.xlu0 %v1027
        %v1059 = vpop.xlane.xlu0 %1058
        %1060 = vadd.xlane.f32.xlu0 %v1029
        %v1061 = vpop.xlane.xlu0 %1060
        %1062 = vadd.xlane.f32.xlu0 %v1031
        %v1063 = vpop.xlane.xlu0 %1062
        %1064 = vadd.xlane.f32.xlu0 %v1033
        %v1065 = vpop.xlane.xlu0 %1064
        %1066 = vadd.xlane.f32.xlu0 %v1035
        %v1067 = vpop.xlane.xlu0 %1066
        %1068 = vadd.xlane.f32.xlu0 %v1037
        %v1069 = vpop.xlane.xlu0 %1068
        %1070 = vadd.xlane.f32.xlu0 %v1039
        %v1071 = vpop.xlane.xlu0 %1070
        %1072 = vadd.xlane.f32.xlu0 %v1041
        %v1073 = vpop.xlane.xlu0 %1072
        %1074 = vadd.xlane.f32.xlu0 %v1043
        %v1075 = vpop.xlane.xlu0 %1074
        %1076 = vadd.xlane.f32.xlu0 %v1045
        %v1077 = vpop.xlane.xlu0 %1076
        %1078 = vadd.xlane.f32.xlu0 %v1047
        %v1079 = vpop.xlane.xlu0 %1078
        %1080 = vadd.xlane.f32.xlu0 %v1049
        %v1081 = vpop.xlane.xlu0 %1080
        %1082 = vadd.xlane.f32.xlu0 %v1051
        %v1083 = vpop.xlane.xlu0 %1082
        %1084 = vadd.xlane.f32.xlu0 %v1053
        %v1085 = vpop.xlane.xlu0 %1084
        %1086 = vadd.xlane.f32.xlu0 %v1055
        %v1087 = vpop.xlane.xlu0 %1086
        %v1088 = vrcp.pop %v1057
        %v1089 = vrcp.pop %v1059
        %v1090 = vrcp.pop %v1061
        %v1091 = vrcp.pop %v1063
        %v1092 = vrcp.pop %v1065
        %v1093 = vrcp.pop %v1067
        %v1094 = vrcp.pop %v1069
        %v1095 = vrcp.pop %v1071
        %v1096 = vrcp.pop %v1073
        %v1097 = vrcp.pop %v1075
        %v1098 = vrcp.pop %v1077
        %v1099 = vrcp.pop %v1079
        %v1100 = vrcp.pop %v1081
        %v1101 = vrcp.pop %v1083
        %v1102 = vrcp.pop %v1085
        %v1103 = vrcp.pop %v1087
        %v1104 = vmul.f32 %v1025, %v1088
        %v1105 = vmul.f32 %v1027, %v1089
        %v1106 = vmul.f32 %v1029, %v1090
        %v1107 = vmul.f32 %v1031, %v1091
        %v1108 = vmul.f32 %v1033, %v1092
        %v1109 = vmul.f32 %v1035, %v1093
        %v1110 = vmul.f32 %v1037, %v1094
        %v1111 = vmul.f32 %v1039, %v1095
        %v1112 = vmul.f32 %v1041, %v1096
        %v1113 = vmul.f32 %v1043, %v1097
        %v1114 = vmul.f32 %v1045, %v1098
        %v1115 = vmul.f32 %v1047, %v1099
        %v1116 = vmul.f32 %v1049, %v1100
        %v1117 = vmul.f32 %v1051, %v1101
        %v1118 = vmul.f32 %v1053, %v1102
        %v1119 = vmul.f32 %v1055, %v1103
        %v1120 = vpack.c.bf16 %v1105, %v1104
        %v1121 = vpack.c.bf16 %v1107, %v1106
        %v1122 = vpack.c.bf16 %v1109, %v1108
        %v1123 = vpack.c.bf16 %v1111, %v1110
        %v1124 = vpack.c.bf16 %v1113, %v1112
        %v1125 = vpack.c.bf16 %v1115, %v1114
        %v1126 = vpack.c.bf16 %v1117, %v1116
        %v1127 = vpack.c.bf16 %v1119, %v1118
        %1128 = vmatprep.subr.bf16.mxu0 0
        %1129 = vmatpush1.bf16.msra.mxu0 %v822
        %1130 = vmatprep.subr.bf16.mxu0 0
        %1131 = vmatpush1.bf16.msra.mxu0 %v821
        %1132 = vmatprep.subr.bf16.mxu0 0
        %1133 = vmatpush1.bf16.msra.mxu0 %v820
        %1134 = vmatprep.subr.bf16.mxu0 0
        %1135 = vmatpush1.bf16.msra.mxu0 %v819
        %1136 = vmatprep.subr.bf16.mxu0 0
        %1137 = vmatpush1.bf16.msra.mxu0 %v818
        %1138 = vmatprep.subr.bf16.mxu0 0
        %1139 = vmatpush1.bf16.msra.mxu0 %v817
        %1140 = vmatprep.subr.bf16.mxu0 0
        %1141 = vmatpush1.bf16.msra.mxu0 %v816
        %1142 = vmatprep.subr.bf16.mxu0 0
        %1143 = vmatpush1.bf16.msra.mxu0 %v815
        %1144 = vmatprep.subr.bf16.mxu0 0
        %1145 = vmatpush2.bf16.msra.mxu0 0
        %1146 = vmatprep.subr.bf16.mxu0 0
        %1147 = vmatpush2.bf16.msra.mxu0 0
        %1148 = vmatprep.subr.bf16.mxu0 0
        %1149 = vmatpush2.bf16.msra.mxu0 0
        %1150 = vmatprep.subr.bf16.mxu0 0
        %1151 = vmatpush2.bf16.msra.mxu0 0
        %1152 = vmatprep.subr.bf16.mxu0 0
        %1153 = vmatpush2.bf16.msra.mxu0 0
        %1154 = vmatprep.subr.bf16.mxu0 0
        %1155 = vmatpush2.bf16.msra.mxu0 0
        %1156 = vmatprep.subr.bf16.mxu0 0
        %1157 = vmatpush2.bf16.msra.mxu0 0
        %1158 = vmatprep.subr.bf16.mxu0 0
        %1159 = vmatpush2.bf16.msra.mxu0 0
        %1160 = vmatprep.mubr.bf16.mxu0 0
        %1161 = vmatmul.mubr.bf16.gmra.mxu0 %v1120
        %v1162 = vpop.f32.mrf.mxu0
        %v1163 = vadd.f32 0.0, %v1162
        %v1164 = vpop.f32.mrf.mxu0
        %v1165 = vpop.f32.mrf.mxu0
        %v1166 = vadd.f32 0.0, %v1165
        %v1167 = vpop.f32.mrf.mxu0
        %1168 = vmatprep.mubr.bf16.mxu0 0
        %1169 = vmatmul.mubr.bf16.gmra.mxu0 %v1121
        %v1170 = vpop.f32.mrf.mxu0
        %v1171 = vadd.f32 0.0, %v1170
        %v1172 = vpop.f32.mrf.mxu0
        %v1173 = vpop.f32.mrf.mxu0
        %v1174 = vadd.f32 0.0, %v1173
        %v1175 = vpop.f32.mrf.mxu0
        %1176 = vmatprep.mubr.bf16.mxu0 0
        %1177 = vmatmul.mubr.bf16.gmra.mxu0 %v1122
        %v1178 = vpop.f32.mrf.mxu0
        %v1179 = vadd.f32 0.0, %v1178
        %v1180 = vpop.f32.mrf.mxu0
        %v1181 = vpop.f32.mrf.mxu0
        %v1182 = vadd.f32 0.0, %v1181
        %v1183 = vpop.f32.mrf.mxu0
        %1184 = vmatprep.mubr.bf16.mxu0 0
        %1185 = vmatmul.mubr.bf16.gmra.mxu0 %v1123
        %v1186 = vpop.f32.mrf.mxu0
        %v1187 = vadd.f32 0.0, %v1186
        %v1188 = vpop.f32.mrf.mxu0
        %v1189 = vpop.f32.mrf.mxu0
        %v1190 = vadd.f32 0.0, %v1189
        %v1191 = vpop.f32.mrf.mxu0
        %1192 = vmatprep.mubr.bf16.mxu0 0
        %1193 = vmatmul.mubr.bf16.gmra.mxu0 %v1124
        %v1194 = vpop.f32.mrf.mxu0
        %v1195 = vadd.f32 0.0, %v1194
        %v1196 = vpop.f32.mrf.mxu0
        %v1197 = vpop.f32.mrf.mxu0
        %v1198 = vadd.f32 0.0, %v1197
        %v1199 = vpop.f32.mrf.mxu0
        %1200 = vmatprep.mubr.bf16.mxu0 0
        %1201 = vmatmul.mubr.bf16.gmra.mxu0 %v1125
        %v1202 = vpop.f32.mrf.mxu0
        %v1203 = vadd.f32 0.0, %v1202
        %v1204 = vpop.f32.mrf.mxu0
        %v1205 = vpop.f32.mrf.mxu0
        %v1206 = vadd.f32 0.0, %v1205
        %v1207 = vpop.f32.mrf.mxu0
        %1208 = vmatprep.mubr.bf16.mxu0 0
        %1209 = vmatmul.mubr.bf16.gmra.mxu0 %v1126
        %v1210 = vpop.f32.mrf.mxu0
        %v1211 = vadd.f32 0.0, %v1210
        %v1212 = vpop.f32.mrf.mxu0
        %v1213 = vpop.f32.mrf.mxu0
        %v1214 = vadd.f32 0.0, %v1213
        %v1215 = vpop.f32.mrf.mxu0
        %1216 = vmatprep.mubr.bf16.mxu0 0
        %1217 = vmatmul.mubr.bf16.gmra.mxu0 %v1127
        %v1218 = vpop.f32.mrf.mxu0
        %v1219 = vadd.f32 0.0, %v1218
        %v1220 = vpop.f32.mrf.mxu0
        %v1221 = vpop.f32.mrf.mxu0
        %v1222 = vadd.f32 0.0, %v1221
        %v1223 = vpop.f32.mrf.mxu0
        %1224 = vdwg.mxu0
        %v1225 = vpack.c.bf16 %v1166, %v1163
        %v1226 = vpack.c.bf16 %v1174, %v1171
        %v1227 = vpack.c.bf16 %v1182, %v1179
        %v1228 = vpack.c.bf16 %v1190, %v1187
        %v1229 = vpack.c.bf16 %v1198, %v1195
        %v1230 = vpack.c.bf16 %v1206, %v1203
        %v1231 = vpack.c.bf16 %v1214, %v1211
        %v1232 = vpack.c.bf16 %v1222, %v1219
        %v1241 = vunpack.c.l.b16 %v1225
        %v1242 = vunpack.c.h.b16 %v1225
        %v1243 = vunpack.c.l.b16 %v1226
        %v1244 = vunpack.c.h.b16 %v1226
        %v1245 = vunpack.c.l.b16 %v1227
        %v1246 = vunpack.c.h.b16 %v1227
        %v1247 = vunpack.c.l.b16 %v1228
        %v1248 = vunpack.c.h.b16 %v1228
        %v1249 = vunpack.c.l.b16 %v1229
        %v1250 = vunpack.c.h.b16 %v1229
        %v1251 = vunpack.c.l.b16 %v1230
        %v1252 = vunpack.c.h.b16 %v1230
        %v1253 = vunpack.c.l.b16 %v1231
        %v1254 = vunpack.c.h.b16 %v1231
        %v1255 = vunpack.c.l.b16 %v1232
        %v1256 = vunpack.c.h.b16 %v1232
        %v1257 = vpack.c.b16 %v1241, %v1241
        %v1258 = vpack.c.b16 %v1242, %v1242
        %v1259 = vpack.c.b16 %v1243, %v1243
        %v1260 = vpack.c.b16 %v1244, %v1244
        %v1261 = vpack.c.b16 %v1245, %v1245
        %v1262 = vpack.c.b16 %v1246, %v1246
        %v1263 = vpack.c.b16 %v1247, %v1247
        %v1264 = vpack.c.b16 %v1248, %v1248
        %v1265 = vpack.c.b16 %v1249, %v1249
        %v1266 = vpack.c.b16 %v1250, %v1250
        %v1267 = vpack.c.b16 %v1251, %v1251
        %v1268 = vpack.c.b16 %v1252, %v1252
        %v1269 = vpack.c.b16 %v1253, %v1253
        %v1270 = vpack.c.b16 %v1254, %v1254
        %v1271 = vpack.c.b16 %v1255, %v1255
        %v1272 = vpack.c.b16 %v1256, %v1256
        %vm1289 = vcmask 257024
        %1290 = vst.msk [vmem:[#allocation2] sm:$0xf] %vm1289, %v1257
        %1291 = vst.msk [vmem:[#allocation2 + $0x4] sm:$0xf] %vm1289, %v1258
        %1292 = vst.msk [vmem:[#allocation2 + $0x8] sm:$0xf] %vm1289, %v1259
        %1293 = vst.msk [vmem:[#allocation2 + $0xc] sm:$0xf] %vm1289, %v1260
        %1294 = vst.msk [vmem:[#allocation2 + $0x10] sm:$0xf] %vm1289, %v1261
        %1295 = vst.msk [vmem:[#allocation2 + $0x14] sm:$0xf] %vm1289, %v1262
        %1296 = vst.msk [vmem:[#allocation2 + $0x18] sm:$0xf] %vm1289, %v1263
        %1297 = vst.msk [vmem:[#allocation2 + $0x1c] sm:$0xf] %vm1289, %v1264
        %1298 = vst.msk [vmem:[#allocation2 + $0x20] sm:$0xf] %vm1289, %v1265
        %1299 = vst.msk [vmem:[#allocation2 + $0x24] sm:$0xf] %vm1289, %v1266
        %1300 = vst.msk [vmem:[#allocation2 + $0x28] sm:$0xf] %vm1289, %v1267
        %1301 = vst.msk [vmem:[#allocation2 + $0x2c] sm:$0xf] %vm1289, %v1268
        %1302 = vst.msk [vmem:[#allocation2 + $0x30] sm:$0xf] %vm1289, %v1269
        %1303 = vst.msk [vmem:[#allocation2 + $0x34] sm:$0xf] %vm1289, %v1270
        %1304 = vst.msk [vmem:[#allocation2 + $0x38] sm:$0xf] %vm1289, %v1271
        %1305 = vst.msk [vmem:[#allocation2 + $0x3c] sm:$0xf] %vm1289, %v1272
        %1314 = vrot.lane.b32.xlu0 %v799, 96
        %v1315 = vpop.permute.xlu0 %1314
        %1316 = vrot.lane.b32.xlu0 %v800, 96
        %v1317 = vpop.permute.xlu0 %1316
        %1318 = vrot.lane.b32.xlu0 %v801, 96
        %v1319 = vpop.permute.xlu0 %1318
        %1320 = vrot.lane.b32.xlu0 %v802, 96
        %v1321 = vpop.permute.xlu0 %1320
        %1322 = vrot.lane.b32.xlu0 %v803, 96
        %v1323 = vpop.permute.xlu0 %1322
        %1324 = vrot.lane.b32.xlu0 %v804, 96
        %v1325 = vpop.permute.xlu0 %1324
        %1326 = vrot.lane.b32.xlu0 %v805, 96
        %v1327 = vpop.permute.xlu0 %1326
        %1328 = vrot.lane.b32.xlu0 %v806, 96
        %v1329 = vpop.permute.xlu0 %1328
        %1338 = vrot.lane.b32.xlu0 %v807, 96
        %v1339 = vpop.permute.xlu0 %1338
        %1340 = vrot.lane.b32.xlu0 %v808, 96
        %v1341 = vpop.permute.xlu0 %1340
        %1342 = vrot.lane.b32.xlu0 %v809, 96
        %v1343 = vpop.permute.xlu0 %1342
        %1344 = vrot.lane.b32.xlu0 %v810, 96
        %v1345 = vpop.permute.xlu0 %1344
        %1346 = vrot.lane.b32.xlu0 %v811, 96
        %v1347 = vpop.permute.xlu0 %1346
        %1348 = vrot.lane.b32.xlu0 %v812, 96
        %v1349 = vpop.permute.xlu0 %1348
        %1350 = vrot.lane.b32.xlu0 %v813, 96
        %v1351 = vpop.permute.xlu0 %1350
        %1352 = vrot.lane.b32.xlu0 %v814, 96
        %v1353 = vpop.permute.xlu0 %1352
        %v1355 = vsel %vm830, %v1315, 0
        %v1358 = vsel %vm830, %v1317, 0
        %v1361 = vsel %vm830, %v1319, 0
        %v1364 = vsel %vm830, %v1321, 0
        %v1367 = vsel %vm830, %v1323, 0
        %v1370 = vsel %vm830, %v1325, 0
        %v1373 = vsel %vm830, %v1327, 0
        %v1376 = vsel %vm830, %v1329, 0
        %v1379 = vsel %vm830, %v1339, 0
        %v1382 = vsel %vm830, %v1341, 0
        %v1385 = vsel %vm830, %v1343, 0
        %v1388 = vsel %vm830, %v1345, 0
        %v1391 = vsel %vm830, %v1347, 0
        %v1394 = vsel %vm830, %v1349, 0
        %v1397 = vsel %vm830, %v1351, 0
        %v1400 = vsel %vm830, %v1353, 0
        %1402 = vmatprep.subr.bf16.mxu0 0
        %1403 = vmatpush1.bf16.xpose.msra.mxu0 %v1400
        %1404 = vmatprep.subr.bf16.mxu0 0
        %1405 = vmatpush1.bf16.xpose.msra.mxu0 %v1397
        %1406 = vmatprep.subr.bf16.mxu0 0
        %1407 = vmatpush1.bf16.xpose.msra.mxu0 %v1394
        %1408 = vmatprep.subr.bf16.mxu0 0
        %1409 = vmatpush1.bf16.xpose.msra.mxu0 %v1391
        %1410 = vmatprep.subr.bf16.mxu0 0
        %1411 = vmatpush1.bf16.xpose.msra.mxu0 %v1388
        %1412 = vmatprep.subr.bf16.mxu0 0
        %1413 = vmatpush1.bf16.xpose.msra.mxu0 %v1385
        %1414 = vmatprep.subr.bf16.mxu0 0
        %1415 = vmatpush1.bf16.xpose.msra.mxu0 %v1382
        %1416 = vmatprep.subr.bf16.mxu0 0
        %1417 = vmatpush1.bf16.xpose.msra.mxu0 %v1379
        %1418 = vmatprep.subr.bf16.mxu0 0
        %1419 = vmatpush2.bf16.xpose.msra.mxu0 0
        %1420 = vmatprep.subr.bf16.mxu0 0
        %1421 = vmatpush2.bf16.xpose.msra.mxu0 0
        %1422 = vmatprep.subr.bf16.mxu0 0
        %1423 = vmatpush2.bf16.xpose.msra.mxu0 0
        %1424 = vmatprep.subr.bf16.mxu0 0
        %1425 = vmatpush2.bf16.xpose.msra.mxu0 0
        %1426 = vmatprep.subr.bf16.mxu0 0
        %1427 = vmatpush2.bf16.xpose.msra.mxu0 0
        %1428 = vmatprep.subr.bf16.mxu0 0
        %1429 = vmatpush2.bf16.xpose.msra.mxu0 0
        %1430 = vmatprep.subr.bf16.mxu0 0
        %1431 = vmatpush2.bf16.xpose.msra.mxu0 0
        %1432 = vmatprep.subr.bf16.mxu0 0
        %1433 = vmatpush2.bf16.xpose.msra.mxu0 0
        %1434 = vmatprep.mubr.bf16.mxu0 0
        %1435 = vmatmul.mubr.bf16.gmra.mxu0 %v1355
        %v1436 = vpop.f32.mrf.mxu0
        %v1437 = vadd.f32 %v828, %v1436
        %v1438 = vpop.f32.mrf.mxu0
        %v1439 = vpop.f32.mrf.mxu0
        %v1440 = vadd.f32 %v828, %v1439
        %v1441 = vpop.f32.mrf.mxu0
        %1442 = vmatprep.mubr.bf16.mxu0 0
        %1443 = vmatmul.mubr.bf16.gmra.mxu0 %v1358
        %v1444 = vpop.f32.mrf.mxu0
        %v1445 = vadd.f32 %v828, %v1444
        %v1446 = vpop.f32.mrf.mxu0
        %v1447 = vpop.f32.mrf.mxu0
        %v1448 = vadd.f32 %v828, %v1447
        %v1449 = vpop.f32.mrf.mxu0
        %1450 = vmatprep.mubr.bf16.mxu0 0
        %1451 = vmatmul.mubr.bf16.gmra.mxu0 %v1361
        %v1452 = vpop.f32.mrf.mxu0
        %v1453 = vadd.f32 %v828, %v1452
        %v1454 = vpop.f32.mrf.mxu0
        %v1455 = vpop.f32.mrf.mxu0
        %v1456 = vadd.f32 %v828, %v1455
        %v1457 = vpop.f32.mrf.mxu0
        %1458 = vmatprep.mubr.bf16.mxu0 0
        %1459 = vmatmul.mubr.bf16.gmra.mxu0 %v1364
        %v1460 = vpop.f32.mrf.mxu0
        %v1461 = vadd.f32 %v828, %v1460
        %v1462 = vpop.f32.mrf.mxu0
        %v1463 = vpop.f32.mrf.mxu0
        %v1464 = vadd.f32 %v828, %v1463
        %v1465 = vpop.f32.mrf.mxu0
        %1466 = vmatprep.mubr.bf16.mxu0 0
        %1467 = vmatmul.mubr.bf16.gmra.mxu0 %v1367
        %v1468 = vpop.f32.mrf.mxu0
        %v1469 = vadd.f32 %v828, %v1468
        %v1470 = vpop.f32.mrf.mxu0
        %v1471 = vpop.f32.mrf.mxu0
        %v1472 = vadd.f32 %v828, %v1471
        %v1473 = vpop.f32.mrf.mxu0
        %1474 = vmatprep.mubr.bf16.mxu0 0
        %1475 = vmatmul.mubr.bf16.gmra.mxu0 %v1370
        %v1476 = vpop.f32.mrf.mxu0
        %v1477 = vadd.f32 %v828, %v1476
        %v1478 = vpop.f32.mrf.mxu0
        %v1479 = vpop.f32.mrf.mxu0
        %v1480 = vadd.f32 %v828, %v1479
        %v1481 = vpop.f32.mrf.mxu0
        %1482 = vmatprep.mubr.bf16.mxu0 0
        %1483 = vmatmul.mubr.bf16.gmra.mxu0 %v1373
        %v1484 = vpop.f32.mrf.mxu0
        %v1485 = vadd.f32 %v828, %v1484
        %v1486 = vpop.f32.mrf.mxu0
        %v1487 = vpop.f32.mrf.mxu0
        %v1488 = vadd.f32 %v828, %v1487
        %v1489 = vpop.f32.mrf.mxu0
        %1490 = vmatprep.mubr.bf16.mxu0 0
        %1491 = vmatmul.mubr.bf16.gmra.mxu0 %v1376
        %v1492 = vpop.f32.mrf.mxu0
        %v1493 = vadd.f32 %v828, %v1492
        %v1494 = vpop.f32.mrf.mxu0
        %v1495 = vpop.f32.mrf.mxu0
        %v1496 = vadd.f32 %v828, %v1495
        %v1497 = vpop.f32.mrf.mxu0
        %1498 = vdwg.mxu0
        %1499 = vmax.xlane.f32.xlu0 %v1437
        %v1500 = vpop.xlane.xlu0 %1499
        %1501 = vmax.xlane.f32.xlu0 %v1440
        %v1502 = vpop.xlane.xlu0 %1501
        %1503 = vmax.xlane.f32.xlu0 %v1445
        %v1504 = vpop.xlane.xlu0 %1503
        %1505 = vmax.xlane.f32.xlu0 %v1448
        %v1506 = vpop.xlane.xlu0 %1505
        %1507 = vmax.xlane.f32.xlu0 %v1453
        %v1508 = vpop.xlane.xlu0 %1507
        %1509 = vmax.xlane.f32.xlu0 %v1456
        %v1510 = vpop.xlane.xlu0 %1509
        %1511 = vmax.xlane.f32.xlu0 %v1461
        %v1512 = vpop.xlane.xlu0 %1511
        %1513 = vmax.xlane.f32.xlu0 %v1464
        %v1514 = vpop.xlane.xlu0 %1513
        %1515 = vmax.xlane.f32.xlu0 %v1469
        %v1516 = vpop.xlane.xlu0 %1515
        %1517 = vmax.xlane.f32.xlu0 %v1472
        %v1518 = vpop.xlane.xlu0 %1517
        %1519 = vmax.xlane.f32.xlu0 %v1477
        %v1520 = vpop.xlane.xlu0 %1519
        %1521 = vmax.xlane.f32.xlu0 %v1480
        %v1522 = vpop.xlane.xlu0 %1521
        %1523 = vmax.xlane.f32.xlu0 %v1485
        %v1524 = vpop.xlane.xlu0 %1523
        %1525 = vmax.xlane.f32.xlu0 %v1488
        %v1526 = vpop.xlane.xlu0 %1525
        %1527 = vmax.xlane.f32.xlu0 %v1493
        %v1528 = vpop.xlane.xlu0 %1527
        %1529 = vmax.xlane.f32.xlu0 %v1496
        %v1530 = vpop.xlane.xlu0 %1529
        %v1531 = vsub.f32 %v1437, %v1500
        %v1532 = vsub.f32 %v1440, %v1502
        %v1533 = vsub.f32 %v1445, %v1504
        %v1534 = vsub.f32 %v1448, %v1506
        %v1535 = vsub.f32 %v1453, %v1508
        %v1536 = vsub.f32 %v1456, %v1510
        %v1537 = vsub.f32 %v1461, %v1512
        %v1538 = vsub.f32 %v1464, %v1514
        %v1539 = vsub.f32 %v1469, %v1516
        %v1540 = vsub.f32 %v1472, %v1518
        %v1541 = vsub.f32 %v1477, %v1520
        %v1542 = vsub.f32 %v1480, %v1522
        %v1543 = vsub.f32 %v1485, %v1524
        %v1544 = vsub.f32 %v1488, %v1526
        %v1545 = vsub.f32 %v1493, %v1528
        %v1546 = vsub.f32 %v1496, %v1530
        %v1547 = vmul.f32 %v1531, 1.442695
        %v1548 = vpow.pop %v1547
        %v1549 = vmul.f32 %v1532, 1.442695
        %v1550 = vpow.pop %v1549
        %v1551 = vmul.f32 %v1533, 1.442695
        %v1552 = vpow.pop %v1551
        %v1553 = vmul.f32 %v1534, 1.442695
        %v1554 = vpow.pop %v1553
        %v1555 = vmul.f32 %v1535, 1.442695
        %v1556 = vpow.pop %v1555
        %v1557 = vmul.f32 %v1536, 1.442695
        %v1558 = vpow.pop %v1557
        %v1559 = vmul.f32 %v1537, 1.442695
        %v1560 = vpow.pop %v1559
        %v1561 = vmul.f32 %v1538, 1.442695
        %v1562 = vpow.pop %v1561
        %v1563 = vmul.f32 %v1539, 1.442695
        %v1564 = vpow.pop %v1563
        %v1565 = vmul.f32 %v1540, 1.442695
        %v1566 = vpow.pop %v1565
        %v1567 = vmul.f32 %v1541, 1.442695
        %v1568 = vpow.pop %v1567
        %v1569 = vmul.f32 %v1542, 1.442695
        %v1570 = vpow.pop %v1569
        %v1571 = vmul.f32 %v1543, 1.442695
        %v1572 = vpow.pop %v1571
        %v1573 = vmul.f32 %v1544, 1.442695
        %v1574 = vpow.pop %v1573
        %v1575 = vmul.f32 %v1545, 1.442695
        %v1576 = vpow.pop %v1575
        %v1577 = vmul.f32 %v1546, 1.442695
        %v1578 = vpow.pop %v1577
        %1579 = vadd.xlane.f32.xlu0 %v1548
        %v1580 = vpop.xlane.xlu0 %1579
        %1581 = vadd.xlane.f32.xlu0 %v1550
        %v1582 = vpop.xlane.xlu0 %1581
        %1583 = vadd.xlane.f32.xlu0 %v1552
        %v1584 = vpop.xlane.xlu0 %1583
        %1585 = vadd.xlane.f32.xlu0 %v1554
        %v1586 = vpop.xlane.xlu0 %1585
        %1587 = vadd.xlane.f32.xlu0 %v1556
        %v1588 = vpop.xlane.xlu0 %1587
        %1589 = vadd.xlane.f32.xlu0 %v1558
        %v1590 = vpop.xlane.xlu0 %1589
        %1591 = vadd.xlane.f32.xlu0 %v1560
        %v1592 = vpop.xlane.xlu0 %1591
        %1593 = vadd.xlane.f32.xlu0 %v1562
        %v1594 = vpop.xlane.xlu0 %1593
        %1595 = vadd.xlane.f32.xlu0 %v1564
        %v1596 = vpop.xlane.xlu0 %1595
        %1597 = vadd.xlane.f32.xlu0 %v1566
        %v1598 = vpop.xlane.xlu0 %1597
        %1599 = vadd.xlane.f32.xlu0 %v1568
        %v1600 = vpop.xlane.xlu0 %1599
        %1601 = vadd.xlane.f32.xlu0 %v1570
        %v1602 = vpop.xlane.xlu0 %1601
        %1603 = vadd.xlane.f32.xlu0 %v1572
        %v1604 = vpop.xlane.xlu0 %1603
        %1605 = vadd.xlane.f32.xlu0 %v1574
        %v1606 = vpop.xlane.xlu0 %1605
        %1607 = vadd.xlane.f32.xlu0 %v1576
        %v1608 = vpop.xlane.xlu0 %1607
        %1609 = vadd.xlane.f32.xlu0 %v1578
        %v1610 = vpop.xlane.xlu0 %1609
        %v1611 = vrcp.pop %v1580
        %v1612 = vrcp.pop %v1582
        %v1613 = vrcp.pop %v1584
        %v1614 = vrcp.pop %v1586
        %v1615 = vrcp.pop %v1588
        %v1616 = vrcp.pop %v1590
        %v1617 = vrcp.pop %v1592
        %v1618 = vrcp.pop %v1594
        %v1619 = vrcp.pop %v1596
        %v1620 = vrcp.pop %v1598
        %v1621 = vrcp.pop %v1600
        %v1622 = vrcp.pop %v1602
        %v1623 = vrcp.pop %v1604
        %v1624 = vrcp.pop %v1606
        %v1625 = vrcp.pop %v1608
        %v1626 = vrcp.pop %v1610
        %v1627 = vmul.f32 %v1548, %v1611
        %v1628 = vmul.f32 %v1550, %v1612
        %v1629 = vmul.f32 %v1552, %v1613
        %v1630 = vmul.f32 %v1554, %v1614
        %v1631 = vmul.f32 %v1556, %v1615
        %v1632 = vmul.f32 %v1558, %v1616
        %v1633 = vmul.f32 %v1560, %v1617
        %v1634 = vmul.f32 %v1562, %v1618
        %v1635 = vmul.f32 %v1564, %v1619
        %v1636 = vmul.f32 %v1566, %v1620
        %v1637 = vmul.f32 %v1568, %v1621
        %v1638 = vmul.f32 %v1570, %v1622
        %v1639 = vmul.f32 %v1572, %v1623
        %v1640 = vmul.f32 %v1574, %v1624
        %v1641 = vmul.f32 %v1576, %v1625
        %v1642 = vmul.f32 %v1578, %v1626
        %v1643 = vpack.c.bf16 %v1628, %v1627
        %v1644 = vpack.c.bf16 %v1630, %v1629
        %v1645 = vpack.c.bf16 %v1632, %v1631
        %v1646 = vpack.c.bf16 %v1634, %v1633
        %v1647 = vpack.c.bf16 %v1636, %v1635
        %v1648 = vpack.c.bf16 %v1638, %v1637
        %v1649 = vpack.c.bf16 %v1640, %v1639
        %v1650 = vpack.c.bf16 %v1642, %v1641
        %1659 = vrot.lane.b32.xlu0 %v815, 96
        %v1660 = vpop.permute.xlu0 %1659
        %1661 = vrot.lane.b32.xlu0 %v816, 96
        %v1662 = vpop.permute.xlu0 %1661
        %1663 = vrot.lane.b32.xlu0 %v817, 96
        %v1664 = vpop.permute.xlu0 %1663
        %1665 = vrot.lane.b32.xlu0 %v818, 96
        %v1666 = vpop.permute.xlu0 %1665
        %1667 = vrot.lane.b32.xlu0 %v819, 96
        %v1668 = vpop.permute.xlu0 %1667
        %1669 = vrot.lane.b32.xlu0 %v820, 96
        %v1670 = vpop.permute.xlu0 %1669
        %1671 = vrot.lane.b32.xlu0 %v821, 96
        %v1672 = vpop.permute.xlu0 %1671
        %1673 = vrot.lane.b32.xlu0 %v822, 96
        %v1674 = vpop.permute.xlu0 %1673
        %1683 = vmatprep.subr.bf16.mxu0 0
        %1684 = vmatpush1.bf16.msra.mxu0 %v1674
        %1685 = vmatprep.subr.bf16.mxu0 0
        %1686 = vmatpush1.bf16.msra.mxu0 %v1672
        %1687 = vmatprep.subr.bf16.mxu0 0
        %1688 = vmatpush1.bf16.msra.mxu0 %v1670
        %1689 = vmatprep.subr.bf16.mxu0 0
        %1690 = vmatpush1.bf16.msra.mxu0 %v1668
        %1691 = vmatprep.subr.bf16.mxu0 0
        %1692 = vmatpush1.bf16.msra.mxu0 %v1666
        %1693 = vmatprep.subr.bf16.mxu0 0
        %1694 = vmatpush1.bf16.msra.mxu0 %v1664
        %1695 = vmatprep.subr.bf16.mxu0 0
        %1696 = vmatpush1.bf16.msra.mxu0 %v1662
        %1697 = vmatprep.subr.bf16.mxu0 0
        %1698 = vmatpush1.bf16.msra.mxu0 %v1660
        %1699 = vmatprep.subr.bf16.mxu0 0
        %1700 = vmatpush2.bf16.msra.mxu0 0
        %1701 = vmatprep.subr.bf16.mxu0 0
        %1702 = vmatpush2.bf16.msra.mxu0 0
        %1703 = vmatprep.subr.bf16.mxu0 0
        %1704 = vmatpush2.bf16.msra.mxu0 0
        %1705 = vmatprep.subr.bf16.mxu0 0
        %1706 = vmatpush2.bf16.msra.mxu0 0
        %1707 = vmatprep.subr.bf16.mxu0 0
        %1708 = vmatpush2.bf16.msra.mxu0 0
        %1709 = vmatprep.subr.bf16.mxu0 0
        %1710 = vmatpush2.bf16.msra.mxu0 0
        %1711 = vmatprep.subr.bf16.mxu0 0
        %1712 = vmatpush2.bf16.msra.mxu0 0
        %1713 = vmatprep.subr.bf16.mxu0 0
        %1714 = vmatpush2.bf16.msra.mxu0 0
        %1715 = vmatprep.mubr.bf16.mxu0 0
        %1716 = vmatmul.mubr.bf16.gmra.mxu0 %v1643
        %v1717 = vpop.f32.mrf.mxu0
        %v1718 = vadd.f32 0.0, %v1717
        %v1719 = vpop.f32.mrf.mxu0
        %v1720 = vpop.f32.mrf.mxu0
        %v1721 = vadd.f32 0.0, %v1720
        %v1722 = vpop.f32.mrf.mxu0
        %1723 = vmatprep.mubr.bf16.mxu0 0
        %1724 = vmatmul.mubr.bf16.gmra.mxu0 %v1644
        %v1725 = vpop.f32.mrf.mxu0
        %v1726 = vadd.f32 0.0, %v1725
        %v1727 = vpop.f32.mrf.mxu0
        %v1728 = vpop.f32.mrf.mxu0
        %v1729 = vadd.f32 0.0, %v1728
        %v1730 = vpop.f32.mrf.mxu0
        %1731 = vmatprep.mubr.bf16.mxu0 0
        %1732 = vmatmul.mubr.bf16.gmra.mxu0 %v1645
        %v1733 = vpop.f32.mrf.mxu0
        %v1734 = vadd.f32 0.0, %v1733
        %v1735 = vpop.f32.mrf.mxu0
        %v1736 = vpop.f32.mrf.mxu0
        %v1737 = vadd.f32 0.0, %v1736
        %v1738 = vpop.f32.mrf.mxu0
        %1739 = vmatprep.mubr.bf16.mxu0 0
        %1740 = vmatmul.mubr.bf16.gmra.mxu0 %v1646
        %v1741 = vpop.f32.mrf.mxu0
        %v1742 = vadd.f32 0.0, %v1741
        %v1743 = vpop.f32.mrf.mxu0
        %v1744 = vpop.f32.mrf.mxu0
        %v1745 = vadd.f32 0.0, %v1744
        %v1746 = vpop.f32.mrf.mxu0
        %1747 = vmatprep.mubr.bf16.mxu0 0
        %1748 = vmatmul.mubr.bf16.gmra.mxu0 %v1647
        %v1749 = vpop.f32.mrf.mxu0
        %v1750 = vadd.f32 0.0, %v1749
        %v1751 = vpop.f32.mrf.mxu0
        %v1752 = vpop.f32.mrf.mxu0
        %v1753 = vadd.f32 0.0, %v1752
        %v1754 = vpop.f32.mrf.mxu0
        %1755 = vmatprep.mubr.bf16.mxu0 0
        %1756 = vmatmul.mubr.bf16.gmra.mxu0 %v1648
        %v1757 = vpop.f32.mrf.mxu0
        %v1758 = vadd.f32 0.0, %v1757
        %v1759 = vpop.f32.mrf.mxu0
        %v1760 = vpop.f32.mrf.mxu0
        %v1761 = vadd.f32 0.0, %v1760
        %v1762 = vpop.f32.mrf.mxu0
        %1763 = vmatprep.mubr.bf16.mxu0 0
        %1764 = vmatmul.mubr.bf16.gmra.mxu0 %v1649
        %v1765 = vpop.f32.mrf.mxu0
        %v1766 = vadd.f32 0.0, %v1765
        %v1767 = vpop.f32.mrf.mxu0
        %v1768 = vpop.f32.mrf.mxu0
        %v1769 = vadd.f32 0.0, %v1768
        %v1770 = vpop.f32.mrf.mxu0
        %1771 = vmatprep.mubr.bf16.mxu0 0
        %1772 = vmatmul.mubr.bf16.gmra.mxu0 %v1650
        %v1773 = vpop.f32.mrf.mxu0
        %v1774 = vadd.f32 0.0, %v1773
        %v1775 = vpop.f32.mrf.mxu0
        %v1776 = vpop.f32.mrf.mxu0
        %v1777 = vadd.f32 0.0, %v1776
        %v1778 = vpop.f32.mrf.mxu0
        %1779 = vdwg.mxu0
        %v1780 = vpack.c.bf16 %v1721, %v1718
        %v1781 = vpack.c.bf16 %v1729, %v1726
        %v1782 = vpack.c.bf16 %v1737, %v1734
        %v1783 = vpack.c.bf16 %v1745, %v1742
        %v1784 = vpack.c.bf16 %v1753, %v1750
        %v1785 = vpack.c.bf16 %v1761, %v1758
        %v1786 = vpack.c.bf16 %v1769, %v1766
        %v1787 = vpack.c.bf16 %v1777, %v1774
        %v1796 = vunpack.c.l.b16 %v1780
        %v1797 = vunpack.c.h.b16 %v1780
        %v1798 = vunpack.c.l.b16 %v1781
        %v1799 = vunpack.c.h.b16 %v1781
        %v1800 = vunpack.c.l.b16 %v1782
        %v1801 = vunpack.c.h.b16 %v1782
        %v1802 = vunpack.c.l.b16 %v1783
        %v1803 = vunpack.c.h.b16 %v1783
        %v1804 = vunpack.c.l.b16 %v1784
        %v1805 = vunpack.c.h.b16 %v1784
        %v1806 = vunpack.c.l.b16 %v1785
        %v1807 = vunpack.c.h.b16 %v1785
        %v1808 = vunpack.c.l.b16 %v1786
        %v1809 = vunpack.c.h.b16 %v1786
        %v1810 = vunpack.c.l.b16 %v1787
        %v1811 = vunpack.c.h.b16 %v1787
        %v1812 = vpack.c.b16 %v1796, %v1796
        %v1813 = vpack.c.b16 %v1797, %v1797
        %v1814 = vpack.c.b16 %v1798, %v1798
        %v1815 = vpack.c.b16 %v1799, %v1799
        %v1816 = vpack.c.b16 %v1800, %v1800
        %v1817 = vpack.c.b16 %v1801, %v1801
        %v1818 = vpack.c.b16 %v1802, %v1802
        %v1819 = vpack.c.b16 %v1803, %v1803
        %v1820 = vpack.c.b16 %v1804, %v1804
        %v1821 = vpack.c.b16 %v1805, %v1805
        %v1822 = vpack.c.b16 %v1806, %v1806
        %v1823 = vpack.c.b16 %v1807, %v1807
        %v1824 = vpack.c.b16 %v1808, %v1808
        %v1825 = vpack.c.b16 %v1809, %v1809
        %v1826 = vpack.c.b16 %v1810, %v1810
        %v1827 = vpack.c.b16 %v1811, %v1811
        %1828 = vrot.lane.b32.xlu0 %v1812, 32
        %v1829 = vpop.permute.xlu0 %1828
        %1830 = vrot.lane.b32.xlu0 %v1813, 32
        %v1831 = vpop.permute.xlu0 %1830
        %1832 = vrot.lane.b32.xlu0 %v1814, 32
        %v1833 = vpop.permute.xlu0 %1832
        %1834 = vrot.lane.b32.xlu0 %v1815, 32
        %v1835 = vpop.permute.xlu0 %1834
        %1836 = vrot.lane.b32.xlu0 %v1816, 32
        %v1837 = vpop.permute.xlu0 %1836
        %1838 = vrot.lane.b32.xlu0 %v1817, 32
        %v1839 = vpop.permute.xlu0 %1838
        %1840 = vrot.lane.b32.xlu0 %v1818, 32
        %v1841 = vpop.permute.xlu0 %1840
        %1842 = vrot.lane.b32.xlu0 %v1819, 32
        %v1843 = vpop.permute.xlu0 %1842
        %1844 = vrot.lane.b32.xlu0 %v1820, 32
        %v1845 = vpop.permute.xlu0 %1844
        %1846 = vrot.lane.b32.xlu0 %v1821, 32
        %v1847 = vpop.permute.xlu0 %1846
        %1848 = vrot.lane.b32.xlu0 %v1822, 32
        %v1849 = vpop.permute.xlu0 %1848
        %1850 = vrot.lane.b32.xlu0 %v1823, 32
        %v1851 = vpop.permute.xlu0 %1850
        %1852 = vrot.lane.b32.xlu0 %v1824, 32
        %v1853 = vpop.permute.xlu0 %1852
        %1854 = vrot.lane.b32.xlu0 %v1825, 32
        %v1855 = vpop.permute.xlu0 %1854
        %1856 = vrot.lane.b32.xlu0 %v1826, 32
        %v1857 = vpop.permute.xlu0 %1856
        %1858 = vrot.lane.b32.xlu0 %v1827, 32
        %v1859 = vpop.permute.xlu0 %1858
        %vm1876 = vcmask 519424
        %1877 = vst.msk [vmem:[#allocation2] sm:$0xf] %vm1876, %v1829
        %1878 = vst.msk [vmem:[#allocation2 + $0x4] sm:$0xf] %vm1876, %v1831
        %1879 = vst.msk [vmem:[#allocation2 + $0x8] sm:$0xf] %vm1876, %v1833
        %1880 = vst.msk [vmem:[#allocation2 + $0xc] sm:$0xf] %vm1876, %v1835
        %1881 = vst.msk [vmem:[#allocation2 + $0x10] sm:$0xf] %vm1876, %v1837
        %1882 = vst.msk [vmem:[#allocation2 + $0x14] sm:$0xf] %vm1876, %v1839
        %1883 = vst.msk [vmem:[#allocation2 + $0x18] sm:$0xf] %vm1876, %v1841
        %1884 = vst.msk [vmem:[#allocation2 + $0x1c] sm:$0xf] %vm1876, %v1843
        %1885 = vst.msk [vmem:[#allocation2 + $0x20] sm:$0xf] %vm1876, %v1845
        %1886 = vst.msk [vmem:[#allocation2 + $0x24] sm:$0xf] %vm1876, %v1847
        %1887 = vst.msk [vmem:[#allocation2 + $0x28] sm:$0xf] %vm1876, %v1849
        %1888 = vst.msk [vmem:[#allocation2 + $0x2c] sm:$0xf] %vm1876, %v1851
        %1889 = vst.msk [vmem:[#allocation2 + $0x30] sm:$0xf] %vm1876, %v1853
        %1890 = vst.msk [vmem:[#allocation2 + $0x34] sm:$0xf] %vm1876, %v1855
        %1891 = vst.msk [vmem:[#allocation2 + $0x38] sm:$0xf] %vm1876, %v1857
        %1892 = vst.msk [vmem:[#allocation2 + $0x3c] sm:$0xf] %vm1876, %v1859
        %1893 = vrot.lane.b32.xlu0 %v799, 64
        %v1894 = vpop.permute.xlu0 %1893
        %1895 = vrot.lane.b32.xlu0 %v800, 64
        %v1896 = vpop.permute.xlu0 %1895
        %1897 = vrot.lane.b32.xlu0 %v801, 64
        %v1898 = vpop.permute.xlu0 %1897
        %1899 = vrot.lane.b32.xlu0 %v802, 64
        %v1900 = vpop.permute.xlu0 %1899
        %1901 = vrot.lane.b32.xlu0 %v803, 64
        %v1902 = vpop.permute.xlu0 %1901
        %1903 = vrot.lane.b32.xlu0 %v804, 64
        %v1904 = vpop.permute.xlu0 %1903
        %1905 = vrot.lane.b32.xlu0 %v805, 64
        %v1906 = vpop.permute.xlu0 %1905
        %1907 = vrot.lane.b32.xlu0 %v806, 64
        %v1908 = vpop.permute.xlu0 %1907
        %1909 = vrot.lane.b32.xlu0 %v807, 64
        %v1910 = vpop.permute.xlu0 %1909
        %1911 = vrot.lane.b32.xlu0 %v808, 64
        %v1912 = vpop.permute.xlu0 %1911
        %1913 = vrot.lane.b32.xlu0 %v809, 64
        %v1914 = vpop.permute.xlu0 %1913
        %1915 = vrot.lane.b32.xlu0 %v810, 64
        %v1916 = vpop.permute.xlu0 %1915
        %1917 = vrot.lane.b32.xlu0 %v811, 64
        %v1918 = vpop.permute.xlu0 %1917
        %1919 = vrot.lane.b32.xlu0 %v812, 64
        %v1920 = vpop.permute.xlu0 %1919
        %1921 = vrot.lane.b32.xlu0 %v813, 64
        %v1922 = vpop.permute.xlu0 %1921
        %1923 = vrot.lane.b32.xlu0 %v814, 64
        %v1924 = vpop.permute.xlu0 %1923
        %v1926 = vsel %vm830, %v1894, 0
        %v1929 = vsel %vm830, %v1896, 0
        %v1932 = vsel %vm830, %v1898, 0
        %v1935 = vsel %vm830, %v1900, 0
        %v1938 = vsel %vm830, %v1902, 0
        %v1941 = vsel %vm830, %v1904, 0
        %v1944 = vsel %vm830, %v1906, 0
        %v1947 = vsel %vm830, %v1908, 0
        %v1950 = vsel %vm830, %v1910, 0
        %v1953 = vsel %vm830, %v1912, 0
        %v1956 = vsel %vm830, %v1914, 0
        %v1959 = vsel %vm830, %v1916, 0
        %v1962 = vsel %vm830, %v1918, 0
        %v1965 = vsel %vm830, %v1920, 0
        %v1968 = vsel %vm830, %v1922, 0
        %v1971 = vsel %vm830, %v1924, 0
        %1973 = vmatprep.subr.bf16.mxu0 0
        %1974 = vmatpush1.bf16.xpose.msra.mxu0 %v1971
        %1975 = vmatprep.subr.bf16.mxu0 0
        %1976 = vmatpush1.bf16.xpose.msra.mxu0 %v1968
        %1977 = vmatprep.subr.bf16.mxu0 0
        %1978 = vmatpush1.bf16.xpose.msra.mxu0 %v1965
        %1979 = vmatprep.subr.bf16.mxu0 0
        %1980 = vmatpush1.bf16.xpose.msra.mxu0 %v1962
        %1981 = vmatprep.subr.bf16.mxu0 0
        %1982 = vmatpush1.bf16.xpose.msra.mxu0 %v1959
        %1983 = vmatprep.subr.bf16.mxu0 0
        %1984 = vmatpush1.bf16.xpose.msra.mxu0 %v1956
        %1985 = vmatprep.subr.bf16.mxu0 0
        %1986 = vmatpush1.bf16.xpose.msra.mxu0 %v1953
        %1987 = vmatprep.subr.bf16.mxu0 0
        %1988 = vmatpush1.bf16.xpose.msra.mxu0 %v1950
        %1989 = vmatprep.subr.bf16.mxu0 0
        %1990 = vmatpush2.bf16.xpose.msra.mxu0 0
        %1991 = vmatprep.subr.bf16.mxu0 0
        %1992 = vmatpush2.bf16.xpose.msra.mxu0 0
        %1993 = vmatprep.subr.bf16.mxu0 0
        %1994 = vmatpush2.bf16.xpose.msra.mxu0 0
        %1995 = vmatprep.subr.bf16.mxu0 0
        %1996 = vmatpush2.bf16.xpose.msra.mxu0 0
        %1997 = vmatprep.subr.bf16.mxu0 0
        %1998 = vmatpush2.bf16.xpose.msra.mxu0 0
        %1999 = vmatprep.subr.bf16.mxu0 0
        %2000 = vmatpush2.bf16.xpose.msra.mxu0 0
        %2001 = vmatprep.subr.bf16.mxu0 0
        %2002 = vmatpush2.bf16.xpose.msra.mxu0 0
        %2003 = vmatprep.subr.bf16.mxu0 0
        %2004 = vmatpush2.bf16.xpose.msra.mxu0 0
        %2005 = vmatprep.mubr.bf16.mxu0 0
        %2006 = vmatmul.mubr.bf16.gmra.mxu0 %v1926
        %v2007 = vpop.f32.mrf.mxu0
        %v2008 = vadd.f32 %v828, %v2007
        %v2009 = vpop.f32.mrf.mxu0
        %v2010 = vpop.f32.mrf.mxu0
        %v2011 = vadd.f32 %v828, %v2010
        %v2012 = vpop.f32.mrf.mxu0
        %2013 = vmatprep.mubr.bf16.mxu0 0
        %2014 = vmatmul.mubr.bf16.gmra.mxu0 %v1929
        %v2015 = vpop.f32.mrf.mxu0
        %v2016 = vadd.f32 %v828, %v2015
        %v2017 = vpop.f32.mrf.mxu0
        %v2018 = vpop.f32.mrf.mxu0
        %v2019 = vadd.f32 %v828, %v2018
        %v2020 = vpop.f32.mrf.mxu0
        %2021 = vmatprep.mubr.bf16.mxu0 0
        %2022 = vmatmul.mubr.bf16.gmra.mxu0 %v1932
        %v2023 = vpop.f32.mrf.mxu0
        %v2024 = vadd.f32 %v828, %v2023
        %v2025 = vpop.f32.mrf.mxu0
        %v2026 = vpop.f32.mrf.mxu0
        %v2027 = vadd.f32 %v828, %v2026
        %v2028 = vpop.f32.mrf.mxu0
        %2029 = vmatprep.mubr.bf16.mxu0 0
        %2030 = vmatmul.mubr.bf16.gmra.mxu0 %v1935
        %v2031 = vpop.f32.mrf.mxu0
        %v2032 = vadd.f32 %v828, %v2031
        %v2033 = vpop.f32.mrf.mxu0
        %v2034 = vpop.f32.mrf.mxu0
        %v2035 = vadd.f32 %v828, %v2034
        %v2036 = vpop.f32.mrf.mxu0
        %2037 = vmatprep.mubr.bf16.mxu0 0
        %2038 = vmatmul.mubr.bf16.gmra.mxu0 %v1938
        %v2039 = vpop.f32.mrf.mxu0
        %v2040 = vadd.f32 %v828, %v2039
        %v2041 = vpop.f32.mrf.mxu0
        %v2042 = vpop.f32.mrf.mxu0
        %v2043 = vadd.f32 %v828, %v2042
        %v2044 = vpop.f32.mrf.mxu0
        %2045 = vmatprep.mubr.bf16.mxu0 0
        %2046 = vmatmul.mubr.bf16.gmra.mxu0 %v1941
        %v2047 = vpop.f32.mrf.mxu0
        %v2048 = vadd.f32 %v828, %v2047
        %v2049 = vpop.f32.mrf.mxu0
        %v2050 = vpop.f32.mrf.mxu0
        %v2051 = vadd.f32 %v828, %v2050
        %v2052 = vpop.f32.mrf.mxu0
        %2053 = vmatprep.mubr.bf16.mxu0 0
        %2054 = vmatmul.mubr.bf16.gmra.mxu0 %v1944
        %v2055 = vpop.f32.mrf.mxu0
        %v2056 = vadd.f32 %v828, %v2055
        %v2057 = vpop.f32.mrf.mxu0
        %v2058 = vpop.f32.mrf.mxu0
        %v2059 = vadd.f32 %v828, %v2058
        %v2060 = vpop.f32.mrf.mxu0
        %2061 = vmatprep.mubr.bf16.mxu0 0
        %2062 = vmatmul.mubr.bf16.gmra.mxu0 %v1947
        %v2063 = vpop.f32.mrf.mxu0
        %v2064 = vadd.f32 %v828, %v2063
        %v2065 = vpop.f32.mrf.mxu0
        %v2066 = vpop.f32.mrf.mxu0
        %v2067 = vadd.f32 %v828, %v2066
        %v2068 = vpop.f32.mrf.mxu0
        %2069 = vdwg.mxu0
        %2070 = vmax.xlane.f32.xlu0 %v2008
        %v2071 = vpop.xlane.xlu0 %2070
        %2072 = vmax.xlane.f32.xlu0 %v2011
        %v2073 = vpop.xlane.xlu0 %2072
        %2074 = vmax.xlane.f32.xlu0 %v2016
        %v2075 = vpop.xlane.xlu0 %2074
        %2076 = vmax.xlane.f32.xlu0 %v2019
        %v2077 = vpop.xlane.xlu0 %2076
        %2078 = vmax.xlane.f32.xlu0 %v2024
        %v2079 = vpop.xlane.xlu0 %2078
        %2080 = vmax.xlane.f32.xlu0 %v2027
        %v2081 = vpop.xlane.xlu0 %2080
        %2082 = vmax.xlane.f32.xlu0 %v2032
        %v2083 = vpop.xlane.xlu0 %2082
        %2084 = vmax.xlane.f32.xlu0 %v2035
        %v2085 = vpop.xlane.xlu0 %2084
        %2086 = vmax.xlane.f32.xlu0 %v2040
        %v2087 = vpop.xlane.xlu0 %2086
        %2088 = vmax.xlane.f32.xlu0 %v2043
        %v2089 = vpop.xlane.xlu0 %2088
        %2090 = vmax.xlane.f32.xlu0 %v2048
        %v2091 = vpop.xlane.xlu0 %2090
        %2092 = vmax.xlane.f32.xlu0 %v2051
        %v2093 = vpop.xlane.xlu0 %2092
        %2094 = vmax.xlane.f32.xlu0 %v2056
        %v2095 = vpop.xlane.xlu0 %2094
        %2096 = vmax.xlane.f32.xlu0 %v2059
        %v2097 = vpop.xlane.xlu0 %2096
        %2098 = vmax.xlane.f32.xlu0 %v2064
        %v2099 = vpop.xlane.xlu0 %2098
        %2100 = vmax.xlane.f32.xlu0 %v2067
        %v2101 = vpop.xlane.xlu0 %2100
        %v2102 = vsub.f32 %v2008, %v2071
        %v2103 = vsub.f32 %v2011, %v2073
        %v2104 = vsub.f32 %v2016, %v2075
        %v2105 = vsub.f32 %v2019, %v2077
        %v2106 = vsub.f32 %v2024, %v2079
        %v2107 = vsub.f32 %v2027, %v2081
        %v2108 = vsub.f32 %v2032, %v2083
        %v2109 = vsub.f32 %v2035, %v2085
        %v2110 = vsub.f32 %v2040, %v2087
        %v2111 = vsub.f32 %v2043, %v2089
        %v2112 = vsub.f32 %v2048, %v2091
        %v2113 = vsub.f32 %v2051, %v2093
        %v2114 = vsub.f32 %v2056, %v2095
        %v2115 = vsub.f32 %v2059, %v2097
        %v2116 = vsub.f32 %v2064, %v2099
        %v2117 = vsub.f32 %v2067, %v2101
        %v2118 = vmul.f32 %v2102, 1.442695
        %v2119 = vpow.pop %v2118
        %v2120 = vmul.f32 %v2103, 1.442695
        %v2121 = vpow.pop %v2120
        %v2122 = vmul.f32 %v2104, 1.442695
        %v2123 = vpow.pop %v2122
        %v2124 = vmul.f32 %v2105, 1.442695
        %v2125 = vpow.pop %v2124
        %v2126 = vmul.f32 %v2106, 1.442695
        %v2127 = vpow.pop %v2126
        %v2128 = vmul.f32 %v2107, 1.442695
        %v2129 = vpow.pop %v2128
        %v2130 = vmul.f32 %v2108, 1.442695
        %v2131 = vpow.pop %v2130
        %v2132 = vmul.f32 %v2109, 1.442695
        %v2133 = vpow.pop %v2132
        %v2134 = vmul.f32 %v2110, 1.442695
        %v2135 = vpow.pop %v2134
        %v2136 = vmul.f32 %v2111, 1.442695
        %v2137 = vpow.pop %v2136
        %v2138 = vmul.f32 %v2112, 1.442695
        %v2139 = vpow.pop %v2138
        %v2140 = vmul.f32 %v2113, 1.442695
        %v2141 = vpow.pop %v2140
        %v2142 = vmul.f32 %v2114, 1.442695
        %v2143 = vpow.pop %v2142
        %v2144 = vmul.f32 %v2115, 1.442695
        %v2145 = vpow.pop %v2144
        %v2146 = vmul.f32 %v2116, 1.442695
        %v2147 = vpow.pop %v2146
        %v2148 = vmul.f32 %v2117, 1.442695
        %v2149 = vpow.pop %v2148
        %2150 = vadd.xlane.f32.xlu0 %v2119
        %v2151 = vpop.xlane.xlu0 %2150
        %2152 = vadd.xlane.f32.xlu0 %v2121
        %v2153 = vpop.xlane.xlu0 %2152
        %2154 = vadd.xlane.f32.xlu0 %v2123
        %v2155 = vpop.xlane.xlu0 %2154
        %2156 = vadd.xlane.f32.xlu0 %v2125
        %v2157 = vpop.xlane.xlu0 %2156
        %2158 = vadd.xlane.f32.xlu0 %v2127
        %v2159 = vpop.xlane.xlu0 %2158
        %2160 = vadd.xlane.f32.xlu0 %v2129
        %v2161 = vpop.xlane.xlu0 %2160
        %2162 = vadd.xlane.f32.xlu0 %v2131
        %v2163 = vpop.xlane.xlu0 %2162
        %2164 = vadd.xlane.f32.xlu0 %v2133
        %v2165 = vpop.xlane.xlu0 %2164
        %2166 = vadd.xlane.f32.xlu0 %v2135
        %v2167 = vpop.xlane.xlu0 %2166
        %2168 = vadd.xlane.f32.xlu0 %v2137
        %v2169 = vpop.xlane.xlu0 %2168
        %2170 = vadd.xlane.f32.xlu0 %v2139
        %v2171 = vpop.xlane.xlu0 %2170
        %2172 = vadd.xlane.f32.xlu0 %v2141
        %v2173 = vpop.xlane.xlu0 %2172
        %2174 = vadd.xlane.f32.xlu0 %v2143
        %v2175 = vpop.xlane.xlu0 %2174
        %2176 = vadd.xlane.f32.xlu0 %v2145
        %v2177 = vpop.xlane.xlu0 %2176
        %2178 = vadd.xlane.f32.xlu0 %v2147
        %v2179 = vpop.xlane.xlu0 %2178
        %2180 = vadd.xlane.f32.xlu0 %v2149
        %v2181 = vpop.xlane.xlu0 %2180
        %v2182 = vrcp.pop %v2151
        %v2183 = vrcp.pop %v2153
        %v2184 = vrcp.pop %v2155
        %v2185 = vrcp.pop %v2157
        %v2186 = vrcp.pop %v2159
        %v2187 = vrcp.pop %v2161
        %v2188 = vrcp.pop %v2163
        %v2189 = vrcp.pop %v2165
        %v2190 = vrcp.pop %v2167
        %v2191 = vrcp.pop %v2169
        %v2192 = vrcp.pop %v2171
        %v2193 = vrcp.pop %v2173
        %v2194 = vrcp.pop %v2175
        %v2195 = vrcp.pop %v2177
        %v2196 = vrcp.pop %v2179
        %v2197 = vrcp.pop %v2181
        %v2198 = vmul.f32 %v2119, %v2182
        %v2199 = vmul.f32 %v2121, %v2183
        %v2200 = vmul.f32 %v2123, %v2184
        %v2201 = vmul.f32 %v2125, %v2185
        %v2202 = vmul.f32 %v2127, %v2186
        %v2203 = vmul.f32 %v2129, %v2187
        %v2204 = vmul.f32 %v2131, %v2188
        %v2205 = vmul.f32 %v2133, %v2189
        %v2206 = vmul.f32 %v2135, %v2190
        %v2207 = vmul.f32 %v2137, %v2191
        %v2208 = vmul.f32 %v2139, %v2192
        %v2209 = vmul.f32 %v2141, %v2193
        %v2210 = vmul.f32 %v2143, %v2194
        %v2211 = vmul.f32 %v2145, %v2195
        %v2212 = vmul.f32 %v2147, %v2196
        %v2213 = vmul.f32 %v2149, %v2197
        %v2214 = vpack.c.bf16 %v2199, %v2198
        %v2215 = vpack.c.bf16 %v2201, %v2200
        %v2216 = vpack.c.bf16 %v2203, %v2202
        %v2217 = vpack.c.bf16 %v2205, %v2204
        %v2218 = vpack.c.bf16 %v2207, %v2206
        %v2219 = vpack.c.bf16 %v2209, %v2208
        %v2220 = vpack.c.bf16 %v2211, %v2210
        %v2221 = vpack.c.bf16 %v2213, %v2212
        %2222 = vrot.lane.b32.xlu0 %v815, 64
        %v2223 = vpop.permute.xlu0 %2222
        %2224 = vrot.lane.b32.xlu0 %v816, 64
        %v2225 = vpop.permute.xlu0 %2224
        %2226 = vrot.lane.b32.xlu0 %v817, 64
        %v2227 = vpop.permute.xlu0 %2226
        %2228 = vrot.lane.b32.xlu0 %v818, 64
        %v2229 = vpop.permute.xlu0 %2228
        %2230 = vrot.lane.b32.xlu0 %v819, 64
        %v2231 = vpop.permute.xlu0 %2230
        %2232 = vrot.lane.b32.xlu0 %v820, 64
        %v2233 = vpop.permute.xlu0 %2232
        %2234 = vrot.lane.b32.xlu0 %v821, 64
        %v2235 = vpop.permute.xlu0 %2234
        %2236 = vrot.lane.b32.xlu0 %v822, 64
        %v2237 = vpop.permute.xlu0 %2236
        %2246 = vmatprep.subr.bf16.mxu0 0
        %2247 = vmatpush1.bf16.msra.mxu0 %v2237
        %2248 = vmatprep.subr.bf16.mxu0 0
        %2249 = vmatpush1.bf16.msra.mxu0 %v2235
        %2250 = vmatprep.subr.bf16.mxu0 0
        %2251 = vmatpush1.bf16.msra.mxu0 %v2233
        %2252 = vmatprep.subr.bf16.mxu0 0
        %2253 = vmatpush1.bf16.msra.mxu0 %v2231
        %2254 = vmatprep.subr.bf16.mxu0 0
        %2255 = vmatpush1.bf16.msra.mxu0 %v2229
        %2256 = vmatprep.subr.bf16.mxu0 0
        %2257 = vmatpush1.bf16.msra.mxu0 %v2227
        %2258 = vmatprep.subr.bf16.mxu0 0
        %2259 = vmatpush1.bf16.msra.mxu0 %v2225
        %2260 = vmatprep.subr.bf16.mxu0 0
        %2261 = vmatpush1.bf16.msra.mxu0 %v2223
        %2262 = vmatprep.subr.bf16.mxu0 0
        %2263 = vmatpush2.bf16.msra.mxu0 0
        %2264 = vmatprep.subr.bf16.mxu0 0
        %2265 = vmatpush2.bf16.msra.mxu0 0
        %2266 = vmatprep.subr.bf16.mxu0 0
        %2267 = vmatpush2.bf16.msra.mxu0 0
        %2268 = vmatprep.subr.bf16.mxu0 0
        %2269 = vmatpush2.bf16.msra.mxu0 0
        %2270 = vmatprep.subr.bf16.mxu0 0
        %2271 = vmatpush2.bf16.msra.mxu0 0
        %2272 = vmatprep.subr.bf16.mxu0 0
        %2273 = vmatpush2.bf16.msra.mxu0 0
        %2274 = vmatprep.subr.bf16.mxu0 0
        %2275 = vmatpush2.bf16.msra.mxu0 0
        %2276 = vmatprep.subr.bf16.mxu0 0
        %2277 = vmatpush2.bf16.msra.mxu0 0
        %2278 = vmatprep.mubr.bf16.mxu0 0
        %2279 = vmatmul.mubr.bf16.gmra.mxu0 %v2214
        %v2280 = vpop.f32.mrf.mxu0
        %v2281 = vadd.f32 0.0, %v2280
        %v2282 = vpop.f32.mrf.mxu0
        %v2283 = vpop.f32.mrf.mxu0
        %v2284 = vadd.f32 0.0, %v2283
        %v2285 = vpop.f32.mrf.mxu0
        %2286 = vmatprep.mubr.bf16.mxu0 0
        %2287 = vmatmul.mubr.bf16.gmra.mxu0 %v2215
        %v2288 = vpop.f32.mrf.mxu0
        %v2289 = vadd.f32 0.0, %v2288
        %v2290 = vpop.f32.mrf.mxu0
        %v2291 = vpop.f32.mrf.mxu0
        %v2292 = vadd.f32 0.0, %v2291
        %v2293 = vpop.f32.mrf.mxu0
        %2294 = vmatprep.mubr.bf16.mxu0 0
        %2295 = vmatmul.mubr.bf16.gmra.mxu0 %v2216
        %v2296 = vpop.f32.mrf.mxu0
        %v2297 = vadd.f32 0.0, %v2296
        %v2298 = vpop.f32.mrf.mxu0
        %v2299 = vpop.f32.mrf.mxu0
        %v2300 = vadd.f32 0.0, %v2299
        %v2301 = vpop.f32.mrf.mxu0
        %2302 = vmatprep.mubr.bf16.mxu0 0
        %2303 = vmatmul.mubr.bf16.gmra.mxu0 %v2217
        %v2304 = vpop.f32.mrf.mxu0
        %v2305 = vadd.f32 0.0, %v2304
        %v2306 = vpop.f32.mrf.mxu0
        %v2307 = vpop.f32.mrf.mxu0
        %v2308 = vadd.f32 0.0, %v2307
        %v2309 = vpop.f32.mrf.mxu0
        %2310 = vmatprep.mubr.bf16.mxu0 0
        %2311 = vmatmul.mubr.bf16.gmra.mxu0 %v2218
        %v2312 = vpop.f32.mrf.mxu0
        %v2313 = vadd.f32 0.0, %v2312
        %v2314 = vpop.f32.mrf.mxu0
        %v2315 = vpop.f32.mrf.mxu0
        %v2316 = vadd.f32 0.0, %v2315
        %v2317 = vpop.f32.mrf.mxu0
        %2318 = vmatprep.mubr.bf16.mxu0 0
        %2319 = vmatmul.mubr.bf16.gmra.mxu0 %v2219
        %v2320 = vpop.f32.mrf.mxu0
        %v2321 = vadd.f32 0.0, %v2320
        %v2322 = vpop.f32.mrf.mxu0
        %v2323 = vpop.f32.mrf.mxu0
        %v2324 = vadd.f32 0.0, %v2323
        %v2325 = vpop.f32.mrf.mxu0
        %2326 = vmatprep.mubr.bf16.mxu0 0
        %2327 = vmatmul.mubr.bf16.gmra.mxu0 %v2220
        %v2328 = vpop.f32.mrf.mxu0
        %v2329 = vadd.f32 0.0, %v2328
        %v2330 = vpop.f32.mrf.mxu0
        %v2331 = vpop.f32.mrf.mxu0
        %v2332 = vadd.f32 0.0, %v2331
        %v2333 = vpop.f32.mrf.mxu0
        %2334 = vmatprep.mubr.bf16.mxu0 0
        %2335 = vmatmul.mubr.bf16.gmra.mxu0 %v2221
        %v2336 = vpop.f32.mrf.mxu0
        %v2337 = vadd.f32 0.0, %v2336
        %v2338 = vpop.f32.mrf.mxu0
        %v2339 = vpop.f32.mrf.mxu0
        %v2340 = vadd.f32 0.0, %v2339
        %v2341 = vpop.f32.mrf.mxu0
        %2342 = vdwg.mxu0
        %v2343 = vpack.c.bf16 %v2284, %v2281
        %v2344 = vpack.c.bf16 %v2292, %v2289
        %v2345 = vpack.c.bf16 %v2300, %v2297
        %v2346 = vpack.c.bf16 %v2308, %v2305
        %v2347 = vpack.c.bf16 %v2316, %v2313
        %v2348 = vpack.c.bf16 %v2324, %v2321
        %v2349 = vpack.c.bf16 %v2332, %v2329
        %v2350 = vpack.c.bf16 %v2340, %v2337
        %v2359 = vunpack.c.l.b16 %v2343
        %v2360 = vunpack.c.h.b16 %v2343
        %v2361 = vunpack.c.l.b16 %v2344
        %v2362 = vunpack.c.h.b16 %v2344
        %v2363 = vunpack.c.l.b16 %v2345
        %v2364 = vunpack.c.h.b16 %v2345
        %v2365 = vunpack.c.l.b16 %v2346
        %v2366 = vunpack.c.h.b16 %v2346
        %v2367 = vunpack.c.l.b16 %v2347
        %v2368 = vunpack.c.h.b16 %v2347
        %v2369 = vunpack.c.l.b16 %v2348
        %v2370 = vunpack.c.h.b16 %v2348
        %v2371 = vunpack.c.l.b16 %v2349
        %v2372 = vunpack.c.h.b16 %v2349
        %v2373 = vunpack.c.l.b16 %v2350
        %v2374 = vunpack.c.h.b16 %v2350
        %v2375 = vpack.c.b16 %v2359, %v2359
        %v2376 = vpack.c.b16 %v2360, %v2360
        %v2377 = vpack.c.b16 %v2361, %v2361
        %v2378 = vpack.c.b16 %v2362, %v2362
        %v2379 = vpack.c.b16 %v2363, %v2363
        %v2380 = vpack.c.b16 %v2364, %v2364
        %v2381 = vpack.c.b16 %v2365, %v2365
        %v2382 = vpack.c.b16 %v2366, %v2366
        %v2383 = vpack.c.b16 %v2367, %v2367
        %v2384 = vpack.c.b16 %v2368, %v2368
        %v2385 = vpack.c.b16 %v2369, %v2369
        %v2386 = vpack.c.b16 %v2370, %v2370
        %v2387 = vpack.c.b16 %v2371, %v2371
        %v2388 = vpack.c.b16 %v2372, %v2372
        %v2389 = vpack.c.b16 %v2373, %v2373
        %v2390 = vpack.c.b16 %v2374, %v2374
        %2391 = vrot.lane.b32.xlu0 %v2375, 64
        %v2392 = vpop.permute.xlu0 %2391
        %2393 = vrot.lane.b32.xlu0 %v2376, 64
        %v2394 = vpop.permute.xlu0 %2393
        %2395 = vrot.lane.b32.xlu0 %v2377, 64
        %v2396 = vpop.permute.xlu0 %2395
        %2397 = vrot.lane.b32.xlu0 %v2378, 64
        %v2398 = vpop.permute.xlu0 %2397
        %2399 = vrot.lane.b32.xlu0 %v2379, 64
        %v2400 = vpop.permute.xlu0 %2399
        %2401 = vrot.lane.b32.xlu0 %v2380, 64
        %v2402 = vpop.permute.xlu0 %2401
        %2403 = vrot.lane.b32.xlu0 %v2381, 64
        %v2404 = vpop.permute.xlu0 %2403
        %2405 = vrot.lane.b32.xlu0 %v2382, 64
        %v2406 = vpop.permute.xlu0 %2405
        %2407 = vrot.lane.b32.xlu0 %v2383, 64
        %v2408 = vpop.permute.xlu0 %2407
        %2409 = vrot.lane.b32.xlu0 %v2384, 64
        %v2410 = vpop.permute.xlu0 %2409
        %2411 = vrot.lane.b32.xlu0 %v2385, 64
        %v2412 = vpop.permute.xlu0 %2411
        %2413 = vrot.lane.b32.xlu0 %v2386, 64
        %v2414 = vpop.permute.xlu0 %2413
        %2415 = vrot.lane.b32.xlu0 %v2387, 64
        %v2416 = vpop.permute.xlu0 %2415
        %2417 = vrot.lane.b32.xlu0 %v2388, 64
        %v2418 = vpop.permute.xlu0 %2417
        %2419 = vrot.lane.b32.xlu0 %v2389, 64
        %v2420 = vpop.permute.xlu0 %2419
        %2421 = vrot.lane.b32.xlu0 %v2390, 64
        %v2422 = vpop.permute.xlu0 %2421
        %vm2439 = vcmask 781824
        %2440 = vst.msk [vmem:[#allocation2] sm:$0xf] %vm2439, %v2392
        %2441 = vst.msk [vmem:[#allocation2 + $0x4] sm:$0xf] %vm2439, %v2394
        %2442 = vst.msk [vmem:[#allocation2 + $0x8] sm:$0xf] %vm2439, %v2396
        %2443 = vst.msk [vmem:[#allocation2 + $0xc] sm:$0xf] %vm2439, %v2398
        %2444 = vst.msk [vmem:[#allocation2 + $0x10] sm:$0xf] %vm2439, %v2400
        %2445 = vst.msk [vmem:[#allocation2 + $0x14] sm:$0xf] %vm2439, %v2402
        %2446 = vst.msk [vmem:[#allocation2 + $0x18] sm:$0xf] %vm2439, %v2404
        %2447 = vst.msk [vmem:[#allocation2 + $0x1c] sm:$0xf] %vm2439, %v2406
        %2448 = vst.msk [vmem:[#allocation2 + $0x20] sm:$0xf] %vm2439, %v2408
        %2449 = vst.msk [vmem:[#allocation2 + $0x24] sm:$0xf] %vm2439, %v2410
        %2450 = vst.msk [vmem:[#allocation2 + $0x28] sm:$0xf] %vm2439, %v2412
        %2451 = vst.msk [vmem:[#allocation2 + $0x2c] sm:$0xf] %vm2439, %v2414
        %2452 = vst.msk [vmem:[#allocation2 + $0x30] sm:$0xf] %vm2439, %v2416
        %2453 = vst.msk [vmem:[#allocation2 + $0x34] sm:$0xf] %vm2439, %v2418
        %2454 = vst.msk [vmem:[#allocation2 + $0x38] sm:$0xf] %vm2439, %v2420
        %2455 = vst.msk [vmem:[#allocation2 + $0x3c] sm:$0xf] %vm2439, %v2422
        %2456 = vrot.lane.b32.xlu0 %v799, 32
        %v2457 = vpop.permute.xlu0 %2456
        %2458 = vrot.lane.b32.xlu0 %v800, 32
        %v2459 = vpop.permute.xlu0 %2458
        %2460 = vrot.lane.b32.xlu0 %v801, 32
        %v2461 = vpop.permute.xlu0 %2460
        %2462 = vrot.lane.b32.xlu0 %v802, 32
        %v2463 = vpop.permute.xlu0 %2462
        %2464 = vrot.lane.b32.xlu0 %v803, 32
        %v2465 = vpop.permute.xlu0 %2464
        %2466 = vrot.lane.b32.xlu0 %v804, 32
        %v2467 = vpop.permute.xlu0 %2466
        %2468 = vrot.lane.b32.xlu0 %v805, 32
        %v2469 = vpop.permute.xlu0 %2468
        %2470 = vrot.lane.b32.xlu0 %v806, 32
        %v2471 = vpop.permute.xlu0 %2470
        %2472 = vrot.lane.b32.xlu0 %v807, 32
        %v2473 = vpop.permute.xlu0 %2472
        %2474 = vrot.lane.b32.xlu0 %v808, 32
        %v2475 = vpop.permute.xlu0 %2474
        %2476 = vrot.lane.b32.xlu0 %v809, 32
        %v2477 = vpop.permute.xlu0 %2476
        %2478 = vrot.lane.b32.xlu0 %v810, 32
        %v2479 = vpop.permute.xlu0 %2478
        %2480 = vrot.lane.b32.xlu0 %v811, 32
        %v2481 = vpop.permute.xlu0 %2480
        %2482 = vrot.lane.b32.xlu0 %v812, 32
        %v2483 = vpop.permute.xlu0 %2482
        %2484 = vrot.lane.b32.xlu0 %v813, 32
        %v2485 = vpop.permute.xlu0 %2484
        %2486 = vrot.lane.b32.xlu0 %v814, 32
        %v2487 = vpop.permute.xlu0 %2486
        %v2489 = vsel %vm830, %v2457, 0
        %v2492 = vsel %vm830, %v2459, 0
        %v2495 = vsel %vm830, %v2461, 0
        %v2498 = vsel %vm830, %v2463, 0
        %v2501 = vsel %vm830, %v2465, 0
        %v2504 = vsel %vm830, %v2467, 0
        %v2507 = vsel %vm830, %v2469, 0
        %v2510 = vsel %vm830, %v2471, 0
        %v2513 = vsel %vm830, %v2473, 0
        %v2516 = vsel %vm830, %v2475, 0
        %v2519 = vsel %vm830, %v2477, 0
        %v2522 = vsel %vm830, %v2479, 0
        %v2525 = vsel %vm830, %v2481, 0
        %v2528 = vsel %vm830, %v2483, 0
        %v2531 = vsel %vm830, %v2485, 0
        %v2534 = vsel %vm830, %v2487, 0
        %2536 = vmatprep.subr.bf16.mxu0 0
        %2537 = vmatpush1.bf16.xpose.msra.mxu0 %v2534
        %2538 = vmatprep.subr.bf16.mxu0 0
        %2539 = vmatpush1.bf16.xpose.msra.mxu0 %v2531
        %2540 = vmatprep.subr.bf16.mxu0 0
        %2541 = vmatpush1.bf16.xpose.msra.mxu0 %v2528
        %2542 = vmatprep.subr.bf16.mxu0 0
        %2543 = vmatpush1.bf16.xpose.msra.mxu0 %v2525
        %2544 = vmatprep.subr.bf16.mxu0 0
        %2545 = vmatpush1.bf16.xpose.msra.mxu0 %v2522
        %2546 = vmatprep.subr.bf16.mxu0 0
        %2547 = vmatpush1.bf16.xpose.msra.mxu0 %v2519
        %2548 = vmatprep.subr.bf16.mxu0 0
        %2549 = vmatpush1.bf16.xpose.msra.mxu0 %v2516
        %2550 = vmatprep.subr.bf16.mxu0 0
        %2551 = vmatpush1.bf16.xpose.msra.mxu0 %v2513
        %2552 = vmatprep.subr.bf16.mxu0 0
        %2553 = vmatpush2.bf16.xpose.msra.mxu0 0
        %2554 = vmatprep.subr.bf16.mxu0 0
        %2555 = vmatpush2.bf16.xpose.msra.mxu0 0
        %2556 = vmatprep.subr.bf16.mxu0 0
        %2557 = vmatpush2.bf16.xpose.msra.mxu0 0
        %2558 = vmatprep.subr.bf16.mxu0 0
        %2559 = vmatpush2.bf16.xpose.msra.mxu0 0
        %2560 = vmatprep.subr.bf16.mxu0 0
        %2561 = vmatpush2.bf16.xpose.msra.mxu0 0
        %2562 = vmatprep.subr.bf16.mxu0 0
        %2563 = vmatpush2.bf16.xpose.msra.mxu0 0
        %2564 = vmatprep.subr.bf16.mxu0 0
        %2565 = vmatpush2.bf16.xpose.msra.mxu0 0
        %2566 = vmatprep.subr.bf16.mxu0 0
        %2567 = vmatpush2.bf16.xpose.msra.mxu0 0
        %2568 = vmatprep.mubr.bf16.mxu0 0
        %2569 = vmatmul.mubr.bf16.gmra.mxu0 %v2489
        %v2570 = vpop.f32.mrf.mxu0
        %v2571 = vadd.f32 %v828, %v2570
        %v2572 = vpop.f32.mrf.mxu0
        %v2573 = vpop.f32.mrf.mxu0
        %v2574 = vadd.f32 %v828, %v2573
        %v2575 = vpop.f32.mrf.mxu0
        %2576 = vmatprep.mubr.bf16.mxu0 0
        %2577 = vmatmul.mubr.bf16.gmra.mxu0 %v2492
        %v2578 = vpop.f32.mrf.mxu0
        %v2579 = vadd.f32 %v828, %v2578
        %v2580 = vpop.f32.mrf.mxu0
        %v2581 = vpop.f32.mrf.mxu0
        %v2582 = vadd.f32 %v828, %v2581
        %v2583 = vpop.f32.mrf.mxu0
        %2584 = vmatprep.mubr.bf16.mxu0 0
        %2585 = vmatmul.mubr.bf16.gmra.mxu0 %v2495
        %v2586 = vpop.f32.mrf.mxu0
        %v2587 = vadd.f32 %v828, %v2586
        %v2588 = vpop.f32.mrf.mxu0
        %v2589 = vpop.f32.mrf.mxu0
        %v2590 = vadd.f32 %v828, %v2589
        %v2591 = vpop.f32.mrf.mxu0
        %2592 = vmatprep.mubr.bf16.mxu0 0
        %2593 = vmatmul.mubr.bf16.gmra.mxu0 %v2498
        %v2594 = vpop.f32.mrf.mxu0
        %v2595 = vadd.f32 %v828, %v2594
        %v2596 = vpop.f32.mrf.mxu0
        %v2597 = vpop.f32.mrf.mxu0
        %v2598 = vadd.f32 %v828, %v2597
        %v2599 = vpop.f32.mrf.mxu0
        %2600 = vmatprep.mubr.bf16.mxu0 0
        %2601 = vmatmul.mubr.bf16.gmra.mxu0 %v2501
        %v2602 = vpop.f32.mrf.mxu0
        %v2603 = vadd.f32 %v828, %v2602
        %v2604 = vpop.f32.mrf.mxu0
        %v2605 = vpop.f32.mrf.mxu0
        %v2606 = vadd.f32 %v828, %v2605
        %v2607 = vpop.f32.mrf.mxu0
        %2608 = vmatprep.mubr.bf16.mxu0 0
        %2609 = vmatmul.mubr.bf16.gmra.mxu0 %v2504
        %v2610 = vpop.f32.mrf.mxu0
        %v2611 = vadd.f32 %v828, %v2610
        %v2612 = vpop.f32.mrf.mxu0
        %v2613 = vpop.f32.mrf.mxu0
        %v2614 = vadd.f32 %v828, %v2613
        %v2615 = vpop.f32.mrf.mxu0
        %2616 = vmatprep.mubr.bf16.mxu0 0
        %2617 = vmatmul.mubr.bf16.gmra.mxu0 %v2507
        %v2618 = vpop.f32.mrf.mxu0
        %v2619 = vadd.f32 %v828, %v2618
        %v2620 = vpop.f32.mrf.mxu0
        %v2621 = vpop.f32.mrf.mxu0
        %v2622 = vadd.f32 %v828, %v2621
        %v2623 = vpop.f32.mrf.mxu0
        %2624 = vmatprep.mubr.bf16.mxu0 0
        %2625 = vmatmul.mubr.bf16.gmra.mxu0 %v2510
        %v2626 = vpop.f32.mrf.mxu0
        %v2627 = vadd.f32 %v828, %v2626
        %v2628 = vpop.f32.mrf.mxu0
        %v2629 = vpop.f32.mrf.mxu0
        %v2630 = vadd.f32 %v828, %v2629
        %v2631 = vpop.f32.mrf.mxu0
        %2632 = vdwg.mxu0
        %2633 = vmax.xlane.f32.xlu0 %v2571
        %v2634 = vpop.xlane.xlu0 %2633
        %2635 = vmax.xlane.f32.xlu0 %v2574
        %v2636 = vpop.xlane.xlu0 %2635
        %2637 = vmax.xlane.f32.xlu0 %v2579
        %v2638 = vpop.xlane.xlu0 %2637
        %2639 = vmax.xlane.f32.xlu0 %v2582
        %v2640 = vpop.xlane.xlu0 %2639
        %2641 = vmax.xlane.f32.xlu0 %v2587
        %v2642 = vpop.xlane.xlu0 %2641
        %2643 = vmax.xlane.f32.xlu0 %v2590
        %v2644 = vpop.xlane.xlu0 %2643
        %2645 = vmax.xlane.f32.xlu0 %v2595
        %v2646 = vpop.xlane.xlu0 %2645
        %2647 = vmax.xlane.f32.xlu0 %v2598
        %v2648 = vpop.xlane.xlu0 %2647
        %2649 = vmax.xlane.f32.xlu0 %v2603
        %v2650 = vpop.xlane.xlu0 %2649
        %2651 = vmax.xlane.f32.xlu0 %v2606
        %v2652 = vpop.xlane.xlu0 %2651
        %2653 = vmax.xlane.f32.xlu0 %v2611
        %v2654 = vpop.xlane.xlu0 %2653
        %2655 = vmax.xlane.f32.xlu0 %v2614
        %v2656 = vpop.xlane.xlu0 %2655
        %2657 = vmax.xlane.f32.xlu0 %v2619
        %v2658 = vpop.xlane.xlu0 %2657
        %2659 = vmax.xlane.f32.xlu0 %v2622
        %v2660 = vpop.xlane.xlu0 %2659
        %2661 = vmax.xlane.f32.xlu0 %v2627
        %v2662 = vpop.xlane.xlu0 %2661
        %2663 = vmax.xlane.f32.xlu0 %v2630
        %v2664 = vpop.xlane.xlu0 %2663
        %v2665 = vsub.f32 %v2571, %v2634
        %v2666 = vsub.f32 %v2574, %v2636
        %v2667 = vsub.f32 %v2579, %v2638
        %v2668 = vsub.f32 %v2582, %v2640
        %v2669 = vsub.f32 %v2587, %v2642
        %v2670 = vsub.f32 %v2590, %v2644
        %v2671 = vsub.f32 %v2595, %v2646
        %v2672 = vsub.f32 %v2598, %v2648
        %v2673 = vsub.f32 %v2603, %v2650
        %v2674 = vsub.f32 %v2606, %v2652
        %v2675 = vsub.f32 %v2611, %v2654
        %v2676 = vsub.f32 %v2614, %v2656
        %v2677 = vsub.f32 %v2619, %v2658
        %v2678 = vsub.f32 %v2622, %v2660
        %v2679 = vsub.f32 %v2627, %v2662
        %v2680 = vsub.f32 %v2630, %v2664
        %v2681 = vmul.f32 %v2665, 1.442695
        %v2682 = vpow.pop %v2681
        %v2683 = vmul.f32 %v2666, 1.442695
        %v2684 = vpow.pop %v2683
        %v2685 = vmul.f32 %v2667, 1.442695
        %v2686 = vpow.pop %v2685
        %v2687 = vmul.f32 %v2668, 1.442695
        %v2688 = vpow.pop %v2687
        %v2689 = vmul.f32 %v2669, 1.442695
        %v2690 = vpow.pop %v2689
        %v2691 = vmul.f32 %v2670, 1.442695
        %v2692 = vpow.pop %v2691
        %v2693 = vmul.f32 %v2671, 1.442695
        %v2694 = vpow.pop %v2693
        %v2695 = vmul.f32 %v2672, 1.442695
        %v2696 = vpow.pop %v2695
        %v2697 = vmul.f32 %v2673, 1.442695
        %v2698 = vpow.pop %v2697
        %v2699 = vmul.f32 %v2674, 1.442695
        %v2700 = vpow.pop %v2699
        %v2701 = vmul.f32 %v2675, 1.442695
        %v2702 = vpow.pop %v2701
        %v2703 = vmul.f32 %v2676, 1.442695
        %v2704 = vpow.pop %v2703
        %v2705 = vmul.f32 %v2677, 1.442695
        %v2706 = vpow.pop %v2705
        %v2707 = vmul.f32 %v2678, 1.442695
        %v2708 = vpow.pop %v2707
        %v2709 = vmul.f32 %v2679, 1.442695
        %v2710 = vpow.pop %v2709
        %v2711 = vmul.f32 %v2680, 1.442695
        %v2712 = vpow.pop %v2711
        %2713 = vadd.xlane.f32.xlu0 %v2682
        %v2714 = vpop.xlane.xlu0 %2713
        %2715 = vadd.xlane.f32.xlu0 %v2684
        %v2716 = vpop.xlane.xlu0 %2715
        %2717 = vadd.xlane.f32.xlu0 %v2686
        %v2718 = vpop.xlane.xlu0 %2717
        %2719 = vadd.xlane.f32.xlu0 %v2688
        %v2720 = vpop.xlane.xlu0 %2719
        %2721 = vadd.xlane.f32.xlu0 %v2690
        %v2722 = vpop.xlane.xlu0 %2721
        %2723 = vadd.xlane.f32.xlu0 %v2692
        %v2724 = vpop.xlane.xlu0 %2723
        %2725 = vadd.xlane.f32.xlu0 %v2694
        %v2726 = vpop.xlane.xlu0 %2725
        %2727 = vadd.xlane.f32.xlu0 %v2696
        %v2728 = vpop.xlane.xlu0 %2727
        %2729 = vadd.xlane.f32.xlu0 %v2698
        %v2730 = vpop.xlane.xlu0 %2729
        %2731 = vadd.xlane.f32.xlu0 %v2700
        %v2732 = vpop.xlane.xlu0 %2731
        %2733 = vadd.xlane.f32.xlu0 %v2702
        %v2734 = vpop.xlane.xlu0 %2733
        %2735 = vadd.xlane.f32.xlu0 %v2704
        %v2736 = vpop.xlane.xlu0 %2735
        %2737 = vadd.xlane.f32.xlu0 %v2706
        %v2738 = vpop.xlane.xlu0 %2737
        %2739 = vadd.xlane.f32.xlu0 %v2708
        %v2740 = vpop.xlane.xlu0 %2739
        %2741 = vadd.xlane.f32.xlu0 %v2710
        %v2742 = vpop.xlane.xlu0 %2741
        %2743 = vadd.xlane.f32.xlu0 %v2712
        %v2744 = vpop.xlane.xlu0 %2743
        %v2745 = vrcp.pop %v2714
        %v2746 = vrcp.pop %v2716
        %v2747 = vrcp.pop %v2718
        %v2748 = vrcp.pop %v2720
        %v2749 = vrcp.pop %v2722
        %v2750 = vrcp.pop %v2724
        %v2751 = vrcp.pop %v2726
        %v2752 = vrcp.pop %v2728
        %v2753 = vrcp.pop %v2730
        %v2754 = vrcp.pop %v2732
        %v2755 = vrcp.pop %v2734
        %v2756 = vrcp.pop %v2736
        %v2757 = vrcp.pop %v2738
        %v2758 = vrcp.pop %v2740
        %v2759 = vrcp.pop %v2742
        %v2760 = vrcp.pop %v2744
        %v2761 = vmul.f32 %v2682, %v2745
        %v2762 = vmul.f32 %v2684, %v2746
        %v2763 = vmul.f32 %v2686, %v2747
        %v2764 = vmul.f32 %v2688, %v2748
        %v2765 = vmul.f32 %v2690, %v2749
        %v2766 = vmul.f32 %v2692, %v2750
        %v2767 = vmul.f32 %v2694, %v2751
        %v2768 = vmul.f32 %v2696, %v2752
        %v2769 = vmul.f32 %v2698, %v2753
        %v2770 = vmul.f32 %v2700, %v2754
        %v2771 = vmul.f32 %v2702, %v2755
        %v2772 = vmul.f32 %v2704, %v2756
        %v2773 = vmul.f32 %v2706, %v2757
        %v2774 = vmul.f32 %v2708, %v2758
        %v2775 = vmul.f32 %v2710, %v2759
        %v2776 = vmul.f32 %v2712, %v2760
        %v2777 = vpack.c.bf16 %v2762, %v2761
        %v2778 = vpack.c.bf16 %v2764, %v2763
        %v2779 = vpack.c.bf16 %v2766, %v2765
        %v2780 = vpack.c.bf16 %v2768, %v2767
        %v2781 = vpack.c.bf16 %v2770, %v2769
        %v2782 = vpack.c.bf16 %v2772, %v2771
        %v2783 = vpack.c.bf16 %v2774, %v2773
        %v2784 = vpack.c.bf16 %v2776, %v2775
        %2785 = vrot.lane.b32.xlu0 %v815, 32
        %v2786 = vpop.permute.xlu0 %2785
        %2787 = vrot.lane.b32.xlu0 %v816, 32
        %v2788 = vpop.permute.xlu0 %2787
        %2789 = vrot.lane.b32.xlu0 %v817, 32
        %v2790 = vpop.permute.xlu0 %2789
        %2791 = vrot.lane.b32.xlu0 %v818, 32
        %v2792 = vpop.permute.xlu0 %2791
        %2793 = vrot.lane.b32.xlu0 %v819, 32
        %v2794 = vpop.permute.xlu0 %2793
        %2795 = vrot.lane.b32.xlu0 %v820, 32
        %v2796 = vpop.permute.xlu0 %2795
        %2797 = vrot.lane.b32.xlu0 %v821, 32
        %v2798 = vpop.permute.xlu0 %2797
        %2799 = vrot.lane.b32.xlu0 %v822, 32
        %v2800 = vpop.permute.xlu0 %2799
        %2809 = vmatprep.subr.bf16.mxu0 0
        %2810 = vmatpush1.bf16.msra.mxu0 %v2800
        %2811 = vmatprep.subr.bf16.mxu0 0
        %2812 = vmatpush1.bf16.msra.mxu0 %v2798
        %2813 = vmatprep.subr.bf16.mxu0 0
        %2814 = vmatpush1.bf16.msra.mxu0 %v2796
        %2815 = vmatprep.subr.bf16.mxu0 0
        %2816 = vmatpush1.bf16.msra.mxu0 %v2794
        %2817 = vmatprep.subr.bf16.mxu0 0
        %2818 = vmatpush1.bf16.msra.mxu0 %v2792
        %2819 = vmatprep.subr.bf16.mxu0 0
        %2820 = vmatpush1.bf16.msra.mxu0 %v2790
        %2821 = vmatprep.subr.bf16.mxu0 0
        %2822 = vmatpush1.bf16.msra.mxu0 %v2788
        %2823 = vmatprep.subr.bf16.mxu0 0
        %2824 = vmatpush1.bf16.msra.mxu0 %v2786
        %2825 = vmatprep.subr.bf16.mxu0 0
        %2826 = vmatpush2.bf16.msra.mxu0 0
        %2827 = vmatprep.subr.bf16.mxu0 0
        %2828 = vmatpush2.bf16.msra.mxu0 0
        %2829 = vmatprep.subr.bf16.mxu0 0
        %2830 = vmatpush2.bf16.msra.mxu0 0
        %2831 = vmatprep.subr.bf16.mxu0 0
        %2832 = vmatpush2.bf16.msra.mxu0 0
        %2833 = vmatprep.subr.bf16.mxu0 0
        %2834 = vmatpush2.bf16.msra.mxu0 0
        %2835 = vmatprep.subr.bf16.mxu0 0
        %2836 = vmatpush2.bf16.msra.mxu0 0
        %2837 = vmatprep.subr.bf16.mxu0 0
        %2838 = vmatpush2.bf16.msra.mxu0 0
        %2839 = vmatprep.subr.bf16.mxu0 0
        %2840 = vmatpush2.bf16.msra.mxu0 0
        %2841 = vmatprep.mubr.bf16.mxu0 0
        %2842 = vmatmul.mubr.bf16.gmra.mxu0 %v2777
        %v2843 = vpop.f32.mrf.mxu0
        %v2844 = vadd.f32 0.0, %v2843
        %v2845 = vpop.f32.mrf.mxu0
        %v2846 = vpop.f32.mrf.mxu0
        %v2847 = vadd.f32 0.0, %v2846
        %v2848 = vpop.f32.mrf.mxu0
        %2849 = vmatprep.mubr.bf16.mxu0 0
        %2850 = vmatmul.mubr.bf16.gmra.mxu0 %v2778
        %v2851 = vpop.f32.mrf.mxu0
        %v2852 = vadd.f32 0.0, %v2851
        %v2853 = vpop.f32.mrf.mxu0
        %v2854 = vpop.f32.mrf.mxu0
        %v2855 = vadd.f32 0.0, %v2854
        %v2856 = vpop.f32.mrf.mxu0
        %2857 = vmatprep.mubr.bf16.mxu0 0
        %2858 = vmatmul.mubr.bf16.gmra.mxu0 %v2779
        %v2859 = vpop.f32.mrf.mxu0
        %v2860 = vadd.f32 0.0, %v2859
        %v2861 = vpop.f32.mrf.mxu0
        %v2862 = vpop.f32.mrf.mxu0
        %v2863 = vadd.f32 0.0, %v2862
        %v2864 = vpop.f32.mrf.mxu0
        %2865 = vmatprep.mubr.bf16.mxu0 0
        %2866 = vmatmul.mubr.bf16.gmra.mxu0 %v2780
        %v2867 = vpop.f32.mrf.mxu0
        %v2868 = vadd.f32 0.0, %v2867
        %v2869 = vpop.f32.mrf.mxu0
        %v2870 = vpop.f32.mrf.mxu0
        %v2871 = vadd.f32 0.0, %v2870
        %v2872 = vpop.f32.mrf.mxu0
        %2873 = vmatprep.mubr.bf16.mxu0 0
        %2874 = vmatmul.mubr.bf16.gmra.mxu0 %v2781
        %v2875 = vpop.f32.mrf.mxu0
        %v2876 = vadd.f32 0.0, %v2875
        %v2877 = vpop.f32.mrf.mxu0
        %v2878 = vpop.f32.mrf.mxu0
        %v2879 = vadd.f32 0.0, %v2878
        %v2880 = vpop.f32.mrf.mxu0
        %2881 = vmatprep.mubr.bf16.mxu0 0
        %2882 = vmatmul.mubr.bf16.gmra.mxu0 %v2782
        %v2883 = vpop.f32.mrf.mxu0
        %v2884 = vadd.f32 0.0, %v2883
        %v2885 = vpop.f32.mrf.mxu0
        %v2886 = vpop.f32.mrf.mxu0
        %v2887 = vadd.f32 0.0, %v2886
        %v2888 = vpop.f32.mrf.mxu0
        %2889 = vmatprep.mubr.bf16.mxu0 0
        %2890 = vmatmul.mubr.bf16.gmra.mxu0 %v2783
        %v2891 = vpop.f32.mrf.mxu0
        %v2892 = vadd.f32 0.0, %v2891
        %v2893 = vpop.f32.mrf.mxu0
        %v2894 = vpop.f32.mrf.mxu0
        %v2895 = vadd.f32 0.0, %v2894
        %v2896 = vpop.f32.mrf.mxu0
        %2897 = vmatprep.mubr.bf16.mxu0 0
        %2898 = vmatmul.mubr.bf16.gmra.mxu0 %v2784
        %v2899 = vpop.f32.mrf.mxu0
        %v2900 = vadd.f32 0.0, %v2899
        %v2901 = vpop.f32.mrf.mxu0
        %v2902 = vpop.f32.mrf.mxu0
        %v2903 = vadd.f32 0.0, %v2902
        %v2904 = vpop.f32.mrf.mxu0
        %2905 = vdwg.mxu0
        %v2906 = vpack.c.bf16 %v2847, %v2844
        %v2907 = vpack.c.bf16 %v2855, %v2852
        %v2908 = vpack.c.bf16 %v2863, %v2860
        %v2909 = vpack.c.bf16 %v2871, %v2868
        %v2910 = vpack.c.bf16 %v2879, %v2876
        %v2911 = vpack.c.bf16 %v2887, %v2884
        %v2912 = vpack.c.bf16 %v2895, %v2892
        %v2913 = vpack.c.bf16 %v2903, %v2900
        %v2922 = vunpack.c.l.b16 %v2906
        %v2923 = vunpack.c.h.b16 %v2906
        %v2924 = vunpack.c.l.b16 %v2907
        %v2925 = vunpack.c.h.b16 %v2907
        %v2926 = vunpack.c.l.b16 %v2908
        %v2927 = vunpack.c.h.b16 %v2908
        %v2928 = vunpack.c.l.b16 %v2909
        %v2929 = vunpack.c.h.b16 %v2909
        %v2930 = vunpack.c.l.b16 %v2910
        %v2931 = vunpack.c.h.b16 %v2910
        %v2932 = vunpack.c.l.b16 %v2911
        %v2933 = vunpack.c.h.b16 %v2911
        %v2934 = vunpack.c.l.b16 %v2912
        %v2935 = vunpack.c.h.b16 %v2912
        %v2936 = vunpack.c.l.b16 %v2913
        %v2937 = vunpack.c.h.b16 %v2913
        %v2938 = vpack.c.b16 %v2922, %v2922
        %v2939 = vpack.c.b16 %v2923, %v2923
        %v2940 = vpack.c.b16 %v2924, %v2924
        %v2941 = vpack.c.b16 %v2925, %v2925
        %v2942 = vpack.c.b16 %v2926, %v2926
        %v2943 = vpack.c.b16 %v2927, %v2927
        %v2944 = vpack.c.b16 %v2928, %v2928
        %v2945 = vpack.c.b16 %v2929, %v2929
        %v2946 = vpack.c.b16 %v2930, %v2930
        %v2947 = vpack.c.b16 %v2931, %v2931
        %v2948 = vpack.c.b16 %v2932, %v2932
        %v2949 = vpack.c.b16 %v2933, %v2933
        %v2950 = vpack.c.b16 %v2934, %v2934
        %v2951 = vpack.c.b16 %v2935, %v2935
        %v2952 = vpack.c.b16 %v2936, %v2936
        %v2953 = vpack.c.b16 %v2937, %v2937
        %2954 = vrot.lane.b32.xlu0 %v2938, 96
        %v2955 = vpop.permute.xlu0 %2954
        %2956 = vrot.lane.b32.xlu0 %v2939, 96
        %v2957 = vpop.permute.xlu0 %2956
        %2958 = vrot.lane.b32.xlu0 %v2940, 96
        %v2959 = vpop.permute.xlu0 %2958
        %2960 = vrot.lane.b32.xlu0 %v2941, 96
        %v2961 = vpop.permute.xlu0 %2960
        %2962 = vrot.lane.b32.xlu0 %v2942, 96
        %v2963 = vpop.permute.xlu0 %2962
        %2964 = vrot.lane.b32.xlu0 %v2943, 96
        %v2965 = vpop.permute.xlu0 %2964
        %2966 = vrot.lane.b32.xlu0 %v2944, 96
        %v2967 = vpop.permute.xlu0 %2966
        %2968 = vrot.lane.b32.xlu0 %v2945, 96
        %v2969 = vpop.permute.xlu0 %2968
        %2970 = vrot.lane.b32.xlu0 %v2946, 96
        %v2971 = vpop.permute.xlu0 %2970
        %2972 = vrot.lane.b32.xlu0 %v2947, 96
        %v2973 = vpop.permute.xlu0 %2972
        %2974 = vrot.lane.b32.xlu0 %v2948, 96
        %v2975 = vpop.permute.xlu0 %2974
        %2976 = vrot.lane.b32.xlu0 %v2949, 96
        %v2977 = vpop.permute.xlu0 %2976
        %2978 = vrot.lane.b32.xlu0 %v2950, 96
        %v2979 = vpop.permute.xlu0 %2978
        %2980 = vrot.lane.b32.xlu0 %v2951, 96
        %v2981 = vpop.permute.xlu0 %2980
        %2982 = vrot.lane.b32.xlu0 %v2952, 96
        %v2983 = vpop.permute.xlu0 %2982
        %2984 = vrot.lane.b32.xlu0 %v2953, 96
        %v2985 = vpop.permute.xlu0 %2984
        %vm3002 = vcmask 1044224
        %3003 = vst.msk [vmem:[#allocation2] sm:$0xf] %vm3002, %v2955
        %3004 = vst.msk [vmem:[#allocation2 + $0x4] sm:$0xf] %vm3002, %v2957
        %3005 = vst.msk [vmem:[#allocation2 + $0x8] sm:$0xf] %vm3002, %v2959
        %3006 = vst.msk [vmem:[#allocation2 + $0xc] sm:$0xf] %vm3002, %v2961
        %3007 = vst.msk [vmem:[#allocation2 + $0x10] sm:$0xf] %vm3002, %v2963
        %3008 = vst.msk [vmem:[#allocation2 + $0x14] sm:$0xf] %vm3002, %v2965
        %3009 = vst.msk [vmem:[#allocation2 + $0x18] sm:$0xf] %vm3002, %v2967
        %3010 = vst.msk [vmem:[#allocation2 + $0x1c] sm:$0xf] %vm3002, %v2969
        %3011 = vst.msk [vmem:[#allocation2 + $0x20] sm:$0xf] %vm3002, %v2971
        %3012 = vst.msk [vmem:[#allocation2 + $0x24] sm:$0xf] %vm3002, %v2973
        %3013 = vst.msk [vmem:[#allocation2 + $0x28] sm:$0xf] %vm3002, %v2975
        %3014 = vst.msk [vmem:[#allocation2 + $0x2c] sm:$0xf] %vm3002, %v2977
        %3015 = vst.msk [vmem:[#allocation2 + $0x30] sm:$0xf] %vm3002, %v2979
        %3016 = vst.msk [vmem:[#allocation2 + $0x34] sm:$0xf] %vm3002, %v2981
        %3017 = vst.msk [vmem:[#allocation2 + $0x38] sm:$0xf] %vm3002, %v2983
        %3018 = vst.msk [vmem:[#allocation2 + $0x3c] sm:$0xf] %vm3002, %v2985
        %v3019 = vld [vmem:[#allocation2] sm:$0xf]
        %v3020 = vld [vmem:[#allocation2 + $0x4] sm:$0xf]
        %v3021 = vld [vmem:[#allocation2 + $0x8] sm:$0xf]
        %v3022 = vld [vmem:[#allocation2 + $0xc] sm:$0xf]
        %v3023 = vld [vmem:[#allocation2 + $0x10] sm:$0xf]
        %v3024 = vld [vmem:[#allocation2 + $0x14] sm:$0xf]
        %v3025 = vld [vmem:[#allocation2 + $0x18] sm:$0xf]
        %v3026 = vld [vmem:[#allocation2 + $0x1c] sm:$0xf]
        %v3027 = vld [vmem:[#allocation2 + $0x20] sm:$0xf]
        %v3028 = vld [vmem:[#allocation2 + $0x24] sm:$0xf]
        %v3029 = vld [vmem:[#allocation2 + $0x28] sm:$0xf]
        %v3030 = vld [vmem:[#allocation2 + $0x2c] sm:$0xf]
        %v3031 = vld [vmem:[#allocation2 + $0x30] sm:$0xf]
        %v3032 = vld [vmem:[#allocation2 + $0x34] sm:$0xf]
        %v3033 = vld [vmem:[#allocation2 + $0x38] sm:$0xf]
        %v3034 = vld [vmem:[#allocation2 + $0x3c] sm:$0xf]
        %v3035 = vld [vmem:[#allocation9] sm:$0xf]
        %v3036 = vld [vmem:[#allocation9 + $0x4] sm:$0xf]
        %v3037 = vld [vmem:[#allocation9 + $0x8] sm:$0xf]
        %v3038 = vld [vmem:[#allocation9 + $0xc] sm:$0xf]
        %v3039 = vld [vmem:[#allocation9 + $0x10] sm:$0xf]
        %v3040 = vld [vmem:[#allocation9 + $0x14] sm:$0xf]
        %v3041 = vld [vmem:[#allocation9 + $0x18] sm:$0xf]
        %v3042 = vld [vmem:[#allocation9 + $0x1c] sm:$0xf]
        %v3043 = vld [vmem:[#allocation9 + $0x20] sm:$0xf]
        %v3044 = vld [vmem:[#allocation9 + $0x24] sm:$0xf]
        %v3045 = vld [vmem:[#allocation9 + $0x28] sm:$0xf]
        %v3046 = vld [vmem:[#allocation9 + $0x2c] sm:$0xf]
        %v3047 = vld [vmem:[#allocation9 + $0x30] sm:$0xf]
        %v3048 = vld [vmem:[#allocation9 + $0x34] sm:$0xf]
        %v3049 = vld [vmem:[#allocation9 + $0x38] sm:$0xf]
        %v3050 = vld [vmem:[#allocation9 + $0x3c] sm:$0xf]
        %v3051 = vld [vmem:[%s5] sm:$0x1]
        %v3053 = vlaneseq
        %v3054 = vshrl.u32 %v3053, 7
        %v3055 = vsub.s32 0, %v3054
        %v3056 = vrot.slane %v3051, %v3055
        %v3074 = vunpack.c.l.b16 %v3019
        %v3075 = vunpack.c.l.b16 %v3020
        %v3076 = vunpack.c.l.b16 %v3021
        %v3077 = vunpack.c.l.b16 %v3022
        %v3078 = vunpack.c.l.b16 %v3023
        %v3079 = vunpack.c.l.b16 %v3024
        %v3080 = vunpack.c.l.b16 %v3025
        %v3081 = vunpack.c.l.b16 %v3026
        %v3082 = vunpack.c.l.b16 %v3027
        %v3083 = vunpack.c.l.b16 %v3028
        %v3084 = vunpack.c.l.b16 %v3029
        %v3085 = vunpack.c.l.b16 %v3030
        %v3086 = vunpack.c.l.b16 %v3031
        %v3087 = vunpack.c.l.b16 %v3032
        %v3088 = vunpack.c.l.b16 %v3033
        %v3089 = vunpack.c.l.b16 %v3034
        %v3090 = vpack.c.b16 %v3075, %v3074
        %v3091 = vpack.c.b16 %v3077, %v3076
        %v3092 = vpack.c.b16 %v3079, %v3078
        %v3093 = vpack.c.b16 %v3081, %v3080
        %v3094 = vpack.c.b16 %v3083, %v3082
        %v3095 = vpack.c.b16 %v3085, %v3084
        %v3096 = vpack.c.b16 %v3087, %v3086
        %v3097 = vpack.c.b16 %v3089, %v3088
        %v3122 = vunpack.c.l.b16 %v3035
        %v3123 = vunpack.c.l.b16 %v3036
        %v3124 = vunpack.c.l.b16 %v3037
        %v3125 = vunpack.c.l.b16 %v3038
        %v3126 = vunpack.c.l.b16 %v3039
        %v3127 = vunpack.c.l.b16 %v3040
        %v3128 = vunpack.c.l.b16 %v3041
        %v3129 = vunpack.c.l.b16 %v3042
        %v3130 = vunpack.c.l.b16 %v3043
        %v3131 = vunpack.c.l.b16 %v3044
        %v3132 = vunpack.c.l.b16 %v3045
        %v3133 = vunpack.c.l.b16 %v3046
        %v3134 = vunpack.c.l.b16 %v3047
        %v3135 = vunpack.c.l.b16 %v3048
        %v3136 = vunpack.c.l.b16 %v3049
        %v3137 = vunpack.c.l.b16 %v3050
        %v3138 = vpack.c.b16 %v3123, %v3122
        %v3139 = vpack.c.b16 %v3125, %v3124
        %v3140 = vpack.c.b16 %v3127, %v3126
        %v3141 = vpack.c.b16 %v3129, %v3128
        %v3142 = vpack.c.b16 %v3131, %v3130
        %v3143 = vpack.c.b16 %v3133, %v3132
        %v3144 = vpack.c.b16 %v3135, %v3134
        %v3145 = vpack.c.b16 %v3137, %v3136
        %3154 = vmatprep.subr.bf16.mxu0 0
        %3155 = vmatpush1.bf16.msra.mxu0 %v3145
        %3156 = vmatprep.subr.bf16.mxu0 0
        %3157 = vmatpush1.bf16.msra.mxu0 %v3144
        %3158 = vmatprep.subr.bf16.mxu0 0
        %3159 = vmatpush1.bf16.msra.mxu0 %v3143
        %3160 = vmatprep.subr.bf16.mxu0 0
        %3161 = vmatpush1.bf16.msra.mxu0 %v3142
        %3162 = vmatprep.subr.bf16.mxu0 0
        %3163 = vmatpush1.bf16.msra.mxu0 %v3141
        %3164 = vmatprep.subr.bf16.mxu0 0
        %3165 = vmatpush1.bf16.msra.mxu0 %v3140
        %3166 = vmatprep.subr.bf16.mxu0 0
        %3167 = vmatpush1.bf16.msra.mxu0 %v3139
        %3168 = vmatprep.subr.bf16.mxu0 0
        %3169 = vmatpush1.bf16.msra.mxu0 %v3138
        %3170 = vmatprep.subr.bf16.mxu0 0
        %3171 = vmatpush2.bf16.msra.mxu0 0
        %3172 = vmatprep.subr.bf16.mxu0 0
        %3173 = vmatpush2.bf16.msra.mxu0 0
        %3174 = vmatprep.subr.bf16.mxu0 0
        %3175 = vmatpush2.bf16.msra.mxu0 0
        %3176 = vmatprep.subr.bf16.mxu0 0
        %3177 = vmatpush2.bf16.msra.mxu0 0
        %3178 = vmatprep.subr.bf16.mxu0 0
        %3179 = vmatpush2.bf16.msra.mxu0 0
        %3180 = vmatprep.subr.bf16.mxu0 0
        %3181 = vmatpush2.bf16.msra.mxu0 0
        %3182 = vmatprep.subr.bf16.mxu0 0
        %3183 = vmatpush2.bf16.msra.mxu0 0
        %3184 = vmatprep.subr.bf16.mxu0 0
        %3185 = vmatpush2.bf16.msra.mxu0 0
        %3186 = vmatprep.mubr.bf16.mxu0 0
        %3187 = vmatmul.mubr.bf16.gmra.mxu0 %v3090
        %v3188 = vpop.f32.mrf.mxu0
        %v3189 = vadd.f32 %v3056, %v3188
        %v3190 = vpop.f32.mrf.mxu0
        %v3191 = vpop.f32.mrf.mxu0
        %v3192 = vadd.f32 %v3056, %v3191
        %v3193 = vpop.f32.mrf.mxu0
        %3194 = vmatprep.mubr.bf16.mxu0 0
        %3195 = vmatmul.mubr.bf16.gmra.mxu0 %v3091
        %v3196 = vpop.f32.mrf.mxu0
        %v3197 = vadd.f32 %v3056, %v3196
        %v3198 = vpop.f32.mrf.mxu0
        %v3199 = vpop.f32.mrf.mxu0
        %v3200 = vadd.f32 %v3056, %v3199
        %v3201 = vpop.f32.mrf.mxu0
        %3202 = vmatprep.mubr.bf16.mxu0 0
        %3203 = vmatmul.mubr.bf16.gmra.mxu0 %v3092
        %v3204 = vpop.f32.mrf.mxu0
        %v3205 = vadd.f32 %v3056, %v3204
        %v3206 = vpop.f32.mrf.mxu0
        %v3207 = vpop.f32.mrf.mxu0
        %v3208 = vadd.f32 %v3056, %v3207
        %v3209 = vpop.f32.mrf.mxu0
        %3210 = vmatprep.mubr.bf16.mxu0 0
        %3211 = vmatmul.mubr.bf16.gmra.mxu0 %v3093
        %v3212 = vpop.f32.mrf.mxu0
        %v3213 = vadd.f32 %v3056, %v3212
        %v3214 = vpop.f32.mrf.mxu0
        %v3215 = vpop.f32.mrf.mxu0
        %v3216 = vadd.f32 %v3056, %v3215
        %v3217 = vpop.f32.mrf.mxu0
        %3218 = vmatprep.mubr.bf16.mxu0 0
        %3219 = vmatmul.mubr.bf16.gmra.mxu0 %v3094
        %v3220 = vpop.f32.mrf.mxu0
        %v3221 = vadd.f32 %v3056, %v3220
        %v3222 = vpop.f32.mrf.mxu0
        %v3223 = vpop.f32.mrf.mxu0
        %v3224 = vadd.f32 %v3056, %v3223
        %v3225 = vpop.f32.mrf.mxu0
        %3226 = vmatprep.mubr.bf16.mxu0 0
        %3227 = vmatmul.mubr.bf16.gmra.mxu0 %v3095
        %v3228 = vpop.f32.mrf.mxu0
        %v3229 = vadd.f32 %v3056, %v3228
        %v3230 = vpop.f32.mrf.mxu0
        %v3231 = vpop.f32.mrf.mxu0
        %v3232 = vadd.f32 %v3056, %v3231
        %v3233 = vpop.f32.mrf.mxu0
        %3234 = vmatprep.mubr.bf16.mxu0 0
        %3235 = vmatmul.mubr.bf16.gmra.mxu0 %v3096
        %v3236 = vpop.f32.mrf.mxu0
        %v3237 = vadd.f32 %v3056, %v3236
        %v3238 = vpop.f32.mrf.mxu0
        %v3239 = vpop.f32.mrf.mxu0
        %v3240 = vadd.f32 %v3056, %v3239
        %v3241 = vpop.f32.mrf.mxu0
        %3242 = vmatprep.mubr.bf16.mxu0 0
        %3243 = vmatmul.mubr.bf16.gmra.mxu0 %v3097
        %v3244 = vpop.f32.mrf.mxu0
        %v3245 = vadd.f32 %v3056, %v3244
        %v3246 = vpop.f32.mrf.mxu0
        %v3247 = vpop.f32.mrf.mxu0
        %v3248 = vadd.f32 %v3056, %v3247
        %v3249 = vpop.f32.mrf.mxu0
        %3250 = vdwg.mxu0
        %v3251 = vadd.f32 %v3189, %v388
        %v3252 = vadd.f32 %v3192, %v389
        %v3253 = vadd.f32 %v3197, %v390
        %v3254 = vadd.f32 %v3200, %v391
        %v3255 = vadd.f32 %v3205, %v392
        %v3256 = vadd.f32 %v3208, %v393
        %v3257 = vadd.f32 %v3213, %v394
        %v3258 = vadd.f32 %v3216, %v395
        %v3259 = vadd.f32 %v3221, %v396
        %v3260 = vadd.f32 %v3224, %v397
        %v3261 = vadd.f32 %v3229, %v398
        %v3262 = vadd.f32 %v3232, %v399
        %v3263 = vadd.f32 %v3237, %v400
        %v3264 = vadd.f32 %v3240, %v401
        %v3265 = vadd.f32 %v3245, %v402
        %v3266 = vadd.f32 %v3248, %v403
        %v3267 = vld [vmem:[%s6] sm:$0x1]
        %v3268 = vld [vmem:[%s7] sm:$0x1]
        %3269 = vadd.xlane.f32.xlu0 %v3251
        %v3270 = vpop.xlane.xlu0 %3269
        %3271 = vadd.xlane.f32.xlu0 %v3252
        %v3272 = vpop.xlane.xlu0 %3271
        %3273 = vadd.xlane.f32.xlu0 %v3253
        %v3274 = vpop.xlane.xlu0 %3273
        %3275 = vadd.xlane.f32.xlu0 %v3254
        %v3276 = vpop.xlane.xlu0 %3275
        %3277 = vadd.xlane.f32.xlu0 %v3255
        %v3278 = vpop.xlane.xlu0 %3277
        %3279 = vadd.xlane.f32.xlu0 %v3256
        %v3280 = vpop.xlane.xlu0 %3279
        %3281 = vadd.xlane.f32.xlu0 %v3257
        %v3282 = vpop.xlane.xlu0 %3281
        %3283 = vadd.xlane.f32.xlu0 %v3258
        %v3284 = vpop.xlane.xlu0 %3283
        %3285 = vadd.xlane.f32.xlu0 %v3259
        %v3286 = vpop.xlane.xlu0 %3285
        %3287 = vadd.xlane.f32.xlu0 %v3260
        %v3288 = vpop.xlane.xlu0 %3287
        %3289 = vadd.xlane.f32.xlu0 %v3261
        %v3290 = vpop.xlane.xlu0 %3289
        %3291 = vadd.xlane.f32.xlu0 %v3262
        %v3292 = vpop.xlane.xlu0 %3291
        %3293 = vadd.xlane.f32.xlu0 %v3263
        %v3294 = vpop.xlane.xlu0 %3293
        %3295 = vadd.xlane.f32.xlu0 %v3264
        %v3296 = vpop.xlane.xlu0 %3295
        %3297 = vadd.xlane.f32.xlu0 %v3265
        %v3298 = vpop.xlane.xlu0 %3297
        %3299 = vadd.xlane.f32.xlu0 %v3266
        %v3300 = vpop.xlane.xlu0 %3299
        %v3301 = vrcp.pop 128.0
        %v3302 = vmul.f32 %v3270, %v3301
        %v3303 = vmul.f32 %v3272, %v3301
        %v3304 = vmul.f32 %v3274, %v3301
        %v3305 = vmul.f32 %v3276, %v3301
        %v3306 = vmul.f32 %v3278, %v3301
        %v3307 = vmul.f32 %v3280, %v3301
        %v3308 = vmul.f32 %v3282, %v3301
        %v3309 = vmul.f32 %v3284, %v3301
        %v3310 = vmul.f32 %v3286, %v3301
        %v3311 = vmul.f32 %v3288, %v3301
        %v3312 = vmul.f32 %v3290, %v3301
        %v3313 = vmul.f32 %v3292, %v3301
        %v3314 = vmul.f32 %v3294, %v3301
        %v3315 = vmul.f32 %v3296, %v3301
        %v3316 = vmul.f32 %v3298, %v3301
        %v3317 = vmul.f32 %v3300, %v3301
        %v3318 = vsub.f32 %v3251, %v3302
        %v3319 = vsub.f32 %v3252, %v3303
        %v3320 = vsub.f32 %v3253, %v3304
        %v3321 = vsub.f32 %v3254, %v3305
        %v3322 = vsub.f32 %v3255, %v3306
        %v3323 = vsub.f32 %v3256, %v3307
        %v3324 = vsub.f32 %v3257, %v3308
        %v3325 = vsub.f32 %v3258, %v3309
        %v3326 = vsub.f32 %v3259, %v3310
        %v3327 = vsub.f32 %v3260, %v3311
        %v3328 = vsub.f32 %v3261, %v3312
        %v3329 = vsub.f32 %v3262, %v3313
        %v3330 = vsub.f32 %v3263, %v3314
        %v3331 = vsub.f32 %v3264, %v3315
        %v3332 = vsub.f32 %v3265, %v3316
        %v3333 = vsub.f32 %v3266, %v3317
        %v3334 = vmul.f32 %v3318, %v3318
        %v3335 = vmul.f32 %v3319, %v3319
        %v3336 = vmul.f32 %v3320, %v3320
        %v3337 = vmul.f32 %v3321, %v3321
        %v3338 = vmul.f32 %v3322, %v3322
        %v3339 = vmul.f32 %v3323, %v3323
        %v3340 = vmul.f32 %v3324, %v3324
        %v3341 = vmul.f32 %v3325, %v3325
        %v3342 = vmul.f32 %v3326, %v3326
        %v3343 = vmul.f32 %v3327, %v3327
        %v3344 = vmul.f32 %v3328, %v3328
        %v3345 = vmul.f32 %v3329, %v3329
        %v3346 = vmul.f32 %v3330, %v3330
        %v3347 = vmul.f32 %v3331, %v3331
        %v3348 = vmul.f32 %v3332, %v3332
        %v3349 = vmul.f32 %v3333, %v3333
        %3350 = vadd.xlane.f32.xlu0 %v3334
        %v3351 = vpop.xlane.xlu0 %3350
        %3352 = vadd.xlane.f32.xlu0 %v3335
        %v3353 = vpop.xlane.xlu0 %3352
        %3354 = vadd.xlane.f32.xlu0 %v3336
        %v3355 = vpop.xlane.xlu0 %3354
        %3356 = vadd.xlane.f32.xlu0 %v3337
        %v3357 = vpop.xlane.xlu0 %3356
        %3358 = vadd.xlane.f32.xlu0 %v3338
        %v3359 = vpop.xlane.xlu0 %3358
        %3360 = vadd.xlane.f32.xlu0 %v3339
        %v3361 = vpop.xlane.xlu0 %3360
        %3362 = vadd.xlane.f32.xlu0 %v3340
        %v3363 = vpop.xlane.xlu0 %3362
        %3364 = vadd.xlane.f32.xlu0 %v3341
        %v3365 = vpop.xlane.xlu0 %3364
        %3366 = vadd.xlane.f32.xlu0 %v3342
        %v3367 = vpop.xlane.xlu0 %3366
        %3368 = vadd.xlane.f32.xlu0 %v3343
        %v3369 = vpop.xlane.xlu0 %3368
        %3370 = vadd.xlane.f32.xlu0 %v3344
        %v3371 = vpop.xlane.xlu0 %3370
        %3372 = vadd.xlane.f32.xlu0 %v3345
        %v3373 = vpop.xlane.xlu0 %3372
        %3374 = vadd.xlane.f32.xlu0 %v3346
        %v3375 = vpop.xlane.xlu0 %3374
        %3376 = vadd.xlane.f32.xlu0 %v3347
        %v3377 = vpop.xlane.xlu0 %3376
        %3378 = vadd.xlane.f32.xlu0 %v3348
        %v3379 = vpop.xlane.xlu0 %3378
        %3380 = vadd.xlane.f32.xlu0 %v3349
        %v3381 = vpop.xlane.xlu0 %3380
        %v3382 = vmul.f32 %v3351, %v3301
        %v3383 = vmul.f32 %v3353, %v3301
        %v3384 = vmul.f32 %v3355, %v3301
        %v3385 = vmul.f32 %v3357, %v3301
        %v3386 = vmul.f32 %v3359, %v3301
        %v3387 = vmul.f32 %v3361, %v3301
        %v3388 = vmul.f32 %v3363, %v3301
        %v3389 = vmul.f32 %v3365, %v3301
        %v3390 = vmul.f32 %v3367, %v3301
        %v3391 = vmul.f32 %v3369, %v3301
        %v3392 = vmul.f32 %v3371, %v3301
        %v3393 = vmul.f32 %v3373, %v3301
        %v3394 = vmul.f32 %v3375, %v3301
        %v3395 = vmul.f32 %v3377, %v3301
        %v3396 = vmul.f32 %v3379, %v3301
        %v3397 = vmul.f32 %v3381, %v3301
        %v3398 = vadd.f32 %v3382, 1e-05
        %v3399 = vadd.f32 %v3383, 1e-05
        %v3400 = vadd.f32 %v3384, 1e-05
        %v3401 = vadd.f32 %v3385, 1e-05
        %v3402 = vadd.f32 %v3386, 1e-05
        %v3403 = vadd.f32 %v3387, 1e-05
        %v3404 = vadd.f32 %v3388, 1e-05
        %v3405 = vadd.f32 %v3389, 1e-05
        %v3406 = vadd.f32 %v3390, 1e-05
        %v3407 = vadd.f32 %v3391, 1e-05
        %v3408 = vadd.f32 %v3392, 1e-05
        %v3409 = vadd.f32 %v3393, 1e-05
        %v3410 = vadd.f32 %v3394, 1e-05
        %v3411 = vadd.f32 %v3395, 1e-05
        %v3412 = vadd.f32 %v3396, 1e-05
        %v3413 = vadd.f32 %v3397, 1e-05
        %v3414 = vrsqrt.pop %v3398
        %v3415 = vrsqrt.pop %v3399
        %v3416 = vrsqrt.pop %v3400
        %v3417 = vrsqrt.pop %v3401
        %v3418 = vrsqrt.pop %v3402
        %v3419 = vrsqrt.pop %v3403
        %v3420 = vrsqrt.pop %v3404
        %v3421 = vrsqrt.pop %v3405
        %v3422 = vrsqrt.pop %v3406
        %v3423 = vrsqrt.pop %v3407
        %v3424 = vrsqrt.pop %v3408
        %v3425 = vrsqrt.pop %v3409
        %v3426 = vrsqrt.pop %v3410
        %v3427 = vrsqrt.pop %v3411
        %v3428 = vrsqrt.pop %v3412
        %v3429 = vrsqrt.pop %v3413
        %v3430 = vmul.f32 %v3318, %v3414
        %v3431 = vmul.f32 %v3319, %v3415
        %v3432 = vmul.f32 %v3320, %v3416
        %v3433 = vmul.f32 %v3321, %v3417
        %v3434 = vmul.f32 %v3322, %v3418
        %v3435 = vmul.f32 %v3323, %v3419
        %v3436 = vmul.f32 %v3324, %v3420
        %v3437 = vmul.f32 %v3325, %v3421
        %v3438 = vmul.f32 %v3326, %v3422
        %v3439 = vmul.f32 %v3327, %v3423
        %v3440 = vmul.f32 %v3328, %v3424
        %v3441 = vmul.f32 %v3329, %v3425
        %v3442 = vmul.f32 %v3330, %v3426
        %v3443 = vmul.f32 %v3331, %v3427
        %v3444 = vmul.f32 %v3332, %v3428
        %v3445 = vmul.f32 %v3333, %v3429
        %v3447 = vlaneseq
        %v3448 = vshrl.u32 %v3447, 7
        %v3449 = vsub.s32 0, %v3448
        %v3450 = vrot.slane %v3267, %v3449
        %v3452 = vmul.f32 %v3430, %v3450
        %v3453 = vmul.f32 %v3431, %v3450
        %v3454 = vmul.f32 %v3432, %v3450
        %v3455 = vmul.f32 %v3433, %v3450
        %v3456 = vmul.f32 %v3434, %v3450
        %v3457 = vmul.f32 %v3435, %v3450
        %v3458 = vmul.f32 %v3436, %v3450
        %v3459 = vmul.f32 %v3437, %v3450
        %v3460 = vmul.f32 %v3438, %v3450
        %v3461 = vmul.f32 %v3439, %v3450
        %v3462 = vmul.f32 %v3440, %v3450
        %v3463 = vmul.f32 %v3441, %v3450
        %v3464 = vmul.f32 %v3442, %v3450
        %v3465 = vmul.f32 %v3443, %v3450
        %v3466 = vmul.f32 %v3444, %v3450
        %v3467 = vmul.f32 %v3445, %v3450
        %v3469 = vlaneseq
        %v3470 = vshrl.u32 %v3469, 7
        %v3471 = vsub.s32 0, %v3470
        %v3472 = vrot.slane %v3268, %v3471
        %v3474 = vadd.f32 %v3452, %v3472
        %v3475 = vadd.f32 %v3453, %v3472
        %v3476 = vadd.f32 %v3454, %v3472
        %v3477 = vadd.f32 %v3455, %v3472
        %v3478 = vadd.f32 %v3456, %v3472
        %v3479 = vadd.f32 %v3457, %v3472
        %v3480 = vadd.f32 %v3458, %v3472
        %v3481 = vadd.f32 %v3459, %v3472
        %v3482 = vadd.f32 %v3460, %v3472
        %v3483 = vadd.f32 %v3461, %v3472
        %v3484 = vadd.f32 %v3462, %v3472
        %v3485 = vadd.f32 %v3463, %v3472
        %v3486 = vadd.f32 %v3464, %v3472
        %v3487 = vadd.f32 %v3465, %v3472
        %v3488 = vadd.f32 %v3466, %v3472
        %v3489 = vadd.f32 %v3467, %v3472
        %3490 = vst [vmem:[%s386] sm:$0xff] %v3474
        %3491 = vst [vmem:[%s386 + $0x8] sm:$0xff] %v3475
        %3492 = vst [vmem:[%s386 + $0x10] sm:$0xff] %v3476
        %3493 = vst [vmem:[%s386 + $0x18] sm:$0xff] %v3477
        %3494 = vst [vmem:[%s386 + $0x20] sm:$0xff] %v3478
        %3495 = vst [vmem:[%s386 + $0x28] sm:$0xff] %v3479
        %3496 = vst [vmem:[%s386 + $0x30] sm:$0xff] %v3480
        %3497 = vst [vmem:[%s386 + $0x38] sm:$0xff] %v3481
        %3498 = vst [vmem:[%s386 + $0x40] sm:$0xff] %v3482
        %3499 = vst [vmem:[%s386 + $0x48] sm:$0xff] %v3483
        %3500 = vst [vmem:[%s386 + $0x50] sm:$0xff] %v3484
        %3501 = vst [vmem:[%s386 + $0x58] sm:$0xff] %v3485
        %3502 = vst [vmem:[%s386 + $0x60] sm:$0xff] %v3486
        %3503 = vst [vmem:[%s386 + $0x68] sm:$0xff] %v3487
        %3504 = vst [vmem:[%s386 + $0x70] sm:$0xff] %v3488
        %3505 = vst [vmem:[%s386 + $0x78] sm:$0xff] %v3489
        %s3506 = sand.u32 %s215, 1
        %s3507 = scalar_lea.sflag [#allocation5], %s3506
        %s3508 = sand.u32 %s215, 1
        %s3509 = smul.addr %s3508, 128
        %s3510 = scalar_lea.vmem [#allocation11], %s3509
        // Predicated region
        $region69: #{tpu_custom_call.1} parent=51 // pred_check
          %p3511 = pneg %p225
        $region70: #{tpu_custom_call.1} parent=51 // pred_check_branch
          %3513 = sbr.rel (%p3511) target = $region72
        $region71: #{tpu_custom_call.1} parent=51 // pred_region
          %s3515 = ssub.s32 2048, 2048
          %3516 = vsyncadd %s3507, %s3515
          %s3517 = smul.addr %s29, 16
          %s3518 = smul.addr %s3517, 128
          %s3519 = scalar_lea.hbm %s8, %s3518
          %s3520 = sshll.u32 %s3510, 4
          %s3521 = int_to_ptr.vmem [resolvable:$true] %s3520
          %3526 = dma.vmem_to_hbm [thread:$0]  %s3521, 2048, %s3519, %s3507, 128, 128, 8
        $region72: #{tpu_custom_call.1} parent=51 // pred_fallthru
          _
      $region52: #{tpu_custom_call.1} parent=5 // pred_fallthru
        _
      %p3527 = scmp.le.s32.totalorder 2, %s24
      // Predicated region
      $region73: #{tpu_custom_call.1} parent=5 // pred_check
        %p3528 = pneg %p3527
      $region74: #{tpu_custom_call.1} parent=5 // pred_check_branch
        %3530 = sbr.rel (%p3528) target = $region76
      $region75: #{tpu_custom_call.1} parent=5 // pred_region
        %s3531 = ssub.s32 %s24, 2
        // Predicated region
        $region77: #{tpu_custom_call.1} parent=75 // pred_check
          %p3532 = pneg %p231
        $region78: #{tpu_custom_call.1} parent=75 // pred_check_branch
          %3534 = sbr.rel (%p3532) target = $region80
        $region79: #{tpu_custom_call.1} parent=75 // pred_region
          %s3535 = sand.u32 %s216, 1
          %s3536 = scalar_lea.sflag [#allocation5], %s3535
          %s3537 = sand.u32 %s216, 1
          %s3538 = smul.addr %s3537, 128
          %s3539 = scalar_lea.vmem [#allocation11], %s3538
          %3540 = dma.done %s3536, 2048
        $region80: #{tpu_custom_call.1} parent=75 // pred_fallthru
          _
      $region76: #{tpu_custom_call.1} parent=5 // pred_fallthru
        _
    $region6: #{tpu_custom_call.1} parent=1 // loop_footer
      %s28 = sadd.s32 1, %s24
    $region7: #{tpu_custom_call.1} parent=1 // loop_footer_branch
      %23 = sbr.rel target = $region3
    $region8: #{tpu_custom_call.1} parent=1 // loop_exit
      _
    %3541 = vsyncpa [#allocation4], 1
    %s3542 = scalar_lea.sflag [#allocation4], 1
    %3543 = vsyncpa %s3542, 1
    %3544 = vsyncpa [#allocation7], 1
    %s3545 = scalar_lea.sflag [#allocation7], 1
    %3546 = vsyncpa %s3545, 1
    %3547 = vsyncpa [#allocation10], 1
    %3548 = vsyncpa [#allocation5], 1
    %s3549 = scalar_lea.sflag [#allocation5], 1
    %3550 = vsyncpa %s3549, 1

</llo_original>
